<compile_context>
chip_gen: v7x
topology: tpu7x:2x2x1
jax: 0.10.0
libtpu: 0.0.40
codegen_flags: <defaults>
</compile_context>

<pallas_src>
import functools

import jax
import jax.numpy as jnp
from jax import lax
from jax.experimental import pallas as pl
from jax.experimental.pallas import tpu as pltpu

VMEM_SPEC = pl.BlockSpec(memory_space=pltpu.MemorySpace.VMEM)

_NEG_F32 = float(jnp.finfo(jnp.float32).min)


# --------------------------------------------------------------------------
# Fused multi-block transformer kernel (one pallas_call per group of blocks)
# --------------------------------------------------------------------------
def _layernorm(x, g_ref, b_ref, eps):
    mu = jnp.mean(x, axis=-1, keepdims=True)
    var = jnp.mean((x - mu) ** 2, axis=-1, keepdims=True)
    return (x - mu) * lax.rsqrt(var + eps) * g_ref[...] + b_ref[...]


def _blocks_kernel(x_ref, *refs, B, T, H, eps, n_blocks, final_ln):
    # refs layout: 12 refs per block, optionally (lnf_g, lnf_b), then o_ref.
    o_ref = refs[-1]
    if final_ln:
        lnfg, lnfb = refs[12 * n_blocks], refs[12 * n_blocks + 1]

    E = x_ref.shape[-1]
    Dh = E // H
    scale = 1.0 / (float(Dh) ** 0.5)

    x = x_ref[...].astype(jnp.float32)                      # (B*T, E) residual stream

    # Causal mask + batched-dot dims hoisted out of the per-block loop.
    row = lax.broadcasted_iota(jnp.int32, (T, T), 0)
    col = lax.broadcasted_iota(jnp.int32, (T, T), 1)
    causal = row >= col
    trans_b = (((1,), (1,)), ((), ()))

    for blk in range(n_blocks):
        (ln1g, ln1b, wqkv, bqkv, wo, bo, ln2g, ln2b,
         wm1, bm1, wm2, bm2) = refs[12 * blk:12 * blk + 12]

        # ---- attention sub-block (pre-LN) ----
        xn = _layernorm(x, ln1g, ln1b, eps)
        qkv = jnp.dot(xn.astype(jnp.bfloat16), wqkv[...],
                      preferred_element_type=jnp.float32) + bqkv[...]
        # fold the attention scale into q before the dot (saves a full-tile mul)
        q = (qkv[:, 0:E] * scale).astype(jnp.bfloat16)
        k = qkv[:, E:2 * E].astype(jnp.bfloat16)
        v = qkv[:, 2 * E:3 * E].astype(jnp.bfloat16)

        # per (batch, head) 2-D dots via static slices; scores/softmax in f32
        batch_outs = []
        for b in range(B):
            head_outs = []
            for hh in range(H):
                qh = q[b * T:(b + 1) * T, hh * Dh:(hh + 1) * Dh]
                kh = k[b * T:(b + 1) * T, hh * Dh:(hh + 1) * Dh]
                vh = v[b * T:(b + 1) * T, hh * Dh:(hh + 1) * Dh]
                s = lax.dot_general(qh, kh, trans_b,
                                    preferred_element_type=jnp.float32)  # (T, T)
                s = jnp.where(causal, s, _NEG_F32)
                s = s - jnp.max(s, axis=-1, keepdims=True)
                p = jnp.exp(s)
                p = p * pl.reciprocal(jnp.sum(p, axis=-1, keepdims=True),
                                      approx=True)
                head_outs.append(jnp.dot(p.astype(jnp.bfloat16), vh,
                                         preferred_element_type=jnp.float32))
            batch_outs.append(jnp.concatenate(head_outs, axis=-1))      # (T, E)
        attn = jnp.concatenate(batch_outs, axis=0)                      # (B*T, E)

        attn_o = jnp.dot(attn.astype(jnp.bfloat16), wo[...],
                         preferred_element_type=jnp.float32) + bo[...]
        x = x + attn_o

        # ---- MLP sub-block (pre-LN) ----
        xn2 = _layernorm(x, ln2g, ln2b, eps)
        # TODO(synk): PyTorch nn.GELU defaults to exact erf-GELU; tanh approx
        # used here (Transformer internals are unspecified in the reference).
        h1 = jax.nn.gelu(jnp.dot(xn2.astype(jnp.bfloat16), wm1[...],
                                 preferred_element_type=jnp.float32) + bm1[...],
                         approximate=True)
        h2 = jnp.dot(h1.astype(jnp.bfloat16), wm2[...],
                     preferred_element_type=jnp.float32) + bm2[...]
        x = x + h2

    if final_ln:
        x = _layernorm(x, lnfg, lnfb, eps)

    o_ref[...] = x.astype(o_ref.dtype)


def transformer_blocks(x, blocks, *, B, T, H, eps=1e-5, final_ln_params=None):
    """Run a group of transformer blocks (and optionally the final LN) as one
    fused Pallas kernel; the residual stream stays in VMEM across blocks."""
    M, E = x.shape
    inputs = [x]
    for blk in blocks:
        inputs += [
            blk["ln1_g"].reshape(1, E), blk["ln1_b"].reshape(1, E),
            blk["w_qkv"], blk["b_qkv"].reshape(1, -1),
            blk["w_o"], blk["b_o"].reshape(1, E),
            blk["ln2_g"].reshape(1, E), blk["ln2_b"].reshape(1, E),
            blk["w_mlp1"], blk["b_mlp1"].reshape(1, -1),
            blk["w_mlp2"], blk["b_mlp2"].reshape(1, E),
        ]
    final_ln = final_ln_params is not None
    if final_ln:
        inputs += [final_ln_params[0].reshape(1, E),
                   final_ln_params[1].reshape(1, E)]
    kernel = functools.partial(_blocks_kernel, B=B, T=T, H=H, eps=eps,
                               n_blocks=len(blocks), final_ln=final_ln)
    return pl.pallas_call(
        kernel,
        out_shape=jax.ShapeDtypeStruct((M, E), jnp.float32),
        in_specs=[VMEM_SPEC] * len(inputs),
        out_specs=VMEM_SPEC,
    )(*inputs)


def _block_param_bytes(E):
    # bf16 weights: (3 + 1 + 4 + 4) * E^2 ; f32 biases/LN params: 13 * E
    return 12 * E * E * 2 + 13 * E * 4


def _chunk_blocks(blocks, E, budget_bytes=16 * 1024 * 1024):
    """Group blocks so each fused kernel's weights stay well under the default
    scoped-VMEM limit (activations are small relative to the budget)."""
    per = max(1, _block_param_bytes(E))
    per_group = max(1, budget_bytes // per)
    return [blocks[i:i + per_group] for i in range(0, len(blocks), per_group)]


# --------------------------------------------------------------------------
# Fused interaction-MLP hidden-layer kernel
# --------------------------------------------------------------------------
def _interaction_hidden_kernel(mov_ref, usr_ref, *refs, num_hidden):
    # refs = (w1_mov, w1_usr, b1, [w_i, b_i] * (num_hidden - 1), o_ref)
    mov = mov_ref[...].astype(jnp.bfloat16)                 # (B, T*E)
    usr = usr_ref[...].astype(jnp.bfloat16)                 # (B, U)
    w1_mov, w1_usr, b1 = refs[0], refs[1], refs[2]
    h = (jnp.dot(mov, w1_mov[...], preferred_element_type=jnp.float32)
         + jnp.dot(usr, w1_usr[...], preferred_element_type=jnp.float32)
         + b1[...])
    h = jnp.maximum(h, 0.0)
    idx = 3
    for _ in range(num_hidden - 1):
        w, b = refs[idx], refs[idx + 1]
        idx += 2
        h = jnp.dot(h.astype(jnp.bfloat16), w[...],
                    preferred_element_type=jnp.float32) + b[...]
        h = jnp.maximum(h, 0.0)
    o_ref = refs[idx]
    o_ref[...] = h.astype(o_ref.dtype)


# --------------------------------------------------------------------------
# Tiled, gridded, lane-dense bf16 matmul (no bias) for the logits layer
# --------------------------------------------------------------------------
def _matmul_tiled_kernel(x_ref, w_ref, o_ref, acc_ref):
    @pl.when(pl.program_id(2) == 0)
    def _():
        acc_ref[...] = jnp.zeros_like(acc_ref)

    acc_ref[...] += jnp.dot(x_ref[...], w_ref[...],
                            preferred_element_type=jnp.float32)

    @pl.when(pl.program_id(2) == pl.num_programs(2) - 1)
    def _():
        o_ref[...] = acc_ref[...].astype(o_ref.dtype)


def _round_up(x, m):
    return (x + m - 1) // m * m


def linear_tiled(x, w, *, tm=128, tn=256, tk=256, out_dtype=jnp.float32):
    """y = x @ w (no bias). Pads M/K/N to (8,128,128) multiples (lane-dense
    output tiles), bf16 operands, f32 VMEM accumulator, megacore-parallel."""
    M, K = x.shape
    K2, N = w.shape
    assert K == K2
    Mp, Kp, Np = _round_up(M, 8), _round_up(K, 128), _round_up(N, 128)
    tm, tn, tk = min(tm, Mp), min(tn, Np), min(tk, Kp)
    Mp, Kp, Np = _round_up(Mp, tm), _round_up(Kp, tk), _round_up(Np, tn)

    xp = jnp.zeros((Mp, Kp), jnp.bfloat16).at[:M, :K].set(x.astype(jnp.bfloat16))
    wp = jnp.zeros((Kp, Np), jnp.bfloat16).at[:K, :N].set(w.astype(jnp.bfloat16))

    out = pl.pallas_call(
        _matmul_tiled_kernel,
        out_shape=jax.ShapeDtypeStruct((Mp, Np), out_dtype),
        grid_spec=pltpu.PrefetchScalarGridSpec(
            num_scalar_prefetch=0,
            grid=(Mp // tm, Np // tn, Kp // tk),
            in_specs=[pl.BlockSpec((tm, tk), lambda i, j, k: (i, k)),
                      pl.BlockSpec((tk, tn), lambda i, j, k: (k, j))],
            out_specs=pl.BlockSpec((tm, tn), lambda i, j, k: (i, j)),
            scratch_shapes=[pltpu.VMEM((tm, tn), jnp.float32)]),
        compiler_params=pltpu.CompilerParams(
            dimension_semantics=("parallel", "parallel", "arbitrary")),
    )(xp, wp)
    return out[:M, :N]


# --------------------------------------------------------------------------
# Model composition (JAX glue around the fused Pallas kernels)
# --------------------------------------------------------------------------
def transformer_forward(params, movie_ids, num_heads):
    tok = jnp.take(params["tok_emb"], movie_ids, axis=0)             # (B, T, E)
    T = movie_ids.shape[1]
    pos = params["pos_emb"][:T]                                      # (T, E)
    x = (tok + pos[None, :, :]).astype(jnp.float32)
    B, _, E = x.shape
    x = x.reshape(B * T, E)

    blocks = params["blocks"]
    assert blocks, "at least one transformer block expected"
    groups = _chunk_blocks(blocks, E)
    for gi, group in enumerate(groups):
        fl = (params["lnf_g"], params["lnf_b"]) if gi == len(groups) - 1 else None
        x = transformer_blocks(x, group, B=B, T=T, H=num_heads, final_ln_params=fl)
    return x.reshape(B, T, E)                                        # final LN applied


def movielens_forward(params, movie_ids, user_ids, num_heads):
    mov = transformer_forward(params["transformer"], movie_ids, num_heads)  # (B,T,E)
    B, T, E = mov.shape
    usr = jnp.take(params["user_emb"], user_ids, axis=0)             # (B, U)
    U = usr.shape[-1]
    mov_flat = mov.reshape(B, T * E)                                 # lane-dense slab

    hidden = params["mlp_hidden"]
    if hidden:
        # Fold the user-broadcast + concat into the first MLP weight:
        #   emb.view(B,-1) rows are [mov[b,0], usr[b], mov[b,1], usr[b], ...], so
        #   emb_flat @ W1 == mov_flat @ W1_mov + usr @ (sum_t W1_usr_t)
        w1, b1 = hidden[0]
        w1_r = w1.reshape(T, E + U, -1)
        w1_mov = w1_r[:, :E, :].reshape(T * E, -1).astype(jnp.bfloat16)
        w1_usr = jnp.sum(w1_r[:, E:, :].astype(jnp.float32), axis=0).astype(jnp.bfloat16)
        inputs = [mov_flat, usr, w1_mov, w1_usr, b1.reshape(1, -1)]
        for w, b in hidden[1:]:
            inputs += [w.astype(jnp.bfloat16), b.reshape(1, -1)]
        h_out = hidden[-1][0].shape[-1]
        h = pl.pallas_call(
            functools.partial(_interaction_hidden_kernel, num_hidden=len(hidden)),
            out_shape=jax.ShapeDtypeStruct((B, h_out), jnp.float32),
            in_specs=[VMEM_SPEC] * len(inputs),
            out_specs=VMEM_SPEC,
        )(*inputs)
    else:
        # No hidden layers: final no-bias layer consumes the flattened concat.
        usr_b = jnp.broadcast_to(usr[:, None, :], (B, T, U))
        h = jnp.concatenate([mov, usr_b], axis=-1).reshape(B, -1)

    # Final no-bias logits layer (tiled, lane-dense, megacore-parallel).
    return linear_tiled(h, params["mlp_out_w"])                      # (B, vocab)


# --------------------------------------------------------------------------
# Deterministic parameter init (MXU weights stored in bf16)
# --------------------------------------------------------------------------
def init_params(key, *, vocab_size, embed_dim, ctx_len, num_layers, num_heads,
                user_dim, num_users, mlp_hidden_sizes):
    def nrm(k, shape, dtype=jnp.float32, scale=0.02):
        return (scale * jax.random.normal(k, shape, dtype=jnp.float32)).astype(dtype)

    keys = iter(jax.random.split(key, 256))
    hidden_mlp = 4 * embed_dim
    tparams = {
        "tok_emb": nrm(next(keys), (vocab_size, embed_dim)),
        "pos_emb": nrm(next(keys), (ctx_len, embed_dim)),
        "lnf_g": jnp.ones((embed_dim,), jnp.float32),
        "lnf_b": jnp.zeros((embed_dim,), jnp.float32),
        "blocks": [],
    }
    for _ in range(num_layers):
        tparams["blocks"].append({
            "ln1_g": jnp.ones((embed_dim,), jnp.float32),
            "ln1_b": jnp.zeros((embed_dim,), jnp.float32),
            "w_qkv": nrm(next(keys), (embed_dim, 3 * embed_dim), jnp.bfloat16),
            "b_qkv": jnp.zeros((3 * embed_dim,), jnp.float32),
            "w_o": nrm(next(keys), (embed_dim, embed_dim), jnp.bfloat16),
            "b_o": jnp.zeros((embed_dim,), jnp.float32),
            "ln2_g": jnp.ones((embed_dim,), jnp.float32),
            "ln2_b": jnp.zeros((embed_dim,), jnp.float32),
            "w_mlp1": nrm(next(keys), (embed_dim, hidden_mlp), jnp.bfloat16),
            "b_mlp1": jnp.zeros((hidden_mlp,), jnp.float32),
            "w_mlp2": nrm(next(keys), (hidden_mlp, embed_dim), jnp.bfloat16),
            "b_mlp2": jnp.zeros((embed_dim,), jnp.float32),
        })

    params = {
        "transformer": tparams,
        "user_emb": nrm(next(keys), (num_users, user_dim)),
        "mlp_hidden": [],
    }
    prev = (embed_dim + user_dim) * ctx_len
    for h in mlp_hidden_sizes:
        # hidden weights kept f32 here (the first one is split/summed in the
        # wrapper); cast to bf16 right before the MXU.
        params["mlp_hidden"].append(
            (nrm(next(keys), (prev, h)), jnp.zeros((h,), jnp.float32)))
        prev = h
    params["mlp_out_w"] = nrm(next(keys), (prev, vocab_size), jnp.bfloat16)  # no bias
    return params


# --------------------------------------------------------------------------
if __name__ == "__main__":
    # Small config consistent with MovieLensTransformerConfig
    VOCAB_SIZE = 64            # movie_transformer_config.vocab_size
    EMBED_DIM = 32             # movie_transformer_config.embedding_dimension
    CTX_LEN = 8                # movie_transformer_config.context_window_size
    NUM_LAYERS = 2
    NUM_HEADS = 2
    USER_DIM = 16              # user_embedding_dimension
    NUM_USERS = 50             # num_users
    MLP_HIDDEN = [64, 32]      # interaction_mlp_hidden_sizes
    BATCH = 2

    root = jax.random.PRNGKey(0)
    kp, km, ku = jax.random.split(root, 3)

    params = init_params(
        kp,
        vocab_size=VOCAB_SIZE, embed_dim=EMBED_DIM, ctx_len=CTX_LEN,
        num_layers=NUM_LAYERS, num_heads=NUM_HEADS,
        user_dim=USER_DIM, num_users=NUM_USERS, mlp_hidden_sizes=MLP_HIDDEN,
    )

    movie_ids = jax.random.randint(km, (BATCH, CTX_LEN), 0, VOCAB_SIZE, dtype=jnp.int32)
    user_ids = jax.random.randint(ku, (BATCH,), 0, NUM_USERS, dtype=jnp.int32)

    fwd = jax.jit(functools.partial(movielens_forward, num_heads=NUM_HEADS))
    out = fwd(params, movie_ids, user_ids)
    out = jax.block_until_ready(out)

    assert out.shape == (BATCH, VOCAB_SIZE), out.shape
    assert bool(jnp.all(jnp.isfinite(out)))
    print("KERNEL_OK")
</pallas_src>

<mosaic_0001>
module attributes {stable_mosaic.version = 11 : i64} {
  func.func @_matmul_tiled_kernel(%arg0: i32, %arg1: i32, %arg2: i32, %arg3: memref<8x128xbf16, #tpu.memory_space<vmem>>, %arg4: memref<128x128xbf16, #tpu.memory_space<vmem>>, %arg5: memref<8x128xf32, #tpu.memory_space<vmem>>, %arg6: memref<8x128xf32, #tpu.memory_space<vmem>>) attributes {dimension_semantics = [#tpu.dimension_semantics<parallel>, #tpu.dimension_semantics<parallel>, #tpu.dimension_semantics<arbitrary>], iteration_bounds = array<i64: 1, 1, 1>, scalar_prefetch = 0 : i64, scratch_operands = 1 : i64, tpu.core_type = #tpu.core_type<tc>, window_params = [{transform_indices = @transform_0, window_bounds = array<i64: 8, 128>}, {transform_indices = @transform_1, window_bounds = array<i64: 128, 128>}, {transform_indices = @transform_2, window_bounds = array<i64: 8, 128>}]} {
    %c0_i32 = arith.constant 0 : i32
    %0 = arith.cmpi eq, %arg2, %c0_i32 : i32
    %1 = arith.extui %0 : i1 to i32
    %c0_i32_0 = arith.constant 0 : i32
    %2 = arith.cmpi ne, %1, %c0_i32_0 : i32
    scf.if %2 {
      %cst_10 = arith.constant 0.000000e+00 : f32
      %12 = vector.broadcast %cst_10 : f32 to vector<8x128xf32>
      %c0_11 = arith.constant 0 : index
      %c0_12 = arith.constant 0 : index
      %13 = vector.load %arg6[%c0_11, %c0_12] : memref<8x128xf32, #tpu.memory_space<vmem>>, vector<8x128xf32>
      tpu.vector_store %arg6[%c0_11, %c0_12], %12 {strides = array<i32>} : memref<8x128xf32, #tpu.memory_space<vmem>>, vector<8x128xf32>,
    } else {
    }
    %c0 = arith.constant 0 : index
    %c0_1 = arith.constant 0 : index
    %3 = vector.load %arg6[%c0, %c0_1] : memref<8x128xf32, #tpu.memory_space<vmem>>, vector<8x128xf32>
    %c0_2 = arith.constant 0 : index
    %c0_3 = arith.constant 0 : index
    %4 = vector.load %arg3[%c0_2, %c0_3] : memref<8x128xbf16, #tpu.memory_space<vmem>>, vector<8x128xbf16>
    %c0_4 = arith.constant 0 : index
    %c0_5 = arith.constant 0 : index
    %5 = vector.load %arg4[%c0_4, %c0_5] : memref<128x128xbf16, #tpu.memory_space<vmem>>, vector<128x128xbf16>
    %cst = arith.constant dense<0.000000e+00> : vector<8x128xf32>
    %6 = tpu.matmul %4, %5, %cst {dimension_numbers = #tpu.dot_dimension_numbers<[1], [0], [0], [1], [0, 0, 1, 1], [], []>} : vector<8x128xbf16>, vector<128x128xbf16>, vector<8x128xf32> -> vector<8x128xf32>
    %7 = arith.addf %3, %6 : vector<8x128xf32>
    %c0_6 = arith.constant 0 : index
    %c0_7 = arith.constant 0 : index
    %8 = vector.load %arg6[%c0_6, %c0_7] : memref<8x128xf32, #tpu.memory_space<vmem>>, vector<8x128xf32>
    tpu.vector_store %arg6[%c0_6, %c0_7], %7 {strides = array<i32>} : memref<8x128xf32, #tpu.memory_space<vmem>>, vector<8x128xf32>,
    %c0_i32_8 = arith.constant 0 : i32
    %9 = arith.cmpi eq, %arg2, %c0_i32_8 : i32
    %10 = arith.extui %9 : i1 to i32
    %c0_i32_9 = arith.constant 0 : i32
    %11 = arith.cmpi ne, %10, %c0_i32_9 : i32
    scf.if %11 {
      %c0_10 = arith.constant 0 : index
      %c0_11 = arith.constant 0 : index
      %12 = vector.load %arg6[%c0_10, %c0_11] : memref<8x128xf32, #tpu.memory_space<vmem>>, vector<8x128xf32>
      %c0_12 = arith.constant 0 : index
      %c0_13 = arith.constant 0 : index
      %13 = vector.load %arg5[%c0_12, %c0_13] : memref<8x128xf32, #tpu.memory_space<vmem>>, vector<8x128xf32>
      tpu.vector_store %arg5[%c0_12, %c0_13], %12 {strides = array<i32>} : memref<8x128xf32, #tpu.memory_space<vmem>>, vector<8x128xf32>,
    } else {
    }
    return
  }
  func.func @transform_0(%arg0: i32, %arg1: i32, %arg2: i32) -> (i32, i32) {
    %c0_i32 = arith.constant 0 : i32
    return %arg0, %arg2 : i32, i32
  }
  func.func @transform_1(%arg0: i32, %arg1: i32, %arg2: i32) -> (i32, i32) {
    %c0_i32 = arith.constant 0 : i32
    return %arg2, %arg1 : i32, i32
  }
  func.func @transform_2(%arg0: i32, %arg1: i32, %arg2: i32) -> (i32, i32) {
    %c0_i32 = arith.constant 0 : i32
    return %arg0, %arg1 : i32, i32
  }
}

module attributes {stable_mosaic.version = 11 : i64} {
  func.func @_interaction_hidden_kernel(%arg0: memref<2x256xf32, #tpu.memory_space<vmem>>, %arg1: memref<2x16xf32, #tpu.memory_space<vmem>>, %arg2: memref<256x64xbf16, #tpu.memory_space<vmem>>, %arg3: memref<16x64xbf16, #tpu.memory_space<vmem>>, %arg4: memref<1x64xf32, #tpu.memory_space<vmem>>, %arg5: memref<64x32xbf16, #tpu.memory_space<vmem>>, %arg6: memref<1x32xf32, #tpu.memory_space<vmem>>, %arg7: memref<2x32xf32, #tpu.memory_space<vmem>>) attributes {dimension_semantics = [], scalar_prefetch = 0 : i64, scratch_operands = 0 : i64, tpu.core_type = #tpu.core_type<tc>} {
    %c0 = arith.constant 0 : index
    %c0_0 = arith.constant 0 : index
    %0 = vector.load %arg0[%c0, %c0_0] : memref<2x256xf32, #tpu.memory_space<vmem>>, vector<2x256xf32>
    %1 = arith.truncf %0 : vector<2x256xf32> to vector<2x256xbf16>
    %c0_1 = arith.constant 0 : index
    %c0_2 = arith.constant 0 : index
    %2 = vector.load %arg1[%c0_1, %c0_2] : memref<2x16xf32, #tpu.memory_space<vmem>>, vector<2x16xf32>
    %3 = arith.truncf %2 : vector<2x16xf32> to vector<2x16xbf16>
    %c0_3 = arith.constant 0 : index
    %c0_4 = arith.constant 0 : index
    %4 = vector.load %arg2[%c0_3, %c0_4] : memref<256x64xbf16, #tpu.memory_space<vmem>>, vector<256x64xbf16>
    %cst = arith.constant dense<0.000000e+00> : vector<2x64xf32>
    %5 = tpu.matmul %1, %4, %cst {dimension_numbers = #tpu.dot_dimension_numbers<[1], [0], [0], [1], [0, 0, 1, 1], [], []>} : vector<2x256xbf16>, vector<256x64xbf16>, vector<2x64xf32> -> vector<2x64xf32>
    %c0_5 = arith.constant 0 : index
    %c0_6 = arith.constant 0 : index
    %6 = vector.load %arg3[%c0_5, %c0_6] : memref<16x64xbf16, #tpu.memory_space<vmem>>, vector<16x64xbf16>
    %cst_7 = arith.constant dense<0.000000e+00> : vector<2x64xf32>
    %7 = tpu.matmul %3, %6, %cst_7 {dimension_numbers = #tpu.dot_dimension_numbers<[1], [0], [0], [1], [0, 0, 1, 1], [], []>} : vector<2x16xbf16>, vector<16x64xbf16>, vector<2x64xf32> -> vector<2x64xf32>
    %8 = arith.addf %5, %7 : vector<2x64xf32>
    %c0_8 = arith.constant 0 : index
    %c0_9 = arith.constant 0 : index
    %9 = vector.load %arg4[%c0_8, %c0_9] : memref<1x64xf32, #tpu.memory_space<vmem>>, vector<1x64xf32>
    %10 = vector.broadcast %9 : vector<1x64xf32> to vector<2x64xf32>
    %11 = arith.addf %8, %10 : vector<2x64xf32>
    %cst_10 = arith.constant 0.000000e+00 : f32
    %12 = vector.broadcast %cst_10 : f32 to vector<2x64xf32>
    %13 = arith.maximumf %11, %12 : vector<2x64xf32>
    %14 = arith.truncf %13 : vector<2x64xf32> to vector<2x64xbf16>
    %c0_11 = arith.constant 0 : index
    %c0_12 = arith.constant 0 : index
    %15 = vector.load %arg5[%c0_11, %c0_12] : memref<64x32xbf16, #tpu.memory_space<vmem>>, vector<64x32xbf16>
    %cst_13 = arith.constant dense<0.000000e+00> : vector<2x32xf32>
    %16 = tpu.matmul %14, %15, %cst_13 {dimension_numbers = #tpu.dot_dimension_numbers<[1], [0], [0], [1], [0, 0, 1, 1], [], []>} : vector<2x64xbf16>, vector<64x32xbf16>, vector<2x32xf32> -> vector<2x32xf32>
    %c0_14 = arith.constant 0 : index
    %c0_15 = arith.constant 0 : index
    %17 = vector.load %arg6[%c0_14, %c0_15] : memref<1x32xf32, #tpu.memory_space<vmem>>, vector<1x32xf32>
    %18 = vector.broadcast %17 : vector<1x32xf32> to vector<2x32xf32>
    %19 = arith.addf %16, %18 : vector<2x32xf32>
    %cst_16 = arith.constant 0.000000e+00 : f32
    %20 = vector.broadcast %cst_16 : f32 to vector<2x32xf32>
    %21 = arith.maximumf %19, %20 : vector<2x32xf32>
    %c0_17 = arith.constant 0 : index
    %c0_18 = arith.constant 0 : index
    %22 = vector.load %arg7[%c0_17, %c0_18] : memref<2x32xf32, #tpu.memory_space<vmem>>, vector<2x32xf32>
    tpu.vector_store %arg7[%c0_17, %c0_18], %21 {strides = array<i32>} : memref<2x32xf32, #tpu.memory_space<vmem>>, vector<2x32xf32>,
    return
  }
}

module attributes {stable_mosaic.version = 11 : i64} {
  func.func @_blocks_kernel(%arg0: memref<16x32xf32, #tpu.memory_space<vmem>>, %arg1: memref<1x32xf32, #tpu.memory_space<vmem>>, %arg2: memref<1x32xf32, #tpu.memory_space<vmem>>, %arg3: memref<32x96xbf16, #tpu.memory_space<vmem>>, %arg4: memref<1x96xf32, #tpu.memory_space<vmem>>, %arg5: memref<32x32xbf16, #tpu.memory_space<vmem>>, %arg6: memref<1x32xf32, #tpu.memory_space<vmem>>, %arg7: memref<1x32xf32, #tpu.memory_space<vmem>>, %arg8: memref<1x32xf32, #tpu.memory_space<vmem>>, %arg9: memref<32x128xbf16, #tpu.memory_space<vmem>>, %arg10: memref<1x128xf32, #tpu.memory_space<vmem>>, %arg11: memref<128x32xbf16, #tpu.memory_space<vmem>>, %arg12: memref<1x32xf32, #tpu.memory_space<vmem>>, %arg13: memref<1x32xf32, #tpu.memory_space<vmem>>, %arg14: memref<1x32xf32, #tpu.memory_space<vmem>>, %arg15: memref<32x96xbf16, #tpu.memory_space<vmem>>, %arg16: memref<1x96xf32, #tpu.memory_space<vmem>>, %arg17: memref<32x32xbf16, #tpu.memory_space<vmem>>, %arg18: memref<1x32xf32, #tpu.memory_space<vmem>>, %arg19: memref<1x32xf32, #tpu.memory_space<vmem>>, %arg20: memref<1x32xf32, #tpu.memory_space<vmem>>, %arg21: memref<32x128xbf16, #tpu.memory_space<vmem>>, %arg22: memref<1x128xf32, #tpu.memory_space<vmem>>, %arg23: memref<128x32xbf16, #tpu.memory_space<vmem>>, %arg24: memref<1x32xf32, #tpu.memory_space<vmem>>, %arg25: memref<1x32xf32, #tpu.memory_space<vmem>>, %arg26: memref<1x32xf32, #tpu.memory_space<vmem>>, %arg27: memref<16x32xf32, #tpu.memory_space<vmem>>) attributes {dimension_semantics = [], scalar_prefetch = 0 : i64, scratch_operands = 0 : i64, tpu.core_type = #tpu.core_type<tc>} {
    %c0 = arith.constant 0 : index
    %c0_0 = arith.constant 0 : index
    %0 = vector.load %arg0[%c0, %c0_0] : memref<16x32xf32, #tpu.memory_space<vmem>>, vector<16x32xf32>
    %1 = tpu.iota {dimensions = array<i32: 0>} : vector<8x8xi32>
    %2 = tpu.iota {dimensions = array<i32: 1>} : vector<8x8xi32>
    %3 = arith.cmpi sge, %1, %2 : vector<8x8xi32>
    %cst = arith.constant dense<0.000000e+00> : vector<16xf32>
    %4 = vector.multi_reduction <add>, %0, %cst [1] : vector<16x32xf32> to vector<16xf32>
    %5 = vector.shape_cast %4 : vector<16xf32> to vector<16x1xf32>
    %cst_1 = arith.constant 3.200000e+01 : f32
    %6 = vector.broadcast %cst_1 : f32 to vector<16x1xf32>
    %7 = arith.divf %5, %6 : vector<16x1xf32>
    %8 = vector.broadcast %7 : vector<16x1xf32> to vector<16x32xf32>
    %9 = arith.subf %0, %8 : vector<16x32xf32>
    %10 = arith.mulf %9, %9 : vector<16x32xf32>
    %cst_2 = arith.constant dense<0.000000e+00> : vector<16xf32>
    %11 = vector.multi_reduction <add>, %10, %cst_2 [1] : vector<16x32xf32> to vector<16xf32>
    %12 = vector.shape_cast %11 : vector<16xf32> to vector<16x1xf32>
    %cst_3 = arith.constant 3.200000e+01 : f32
    %13 = vector.broadcast %cst_3 : f32 to vector<16x1xf32>
    %14 = arith.divf %12, %13 : vector<16x1xf32>
    %15 = vector.broadcast %7 : vector<16x1xf32> to vector<16x32xf32>
    %16 = arith.subf %0, %15 : vector<16x32xf32>
    %cst_4 = arith.constant 9.99999974E-6 : f32
    %17 = vector.broadcast %cst_4 : f32 to vector<16x1xf32>
    %18 = arith.addf %14, %17 : vector<16x1xf32>
    %19 = math.rsqrt %18 : vector<16x1xf32>
    %20 = vector.broadcast %19 : vector<16x1xf32> to vector<16x32xf32>
    %21 = arith.mulf %16, %20 : vector<16x32xf32>
    %c0_5 = arith.constant 0 : index
    %c0_6 = arith.constant 0 : index
    %22 = vector.load %arg1[%c0_5, %c0_6] : memref<1x32xf32, #tpu.memory_space<vmem>>, vector<1x32xf32>
    %23 = vector.broadcast %22 : vector<1x32xf32> to vector<16x32xf32>
    %24 = arith.mulf %21, %23 : vector<16x32xf32>
    %c0_7 = arith.constant 0 : index
    %c0_8 = arith.constant 0 : index
    %25 = vector.load %arg2[%c0_7, %c0_8] : memref<1x32xf32, #tpu.memory_space<vmem>>, vector<1x32xf32>
    %26 = vector.broadcast %25 : vector<1x32xf32> to vector<16x32xf32>
    %27 = arith.addf %24, %26 : vector<16x32xf32>
    %28 = arith.truncf %27 : vector<16x32xf32> to vector<16x32xbf16>
    %c0_9 = arith.constant 0 : index
    %c0_10 = arith.constant 0 : index
    %29 = vector.load %arg3[%c0_9, %c0_10] : memref<32x96xbf16, #tpu.memory_space<vmem>>, vector<32x96xbf16>
    %cst_11 = arith.constant dense<0.000000e+00> : vector<16x96xf32>
    %30 = tpu.matmul %28, %29, %cst_11 {dimension_numbers = #tpu.dot_dimension_numbers<[1], [0], [0], [1], [0, 0, 1, 1], [], []>} : vector<16x32xbf16>, vector<32x96xbf16>, vector<16x96xf32> -> vector<16x96xf32>
    %c0_12 = arith.constant 0 : index
    %c0_13 = arith.constant 0 : index
    %31 = vector.load %arg4[%c0_12, %c0_13] : memref<1x96xf32, #tpu.memory_space<vmem>>, vector<1x96xf32>
    %32 = vector.broadcast %31 : vector<1x96xf32> to vector<16x96xf32>
    %33 = arith.addf %30, %32 : vector<16x96xf32>
    %34 = vector.extract_strided_slice %33 {offsets = [0, 0], sizes = [16, 32], strides = [1, 1]} : vector<16x96xf32> to vector<16x32xf32>
    %cst_14 = arith.constant 2.500000e-01 : f32
    %35 = vector.broadcast %cst_14 : f32 to vector<16x32xf32>
    %36 = arith.mulf %34, %35 : vector<16x32xf32>
    %37 = arith.truncf %36 : vector<16x32xf32> to vector<16x32xbf16>
    %38 = vector.extract_strided_slice %33 {offsets = [0, 32], sizes = [16, 32], strides = [1, 1]} : vector<16x96xf32> to vector<16x32xf32>
    %39 = arith.truncf %38 : vector<16x32xf32> to vector<16x32xbf16>
    %40 = vector.extract_strided_slice %33 {offsets = [0, 64], sizes = [16, 32], strides = [1, 1]} : vector<16x96xf32> to vector<16x32xf32>
    %41 = arith.truncf %40 : vector<16x32xf32> to vector<16x32xbf16>
    %42 = vector.extract_strided_slice %37 {offsets = [0, 0], sizes = [8, 16], strides = [1, 1]} : vector<16x32xbf16> to vector<8x16xbf16>
    %43 = vector.extract_strided_slice %39 {offsets = [0, 0], sizes = [8, 16], strides = [1, 1]} : vector<16x32xbf16> to vector<8x16xbf16>
    %44 = vector.extract_strided_slice %41 {offsets = [0, 0], sizes = [8, 16], strides = [1, 1]} : vector<16x32xbf16> to vector<8x16xbf16>
    %cst_15 = arith.constant dense<0.000000e+00> : vector<8x8xf32>
    %45 = tpu.matmul %42, %43, %cst_15 {dimension_numbers = #tpu.dot_dimension_numbers<[1], [1], [0], [0], [0, 0, 1, 0], [], []>} : vector<8x16xbf16>, vector<8x16xbf16>, vector<8x8xf32> -> vector<8x8xf32>
    %cst_16 = arith.constant -3.40282347E+38 : f32
    %46 = vector.broadcast %cst_16 : f32 to vector<8x8xf32>
    %47 = arith.select %3, %45, %46 : vector<8x8xi1>, vector<8x8xf32>
    %cst_17 = arith.constant dense<0xFF800000> : vector<8xf32>
    %48 = vector.multi_reduction <maximumf>, %47, %cst_17 [1] : vector<8x8xf32> to vector<8xf32>
    %49 = vector.shape_cast %48 : vector<8xf32> to vector<8x1xf32>
    %50 = vector.broadcast %49 : vector<8x1xf32> to vector<8x8xf32>
    %51 = arith.subf %47, %50 : vector<8x8xf32>
    %52 = math.exp %51 : vector<8x8xf32>
    %cst_18 = arith.constant dense<0.000000e+00> : vector<8xf32>
    %53 = vector.multi_reduction <add>, %52, %cst_18 [1] : vector<8x8xf32> to vector<8xf32>
    %54 = vector.shape_cast %53 : vector<8xf32> to vector<8x1xf32>
    %55 = tpu.reciprocal %54 {approx = true} : vector<8x1xf32> -> vector<8x1xf32>
    %56 = vector.broadcast %55 : vector<8x1xf32> to vector<8x8xf32>
    %57 = arith.mulf %52, %56 : vector<8x8xf32>
    %58 = arith.truncf %57 : vector<8x8xf32> to vector<8x8xbf16>
    %cst_19 = arith.constant dense<0.000000e+00> : vector<8x16xf32>
    %59 = tpu.matmul %58, %44, %cst_19 {dimension_numbers = #tpu.dot_dimension_numbers<[1], [0], [0], [1], [0, 0, 1, 1], [], []>} : vector<8x8xbf16>, vector<8x16xbf16>, vector<8x16xf32> -> vector<8x16xf32>
    %60 = vector.extract_strided_slice %37 {offsets = [0, 16], sizes = [8, 16], strides = [1, 1]} : vector<16x32xbf16> to vector<8x16xbf16>
    %61 = vector.extract_strided_slice %39 {offsets = [0, 16], sizes = [8, 16], strides = [1, 1]} : vector<16x32xbf16> to vector<8x16xbf16>
    %62 = vector.extract_strided_slice %41 {offsets = [0, 16], sizes = [8, 16], strides = [1, 1]} : vector<16x32xbf16> to vector<8x16xbf16>
    %cst_20 = arith.constant dense<0.000000e+00> : vector<8x8xf32>
    %63 = tpu.matmul %60, %61, %cst_20 {dimension_numbers = #tpu.dot_dimension_numbers<[1], [1], [0], [0], [0, 0, 1, 0], [], []>} : vector<8x16xbf16>, vector<8x16xbf16>, vector<8x8xf32> -> vector<8x8xf32>
    %cst_21 = arith.constant -3.40282347E+38 : f32
    %64 = vector.broadcast %cst_21 : f32 to vector<8x8xf32>
    %65 = arith.select %3, %63, %64 : vector<8x8xi1>, vector<8x8xf32>
    %cst_22 = arith.constant dense<0xFF800000> : vector<8xf32>
    %66 = vector.multi_reduction <maximumf>, %65, %cst_22 [1] : vector<8x8xf32> to vector<8xf32>
    %67 = vector.shape_cast %66 : vector<8xf32> to vector<8x1xf32>
    %68 = vector.broadcast %67 : vector<8x1xf32> to vector<8x8xf32>
    %69 = arith.subf %65, %68 : vector<8x8xf32>
    %70 = math.exp %69 : vector<8x8xf32>
    %cst_23 = arith.constant dense<0.000000e+00> : vector<8xf32>
    %71 = vector.multi_reduction <add>, %70, %cst_23 [1] : vector<8x8xf32> to vector<8xf32>
    %72 = vector.shape_cast %71 : vector<8xf32> to vector<8x1xf32>
    %73 = tpu.reciprocal %72 {approx = true} : vector<8x1xf32> -> vector<8x1xf32>
    %74 = vector.broadcast %73 : vector<8x1xf32> to vector<8x8xf32>
    %75 = arith.mulf %70, %74 : vector<8x8xf32>
    %76 = arith.truncf %75 : vector<8x8xf32> to vector<8x8xbf16>
    %cst_24 = arith.constant dense<0.000000e+00> : vector<8x16xf32>
    %77 = tpu.matmul %76, %62, %cst_24 {dimension_numbers = #tpu.dot_dimension_numbers<[1], [0], [0], [1], [0, 0, 1, 1], [], []>} : vector<8x8xbf16>, vector<8x16xbf16>, vector<8x16xf32> -> vector<8x16xf32>
    %78 = tpu.concatenate %59, %77 in 1 : vector<8x16xf32>, vector<8x16xf32> -> vector<8x32xf32>
    %79 = vector.extract_strided_slice %37 {offsets = [8, 0], sizes = [8, 16], strides = [1, 1]} : vector<16x32xbf16> to vector<8x16xbf16>
    %80 = vector.extract_strided_slice %39 {offsets = [8, 0], sizes = [8, 16], strides = [1, 1]} : vector<16x32xbf16> to vector<8x16xbf16>
    %81 = vector.extract_strided_slice %41 {offsets = [8, 0], sizes = [8, 16], strides = [1, 1]} : vector<16x32xbf16> to vector<8x16xbf16>
    %cst_25 = arith.constant dense<0.000000e+00> : vector<8x8xf32>
    %82 = tpu.matmul %79, %80, %cst_25 {dimension_numbers = #tpu.dot_dimension_numbers<[1], [1], [0], [0], [0, 0, 1, 0], [], []>} : vector<8x16xbf16>, vector<8x16xbf16>, vector<8x8xf32> -> vector<8x8xf32>
    %cst_26 = arith.constant -3.40282347E+38 : f32
    %83 = vector.broadcast %cst_26 : f32 to vector<8x8xf32>
    %84 = arith.select %3, %82, %83 : vector<8x8xi1>, vector<8x8xf32>
    %cst_27 = arith.constant dense<0xFF800000> : vector<8xf32>
    %85 = vector.multi_reduction <maximumf>, %84, %cst_27 [1] : vector<8x8xf32> to vector<8xf32>
    %86 = vector.shape_cast %85 : vector<8xf32> to vector<8x1xf32>
    %87 = vector.broadcast %86 : vector<8x1xf32> to vector<8x8xf32>
    %88 = arith.subf %84, %87 : vector<8x8xf32>
    %89 = math.exp %88 : vector<8x8xf32>
    %cst_28 = arith.constant dense<0.000000e+00> : vector<8xf32>
    %90 = vector.multi_reduction <add>, %89, %cst_28 [1] : vector<8x8xf32> to vector<8xf32>
    %91 = vector.shape_cast %90 : vector<8xf32> to vector<8x1xf32>
    %92 = tpu.reciprocal %91 {approx = true} : vector<8x1xf32> -> vector<8x1xf32>
    %93 = vector.broadcast %92 : vector<8x1xf32> to vector<8x8xf32>
    %94 = arith.mulf %89, %93 : vector<8x8xf32>
    %95 = arith.truncf %94 : vector<8x8xf32> to vector<8x8xbf16>
    %cst_29 = arith.constant dense<0.000000e+00> : vector<8x16xf32>
    %96 = tpu.matmul %95, %81, %cst_29 {dimension_numbers = #tpu.dot_dimension_numbers<[1], [0], [0], [1], [0, 0, 1, 1], [], []>} : vector<8x8xbf16>, vector<8x16xbf16>, vector<8x16xf32> -> vector<8x16xf32>
    %97 = vector.extract_strided_slice %37 {offsets = [8, 16], sizes = [8, 16], strides = [1, 1]} : vector<16x32xbf16> to vector<8x16xbf16>
    %98 = vector.extract_strided_slice %39 {offsets = [8, 16], sizes = [8, 16], strides = [1, 1]} : vector<16x32xbf16> to vector<8x16xbf16>
    %99 = vector.extract_strided_slice %41 {offsets = [8, 16], sizes = [8, 16], strides = [1, 1]} : vector<16x32xbf16> to vector<8x16xbf16>
    %cst_30 = arith.constant dense<0.000000e+00> : vector<8x8xf32>
    %100 = tpu.matmul %97, %98, %cst_30 {dimension_numbers = #tpu.dot_dimension_numbers<[1], [1], [0], [0], [0, 0, 1, 0], [], []>} : vector<8x16xbf16>, vector<8x16xbf16>, vector<8x8xf32> -> vector<8x8xf32>
    %cst_31 = arith.constant -3.40282347E+38 : f32
    %101 = vector.broadcast %cst_31 : f32 to vector<8x8xf32>
    %102 = arith.select %3, %100, %101 : vector<8x8xi1>, vector<8x8xf32>
    %cst_32 = arith.constant dense<0xFF800000> : vector<8xf32>
    %103 = vector.multi_reduction <maximumf>, %102, %cst_32 [1] : vector<8x8xf32> to vector<8xf32>
    %104 = vector.shape_cast %103 : vector<8xf32> to vector<8x1xf32>
    %105 = vector.broadcast %104 : vector<8x1xf32> to vector<8x8xf32>
    %106 = arith.subf %102, %105 : vector<8x8xf32>
    %107 = math.exp %106 : vector<8x8xf32>
    %cst_33 = arith.constant dense<0.000000e+00> : vector<8xf32>
    %108 = vector.multi_reduction <add>, %107, %cst_33 [1] : vector<8x8xf32> to vector<8xf32>
    %109 = vector.shape_cast %108 : vector<8xf32> to vector<8x1xf32>
    %110 = tpu.reciprocal %109 {approx = true} : vector<8x1xf32> -> vector<8x1xf32>
    %111 = vector.broadcast %110 : vector<8x1xf32> to vector<8x8xf32>
    %112 = arith.mulf %107, %111 : vector<8x8xf32>
    %113 = arith.truncf %112 : vector<8x8xf32> to vector<8x8xbf16>
    %cst_34 = arith.constant dense<0.000000e+00> : vector<8x16xf32>
    %114 = tpu.matmul %113, %99, %cst_34 {dimension_numbers = #tpu.dot_dimension_numbers<[1], [0], [0], [1], [0, 0, 1, 1], [], []>} : vector<8x8xbf16>, vector<8x16xbf16>, vector<8x16xf32> -> vector<8x16xf32>
    %115 = tpu.concatenate %96, %114 in 1 : vector<8x16xf32>, vector<8x16xf32> -> vector<8x32xf32>
    %116 = tpu.concatenate %78, %115 in 0 : vector<8x32xf32>, vector<8x32xf32> -> vector<16x32xf32>
    %117 = arith.truncf %116 : vector<16x32xf32> to vector<16x32xbf16>
    %c0_35 = arith.constant 0 : index
    %c0_36 = arith.constant 0 : index
    %118 = vector.load %arg5[%c0_35, %c0_36] : memref<32x32xbf16, #tpu.memory_space<vmem>>, vector<32x32xbf16>
    %cst_37 = arith.constant dense<0.000000e+00> : vector<16x32xf32>
    %119 = tpu.matmul %117, %118, %cst_37 {dimension_numbers = #tpu.dot_dimension_numbers<[1], [0], [0], [1], [0, 0, 1, 1], [], []>} : vector<16x32xbf16>, vector<32x32xbf16>, vector<16x32xf32> -> vector<16x32xf32>
    %c0_38 = arith.constant 0 : index
    %c0_39 = arith.constant 0 : index
    %120 = vector.load %arg6[%c0_38, %c0_39] : memref<1x32xf32, #tpu.memory_space<vmem>>, vector<1x32xf32>
    %121 = vector.broadcast %120 : vector<1x32xf32> to vector<16x32xf32>
    %122 = arith.addf %119, %121 : vector<16x32xf32>
    %123 = arith.addf %0, %122 : vector<16x32xf32>
    %cst_40 = arith.constant dense<0.000000e+00> : vector<16xf32>
    %124 = vector.multi_reduction <add>, %123, %cst_40 [1] : vector<16x32xf32> to vector<16xf32>
    %125 = vector.shape_cast %124 : vector<16xf32> to vector<16x1xf32>
    %cst_41 = arith.constant 3.200000e+01 : f32
    %126 = vector.broadcast %cst_41 : f32 to vector<16x1xf32>
    %127 = arith.divf %125, %126 : vector<16x1xf32>
    %128 = vector.broadcast %127 : vector<16x1xf32> to vector<16x32xf32>
    %129 = arith.subf %123, %128 : vector<16x32xf32>
    %130 = arith.mulf %129, %129 : vector<16x32xf32>
    %cst_42 = arith.constant dense<0.000000e+00> : vector<16xf32>
    %131 = vector.multi_reduction <add>, %130, %cst_42 [1] : vector<16x32xf32> to vector<16xf32>
    %132 = vector.shape_cast %131 : vector<16xf32> to vector<16x1xf32>
    %cst_43 = arith.constant 3.200000e+01 : f32
    %133 = vector.broadcast %cst_43 : f32 to vector<16x1xf32>
    %134 = arith.divf %132, %133 : vector<16x1xf32>
    %135 = vector.broadcast %127 : vector<16x1xf32> to vector<16x32xf32>
    %136 = arith.subf %123, %135 : vector<16x32xf32>
    %cst_44 = arith.constant 9.99999974E-6 : f32
    %137 = vector.broadcast %cst_44 : f32 to vector<16x1xf32>
    %138 = arith.addf %134, %137 : vector<16x1xf32>
    %139 = math.rsqrt %138 : vector<16x1xf32>
    %140 = vector.broadcast %139 : vector<16x1xf32> to vector<16x32xf32>
    %141 = arith.mulf %136, %140 : vector<16x32xf32>
    %c0_45 = arith.constant 0 : index
    %c0_46 = arith.constant 0 : index
    %142 = vector.load %arg7[%c0_45, %c0_46] : memref<1x32xf32, #tpu.memory_space<vmem>>, vector<1x32xf32>
    %143 = vector.broadcast %142 : vector<1x32xf32> to vector<16x32xf32>
    %144 = arith.mulf %141, %143 : vector<16x32xf32>
    %c0_47 = arith.constant 0 : index
    %c0_48 = arith.constant 0 : index
    %145 = vector.load %arg8[%c0_47, %c0_48] : memref<1x32xf32, #tpu.memory_space<vmem>>, vector<1x32xf32>
    %146 = vector.broadcast %145 : vector<1x32xf32> to vector<16x32xf32>
    %147 = arith.addf %144, %146 : vector<16x32xf32>
    %148 = arith.truncf %147 : vector<16x32xf32> to vector<16x32xbf16>
    %c0_49 = arith.constant 0 : index
    %c0_50 = arith.constant 0 : index
    %149 = vector.load %arg9[%c0_49, %c0_50] : memref<32x128xbf16, #tpu.memory_space<vmem>>, vector<32x128xbf16>
    %cst_51 = arith.constant dense<0.000000e+00> : vector<16x128xf32>
    %150 = tpu.matmul %148, %149, %cst_51 {dimension_numbers = #tpu.dot_dimension_numbers<[1], [0], [0], [1], [0, 0, 1, 1], [], []>} : vector<16x32xbf16>, vector<32x128xbf16>, vector<16x128xf32> -> vector<16x128xf32>
    %c0_52 = arith.constant 0 : index
    %c0_53 = arith.constant 0 : index
    %151 = vector.load %arg10[%c0_52, %c0_53] : memref<1x128xf32, #tpu.memory_space<vmem>>, vector<1x128xf32>
    %152 = vector.broadcast %151 : vector<1x128xf32> to vector<16x128xf32>
    %153 = arith.addf %150, %152 : vector<16x128xf32>
    %154 = arith.mulf %153, %153 : vector<16x128xf32>
    %155 = arith.mulf %153, %154 : vector<16x128xf32>
    %cst_54 = arith.constant 4.471500e-02 : f32
    %156 = vector.broadcast %cst_54 : f32 to vector<16x128xf32>
    %157 = arith.mulf %156, %155 : vector<16x128xf32>
    %158 = arith.addf %153, %157 : vector<16x128xf32>
    %cst_55 = arith.constant 0.797884583 : f32
    %159 = vector.broadcast %cst_55 : f32 to vector<16x128xf32>
    %160 = arith.mulf %159, %158 : vector<16x128xf32>
    %161 = math.tanh %160 : vector<16x128xf32>
    %cst_56 = arith.constant 1.000000e+00 : f32
    %162 = vector.broadcast %cst_56 : f32 to vector<16x128xf32>
    %163 = arith.addf %162, %161 : vector<16x128xf32>
    %cst_57 = arith.constant 5.000000e-01 : f32
    %164 = vector.broadcast %cst_57 : f32 to vector<16x128xf32>
    %165 = arith.mulf %164, %163 : vector<16x128xf32>
    %166 = arith.mulf %153, %165 : vector<16x128xf32>
    %167 = arith.truncf %166 : vector<16x128xf32> to vector<16x128xbf16>
    %c0_58 = arith.constant 0 : index
    %c0_59 = arith.constant 0 : index
    %168 = vector.load %arg11[%c0_58, %c0_59] : memref<128x32xbf16, #tpu.memory_space<vmem>>, vector<128x32xbf16>
    %cst_60 = arith.constant dense<0.000000e+00> : vector<16x32xf32>
    %169 = tpu.matmul %167, %168, %cst_60 {dimension_numbers = #tpu.dot_dimension_numbers<[1], [0], [0], [1], [0, 0, 1, 1], [], []>} : vector<16x128xbf16>, vector<128x32xbf16>, vector<16x32xf32> -> vector<16x32xf32>
    %c0_61 = arith.constant 0 : index
    %c0_62 = arith.constant 0 : index
    %170 = vector.load %arg12[%c0_61, %c0_62] : memref<1x32xf32, #tpu.memory_space<vmem>>, vector<1x32xf32>
    %171 = vector.broadcast %170 : vector<1x32xf32> to vector<16x32xf32>
    %172 = arith.addf %169, %171 : vector<16x32xf32>
    %173 = arith.addf %123, %172 : vector<16x32xf32>
    %cst_63 = arith.constant dense<0.000000e+00> : vector<16xf32>
    %174 = vector.multi_reduction <add>, %173, %cst_63 [1] : vector<16x32xf32> to vector<16xf32>
    %175 = vector.shape_cast %174 : vector<16xf32> to vector<16x1xf32>
    %cst_64 = arith.constant 3.200000e+01 : f32
    %176 = vector.broadcast %cst_64 : f32 to vector<16x1xf32>
    %177 = arith.divf %175, %176 : vector<16x1xf32>
    %178 = vector.broadcast %177 : vector<16x1xf32> to vector<16x32xf32>
    %179 = arith.subf %173, %178 : vector<16x32xf32>
    %180 = arith.mulf %179, %179 : vector<16x32xf32>
    %cst_65 = arith.constant dense<0.000000e+00> : vector<16xf32>
    %181 = vector.multi_reduction <add>, %180, %cst_65 [1] : vector<16x32xf32> to vector<16xf32>
    %182 = vector.shape_cast %181 : vector<16xf32> to vector<16x1xf32>
    %cst_66 = arith.constant 3.200000e+01 : f32
    %183 = vector.broadcast %cst_66 : f32 to vector<16x1xf32>
    %184 = arith.divf %182, %183 : vector<16x1xf32>
    %185 = vector.broadcast %177 : vector<16x1xf32> to vector<16x32xf32>
    %186 = arith.subf %173, %185 : vector<16x32xf32>
    %cst_67 = arith.constant 9.99999974E-6 : f32
    %187 = vector.broadcast %cst_67 : f32 to vector<16x1xf32>
    %188 = arith.addf %184, %187 : vector<16x1xf32>
    %189 = math.rsqrt %188 : vector<16x1xf32>
    %190 = vector.broadcast %189 : vector<16x1xf32> to vector<16x32xf32>
    %191 = arith.mulf %186, %190 : vector<16x32xf32>
    %c0_68 = arith.constant 0 : index
    %c0_69 = arith.constant 0 : index
    %192 = vector.load %arg13[%c0_68, %c0_69] : memref<1x32xf32, #tpu.memory_space<vmem>>, vector<1x32xf32>
    %193 = vector.broadcast %192 : vector<1x32xf32> to vector<16x32xf32>
    %194 = arith.mulf %191, %193 : vector<16x32xf32>
    %c0_70 = arith.constant 0 : index
    %c0_71 = arith.constant 0 : index
    %195 = vector.load %arg14[%c0_70, %c0_71] : memref<1x32xf32, #tpu.memory_space<vmem>>, vector<1x32xf32>
    %196 = vector.broadcast %195 : vector<1x32xf32> to vector<16x32xf32>
    %197 = arith.addf %194, %196 : vector<16x32xf32>
    %198 = arith.truncf %197 : vector<16x32xf32> to vector<16x32xbf16>
    %c0_72 = arith.constant 0 : index
    %c0_73 = arith.constant 0 : index
    %199 = vector.load %arg15[%c0_72, %c0_73] : memref<32x96xbf16, #tpu.memory_space<vmem>>, vector<32x96xbf16>
    %cst_74 = arith.constant dense<0.000000e+00> : vector<16x96xf32>
    %200 = tpu.matmul %198, %199, %cst_74 {dimension_numbers = #tpu.dot_dimension_numbers<[1], [0], [0], [1], [0, 0, 1, 1], [], []>} : vector<16x32xbf16>, vector<32x96xbf16>, vector<16x96xf32> -> vector<16x96xf32>
    %c0_75 = arith.constant 0 : index
    %c0_76 = arith.constant 0 : index
    %201 = vector.load %arg16[%c0_75, %c0_76] : memref<1x96xf32, #tpu.memory_space<vmem>>, vector<1x96xf32>
    %202 = vector.broadcast %201 : vector<1x96xf32> to vector<16x96xf32>
    %203 = arith.addf %200, %202 : vector<16x96xf32>
    %204 = vector.extract_strided_slice %203 {offsets = [0, 0], sizes = [16, 32], strides = [1, 1]} : vector<16x96xf32> to vector<16x32xf32>
    %cst_77 = arith.constant 2.500000e-01 : f32
    %205 = vector.broadcast %cst_77 : f32 to vector<16x32xf32>
    %206 = arith.mulf %204, %205 : vector<16x32xf32>
    %207 = arith.truncf %206 : vector<16x32xf32> to vector<16x32xbf16>
    %208 = vector.extract_strided_slice %203 {offsets = [0, 32], sizes = [16, 32], strides = [1, 1]} : vector<16x96xf32> to vector<16x32xf32>
    %209 = arith.truncf %208 : vector<16x32xf32> to vector<16x32xbf16>
    %210 = vector.extract_strided_slice %203 {offsets = [0, 64], sizes = [16, 32], strides = [1, 1]} : vector<16x96xf32> to vector<16x32xf32>
    %211 = arith.truncf %210 : vector<16x32xf32> to vector<16x32xbf16>
    %212 = vector.extract_strided_slice %207 {offsets = [0, 0], sizes = [8, 16], strides = [1, 1]} : vector<16x32xbf16> to vector<8x16xbf16>
    %213 = vector.extract_strided_slice %209 {offsets = [0, 0], sizes = [8, 16], strides = [1, 1]} : vector<16x32xbf16> to vector<8x16xbf16>
    %214 = vector.extract_strided_slice %211 {offsets = [0, 0], sizes = [8, 16], strides = [1, 1]} : vector<16x32xbf16> to vector<8x16xbf16>
    %cst_78 = arith.constant dense<0.000000e+00> : vector<8x8xf32>
    %215 = tpu.matmul %212, %213, %cst_78 {dimension_numbers = #tpu.dot_dimension_numbers<[1], [1], [0], [0], [0, 0, 1, 0], [], []>} : vector<8x16xbf16>, vector<8x16xbf16>, vector<8x8xf32> -> vector<8x8xf32>
    %cst_79 = arith.constant -3.40282347E+38 : f32
    %216 = vector.broadcast %cst_79 : f32 to vector<8x8xf32>
    %217 = arith.select %3, %215, %216 : vector<8x8xi1>, vector<8x8xf32>
    %cst_80 = arith.constant dense<0xFF800000> : vector<8xf32>
    %218 = vector.multi_reduction <maximumf>, %217, %cst_80 [1] : vector<8x8xf32> to vector<8xf32>
    %219 = vector.shape_cast %218 : vector<8xf32> to vector<8x1xf32>
    %220 = vector.broadcast %219 : vector<8x1xf32> to vector<8x8xf32>
    %221 = arith.subf %217, %220 : vector<8x8xf32>
    %222 = math.exp %221 : vector<8x8xf32>
    %cst_81 = arith.constant dense<0.000000e+00> : vector<8xf32>
    %223 = vector.multi_reduction <add>, %222, %cst_81 [1] : vector<8x8xf32> to vector<8xf32>
    %224 = vector.shape_cast %223 : vector<8xf32> to vector<8x1xf32>
    %225 = tpu.reciprocal %224 {approx = true} : vector<8x1xf32> -> vector<8x1xf32>
    %226 = vector.broadcast %225 : vector<8x1xf32> to vector<8x8xf32>
    %227 = arith.mulf %222, %226 : vector<8x8xf32>
    %228 = arith.truncf %227 : vector<8x8xf32> to vector<8x8xbf16>
    %cst_82 = arith.constant dense<0.000000e+00> : vector<8x16xf32>
    %229 = tpu.matmul %228, %214, %cst_82 {dimension_numbers = #tpu.dot_dimension_numbers<[1], [0], [0], [1], [0, 0, 1, 1], [], []>} : vector<8x8xbf16>, vector<8x16xbf16>, vector<8x16xf32> -> vector<8x16xf32>
    %230 = vector.extract_strided_slice %207 {offsets = [0, 16], sizes = [8, 16], strides = [1, 1]} : vector<16x32xbf16> to vector<8x16xbf16>
    %231 = vector.extract_strided_slice %209 {offsets = [0, 16], sizes = [8, 16], strides = [1, 1]} : vector<16x32xbf16> to vector<8x16xbf16>
    %232 = vector.extract_strided_slice %211 {offsets = [0, 16], sizes = [8, 16], strides = [1, 1]} : vector<16x32xbf16> to vector<8x16xbf16>
    %cst_83 = arith.constant dense<0.000000e+00> : vector<8x8xf32>
    %233 = tpu.matmul %230, %231, %cst_83 {dimension_numbers = #tpu.dot_dimension_numbers<[1], [1], [0], [0], [0, 0, 1, 0], [], []>} : vector<8x16xbf16>, vector<8x16xbf16>, vector<8x8xf32> -> vector<8x8xf32>
    %cst_84 = arith.constant -3.40282347E+38 : f32
    %234 = vector.broadcast %cst_84 : f32 to vector<8x8xf32>
    %235 = arith.select %3, %233, %234 : vector<8x8xi1>, vector<8x8xf32>
    %cst_85 = arith.constant dense<0xFF800000> : vector<8xf32>
    %236 = vector.multi_reduction <maximumf>, %235, %cst_85 [1] : vector<8x8xf32> to vector<8xf32>
    %237 = vector.shape_cast %236 : vector<8xf32> to vector<8x1xf32>
    %238 = vector.broadcast %237 : vector<8x1xf32> to vector<8x8xf32>
    %239 = arith.subf %235, %238 : vector<8x8xf32>
    %240 = math.exp %239 : vector<8x8xf32>
    %cst_86 = arith.constant dense<0.000000e+00> : vector<8xf32>
    %241 = vector.multi_reduction <add>, %240, %cst_86 [1] : vector<8x8xf32> to vector<8xf32>
    %242 = vector.shape_cast %241 : vector<8xf32> to vector<8x1xf32>
    %243 = tpu.reciprocal %242 {approx = true} : vector<8x1xf32> -> vector<8x1xf32>
    %244 = vector.broadcast %243 : vector<8x1xf32> to vector<8x8xf32>
    %245 = arith.mulf %240, %244 : vector<8x8xf32>
    %246 = arith.truncf %245 : vector<8x8xf32> to vector<8x8xbf16>
    %cst_87 = arith.constant dense<0.000000e+00> : vector<8x16xf32>
    %247 = tpu.matmul %246, %232, %cst_87 {dimension_numbers = #tpu.dot_dimension_numbers<[1], [0], [0], [1], [0, 0, 1, 1], [], []>} : vector<8x8xbf16>, vector<8x16xbf16>, vector<8x16xf32> -> vector<8x16xf32>
    %248 = tpu.concatenate %229, %247 in 1 : vector<8x16xf32>, vector<8x16xf32> -> vector<8x32xf32>
    %249 = vector.extract_strided_slice %207 {offsets = [8, 0], sizes = [8, 16], strides = [1, 1]} : vector<16x32xbf16> to vector<8x16xbf16>
    %250 = vector.extract_strided_slice %209 {offsets = [8, 0], sizes = [8, 16], strides = [1, 1]} : vector<16x32xbf16> to vector<8x16xbf16>
    %251 = vector.extract_strided_slice %211 {offsets = [8, 0], sizes = [8, 16], strides = [1, 1]} : vector<16x32xbf16> to vector<8x16xbf16>
    %cst_88 = arith.constant dense<0.000000e+00> : vector<8x8xf32>
    %252 = tpu.matmul %249, %250, %cst_88 {dimension_numbers = #tpu.dot_dimension_numbers<[1], [1], [0], [0], [0, 0, 1, 0], [], []>} : vector<8x16xbf16>, vector<8x16xbf16>, vector<8x8xf32> -> vector<8x8xf32>
    %cst_89 = arith.constant -3.40282347E+38 : f32
    %253 = vector.broadcast %cst_89 : f32 to vector<8x8xf32>
    %254 = arith.select %3, %252, %253 : vector<8x8xi1>, vector<8x8xf32>
    %cst_90 = arith.constant dense<0xFF800000> : vector<8xf32>
    %255 = vector.multi_reduction <maximumf>, %254, %cst_90 [1] : vector<8x8xf32> to vector<8xf32>
    %256 = vector.shape_cast %255 : vector<8xf32> to vector<8x1xf32>
    %257 = vector.broadcast %256 : vector<8x1xf32> to vector<8x8xf32>
    %258 = arith.subf %254, %257 : vector<8x8xf32>
    %259 = math.exp %258 : vector<8x8xf32>
    %cst_91 = arith.constant dense<0.000000e+00> : vector<8xf32>
    %260 = vector.multi_reduction <add>, %259, %cst_91 [1] : vector<8x8xf32> to vector<8xf32>
    %261 = vector.shape_cast %260 : vector<8xf32> to vector<8x1xf32>
    %262 = tpu.reciprocal %261 {approx = true} : vector<8x1xf32> -> vector<8x1xf32>
    %263 = vector.broadcast %262 : vector<8x1xf32> to vector<8x8xf32>
    %264 = arith.mulf %259, %263 : vector<8x8xf32>
    %265 = arith.truncf %264 : vector<8x8xf32> to vector<8x8xbf16>
    %cst_92 = arith.constant dense<0.000000e+00> : vector<8x16xf32>
    %266 = tpu.matmul %265, %251, %cst_92 {dimension_numbers = #tpu.dot_dimension_numbers<[1], [0], [0], [1], [0, 0, 1, 1], [], []>} : vector<8x8xbf16>, vector<8x16xbf16>, vector<8x16xf32> -> vector<8x16xf32>
    %267 = vector.extract_strided_slice %207 {offsets = [8, 16], sizes = [8, 16], strides = [1, 1]} : vector<16x32xbf16> to vector<8x16xbf16>
    %268 = vector.extract_strided_slice %209 {offsets = [8, 16], sizes = [8, 16], strides = [1, 1]} : vector<16x32xbf16> to vector<8x16xbf16>
    %269 = vector.extract_strided_slice %211 {offsets = [8, 16], sizes = [8, 16], strides = [1, 1]} : vector<16x32xbf16> to vector<8x16xbf16>
    %cst_93 = arith.constant dense<0.000000e+00> : vector<8x8xf32>
    %270 = tpu.matmul %267, %268, %cst_93 {dimension_numbers = #tpu.dot_dimension_numbers<[1], [1], [0], [0], [0, 0, 1, 0], [], []>} : vector<8x16xbf16>, vector<8x16xbf16>, vector<8x8xf32> -> vector<8x8xf32>
    %cst_94 = arith.constant -3.40282347E+38 : f32
    %271 = vector.broadcast %cst_94 : f32 to vector<8x8xf32>
    %272 = arith.select %3, %270, %271 : vector<8x8xi1>, vector<8x8xf32>
    %cst_95 = arith.constant dense<0xFF800000> : vector<8xf32>
    %273 = vector.multi_reduction <maximumf>, %272, %cst_95 [1] : vector<8x8xf32> to vector<8xf32>
    %274 = vector.shape_cast %273 : vector<8xf32> to vector<8x1xf32>
    %275 = vector.broadcast %274 : vector<8x1xf32> to vector<8x8xf32>
    %276 = arith.subf %272, %275 : vector<8x8xf32>
    %277 = math.exp %276 : vector<8x8xf32>
    %cst_96 = arith.constant dense<0.000000e+00> : vector<8xf32>
    %278 = vector.multi_reduction <add>, %277, %cst_96 [1] : vector<8x8xf32> to vector<8xf32>
    %279 = vector.shape_cast %278 : vector<8xf32> to vector<8x1xf32>
    %280 = tpu.reciprocal %279 {approx = true} : vector<8x1xf32> -> vector<8x1xf32>
    %281 = vector.broadcast %280 : vector<8x1xf32> to vector<8x8xf32>
    %282 = arith.mulf %277, %281 : vector<8x8xf32>
    %283 = arith.truncf %282 : vector<8x8xf32> to vector<8x8xbf16>
    %cst_97 = arith.constant dense<0.000000e+00> : vector<8x16xf32>
    %284 = tpu.matmul %283, %269, %cst_97 {dimension_numbers = #tpu.dot_dimension_numbers<[1], [0], [0], [1], [0, 0, 1, 1], [], []>} : vector<8x8xbf16>, vector<8x16xbf16>, vector<8x16xf32> -> vector<8x16xf32>
    %285 = tpu.concatenate %266, %284 in 1 : vector<8x16xf32>, vector<8x16xf32> -> vector<8x32xf32>
    %286 = tpu.concatenate %248, %285 in 0 : vector<8x32xf32>, vector<8x32xf32> -> vector<16x32xf32>
    %287 = arith.truncf %286 : vector<16x32xf32> to vector<16x32xbf16>
    %c0_98 = arith.constant 0 : index
    %c0_99 = arith.constant 0 : index
    %288 = vector.load %arg17[%c0_98, %c0_99] : memref<32x32xbf16, #tpu.memory_space<vmem>>, vector<32x32xbf16>
    %cst_100 = arith.constant dense<0.000000e+00> : vector<16x32xf32>
    %289 = tpu.matmul %287, %288, %cst_100 {dimension_numbers = #tpu.dot_dimension_numbers<[1], [0], [0], [1], [0, 0, 1, 1], [], []>} : vector<16x32xbf16>, vector<32x32xbf16>, vector<16x32xf32> -> vector<16x32xf32>
    %c0_101 = arith.constant 0 : index
    %c0_102 = arith.constant 0 : index
    %290 = vector.load %arg18[%c0_101, %c0_102] : memref<1x32xf32, #tpu.memory_space<vmem>>, vector<1x32xf32>
    %291 = vector.broadcast %290 : vector<1x32xf32> to vector<16x32xf32>
    %292 = arith.addf %289, %291 : vector<16x32xf32>
    %293 = arith.addf %173, %292 : vector<16x32xf32>
    %cst_103 = arith.constant dense<0.000000e+00> : vector<16xf32>
    %294 = vector.multi_reduction <add>, %293, %cst_103 [1] : vector<16x32xf32> to vector<16xf32>
    %295 = vector.shape_cast %294 : vector<16xf32> to vector<16x1xf32>
    %cst_104 = arith.constant 3.200000e+01 : f32
    %296 = vector.broadcast %cst_104 : f32 to vector<16x1xf32>
    %297 = arith.divf %295, %296 : vector<16x1xf32>
    %298 = vector.broadcast %297 : vector<16x1xf32> to vector<16x32xf32>
    %299 = arith.subf %293, %298 : vector<16x32xf32>
    %300 = arith.mulf %299, %299 : vector<16x32xf32>
    %cst_105 = arith.constant dense<0.000000e+00> : vector<16xf32>
    %301 = vector.multi_reduction <add>, %300, %cst_105 [1] : vector<16x32xf32> to vector<16xf32>
    %302 = vector.shape_cast %301 : vector<16xf32> to vector<16x1xf32>
    %cst_106 = arith.constant 3.200000e+01 : f32
    %303 = vector.broadcast %cst_106 : f32 to vector<16x1xf32>
    %304 = arith.divf %302, %303 : vector<16x1xf32>
    %305 = vector.broadcast %297 : vector<16x1xf32> to vector<16x32xf32>
    %306 = arith.subf %293, %305 : vector<16x32xf32>
    %cst_107 = arith.constant 9.99999974E-6 : f32
    %307 = vector.broadcast %cst_107 : f32 to vector<16x1xf32>
    %308 = arith.addf %304, %307 : vector<16x1xf32>
    %309 = math.rsqrt %308 : vector<16x1xf32>
    %310 = vector.broadcast %309 : vector<16x1xf32> to vector<16x32xf32>
    %311 = arith.mulf %306, %310 : vector<16x32xf32>
    %c0_108 = arith.constant 0 : index
    %c0_109 = arith.constant 0 : index
    %312 = vector.load %arg19[%c0_108, %c0_109] : memref<1x32xf32, #tpu.memory_space<vmem>>, vector<1x32xf32>
    %313 = vector.broadcast %312 : vector<1x32xf32> to vector<16x32xf32>
    %314 = arith.mulf %311, %313 : vector<16x32xf32>
    %c0_110 = arith.constant 0 : index
    %c0_111 = arith.constant 0 : index
    %315 = vector.load %arg20[%c0_110, %c0_111] : memref<1x32xf32, #tpu.memory_space<vmem>>, vector<1x32xf32>
    %316 = vector.broadcast %315 : vector<1x32xf32> to vector<16x32xf32>
    %317 = arith.addf %314, %316 : vector<16x32xf32>
    %318 = arith.truncf %317 : vector<16x32xf32> to vector<16x32xbf16>
    %c0_112 = arith.constant 0 : index
    %c0_113 = arith.constant 0 : index
    %319 = vector.load %arg21[%c0_112, %c0_113] : memref<32x128xbf16, #tpu.memory_space<vmem>>, vector<32x128xbf16>
    %cst_114 = arith.constant dense<0.000000e+00> : vector<16x128xf32>
    %320 = tpu.matmul %318, %319, %cst_114 {dimension_numbers = #tpu.dot_dimension_numbers<[1], [0], [0], [1], [0, 0, 1, 1], [], []>} : vector<16x32xbf16>, vector<32x128xbf16>, vector<16x128xf32> -> vector<16x128xf32>
    %c0_115 = arith.constant 0 : index
    %c0_116 = arith.constant 0 : index
    %321 = vector.load %arg22[%c0_115, %c0_116] : memref<1x128xf32, #tpu.memory_space<vmem>>, vector<1x128xf32>
    %322 = vector.broadcast %321 : vector<1x128xf32> to vector<16x128xf32>
    %323 = arith.addf %320, %322 : vector<16x128xf32>
    %324 = arith.mulf %323, %323 : vector<16x128xf32>
    %325 = arith.mulf %323, %324 : vector<16x128xf32>
    %cst_117 = arith.constant 4.471500e-02 : f32
    %326 = vector.broadcast %cst_117 : f32 to vector<16x128xf32>
    %327 = arith.mulf %326, %325 : vector<16x128xf32>
    %328 = arith.addf %323, %327 : vector<16x128xf32>
    %cst_118 = arith.constant 0.797884583 : f32
    %329 = vector.broadcast %cst_118 : f32 to vector<16x128xf32>
    %330 = arith.mulf %329, %328 : vector<16x128xf32>
    %331 = math.tanh %330 : vector<16x128xf32>
    %cst_119 = arith.constant 1.000000e+00 : f32
    %332 = vector.broadcast %cst_119 : f32 to vector<16x128xf32>
    %333 = arith.addf %332, %331 : vector<16x128xf32>
    %cst_120 = arith.constant 5.000000e-01 : f32
    %334 = vector.broadcast %cst_120 : f32 to vector<16x128xf32>
    %335 = arith.mulf %334, %333 : vector<16x128xf32>
    %336 = arith.mulf %323, %335 : vector<16x128xf32>
    %337 = arith.truncf %336 : vector<16x128xf32> to vector<16x128xbf16>
    %c0_121 = arith.constant 0 : index
    %c0_122 = arith.constant 0 : index
    %338 = vector.load %arg23[%c0_121, %c0_122] : memref<128x32xbf16, #tpu.memory_space<vmem>>, vector<128x32xbf16>
    %cst_123 = arith.constant dense<0.000000e+00> : vector<16x32xf32>
    %339 = tpu.matmul %337, %338, %cst_123 {dimension_numbers = #tpu.dot_dimension_numbers<[1], [0], [0], [1], [0, 0, 1, 1], [], []>} : vector<16x128xbf16>, vector<128x32xbf16>, vector<16x32xf32> -> vector<16x32xf32>
    %c0_124 = arith.constant 0 : index
    %c0_125 = arith.constant 0 : index
    %340 = vector.load %arg24[%c0_124, %c0_125] : memref<1x32xf32, #tpu.memory_space<vmem>>, vector<1x32xf32>
    %341 = vector.broadcast %340 : vector<1x32xf32> to vector<16x32xf32>
    %342 = arith.addf %339, %341 : vector<16x32xf32>
    %343 = arith.addf %293, %342 : vector<16x32xf32>
    %cst_126 = arith.constant dense<0.000000e+00> : vector<16xf32>
    %344 = vector.multi_reduction <add>, %343, %cst_126 [1] : vector<16x32xf32> to vector<16xf32>
    %345 = vector.shape_cast %344 : vector<16xf32> to vector<16x1xf32>
    %cst_127 = arith.constant 3.200000e+01 : f32
    %346 = vector.broadcast %cst_127 : f32 to vector<16x1xf32>
    %347 = arith.divf %345, %346 : vector<16x1xf32>
    %348 = vector.broadcast %347 : vector<16x1xf32> to vector<16x32xf32>
    %349 = arith.subf %343, %348 : vector<16x32xf32>
    %350 = arith.mulf %349, %349 : vector<16x32xf32>
    %cst_128 = arith.constant dense<0.000000e+00> : vector<16xf32>
    %351 = vector.multi_reduction <add>, %350, %cst_128 [1] : vector<16x32xf32> to vector<16xf32>
    %352 = vector.shape_cast %351 : vector<16xf32> to vector<16x1xf32>
    %cst_129 = arith.constant 3.200000e+01 : f32
    %353 = vector.broadcast %cst_129 : f32 to vector<16x1xf32>
    %354 = arith.divf %352, %353 : vector<16x1xf32>
    %355 = vector.broadcast %347 : vector<16x1xf32> to vector<16x32xf32>
    %356 = arith.subf %343, %355 : vector<16x32xf32>
    %cst_130 = arith.constant 9.99999974E-6 : f32
    %357 = vector.broadcast %cst_130 : f32 to vector<16x1xf32>
    %358 = arith.addf %354, %357 : vector<16x1xf32>
    %359 = math.rsqrt %358 : vector<16x1xf32>
    %360 = vector.broadcast %359 : vector<16x1xf32> to vector<16x32xf32>
    %361 = arith.mulf %356, %360 : vector<16x32xf32>
    %c0_131 = arith.constant 0 : index
    %c0_132 = arith.constant 0 : index
    %362 = vector.load %arg25[%c0_131, %c0_132] : memref<1x32xf32, #tpu.memory_space<vmem>>, vector<1x32xf32>
    %363 = vector.broadcast %362 : vector<1x32xf32> to vector<16x32xf32>
    %364 = arith.mulf %361, %363 : vector<16x32xf32>
    %c0_133 = arith.constant 0 : index
    %c0_134 = arith.constant 0 : index
    %365 = vector.load %arg26[%c0_133, %c0_134] : memref<1x32xf32, #tpu.memory_space<vmem>>, vector<1x32xf32>
    %366 = vector.broadcast %365 : vector<1x32xf32> to vector<16x32xf32>
    %367 = arith.addf %364, %366 : vector<16x32xf32>
    %c0_135 = arith.constant 0 : index
    %c0_136 = arith.constant 0 : index
    %368 = vector.load %arg27[%c0_135, %c0_136] : memref<16x32xf32, #tpu.memory_space<vmem>>, vector<16x32xf32>
    tpu.vector_store %arg27[%c0_135, %c0_136], %367 {strides = array<i32>} : memref<16x32xf32, #tpu.memory_space<vmem>>, vector<16x32xf32>,
    return
  }
}

</mosaic_0001>

<llo_original>
// kernel: movielens_forward.5
$region0: #{movielens_forward.5}
  #allocation0 [shape = 'u32[]', space=smem, size = 0x4, offset = 0x4, fixed_abs, tag = 'smem constant byte address 0x4 - core index']
  #allocation1 [shape = 'u32[144,128]{1,0:T(1,128)}', space=vmem, size = 0x12000, scoped, tag = 'internal scratch']
  #allocation2 [shape = 'f32[8,128]{1,0:T(8,128)}', space=vmem, size = 0x1000, scoped, tag = 'scratch operand']
  %s0 = inlined_call_operand.vmem [shape: bf16[8,128], index: 0, kind: input, shape index: {}]
  %s1 = inlined_call_operand.vmem [shape: bf16[128,128], index: 1, kind: input, shape index: {}]
  %s2 = inlined_call_operand.vmem [shape: f32[8,128], index: 2, kind: output, shape index: {}]
  %s3 = sld [smem:[#allocation0]]
  $region26: #{movielens_forward.5} parent=0
    _
  %s5 = ssub.s32 1, %s3
  %s6 = scalar_select 0, %s5, %s3
  // Predicated region
  $region2: #{movielens_forward.5} parent=0 // pred_check
    _
  $region3: #{movielens_forward.5} parent=0 // pred_check_branch
    %8 = sbr.rel (0) target = $region5
  $region4: #{movielens_forward.5} parent=0 // pred_region
    _
  $region5: #{movielens_forward.5} parent=0 // pred_fallthru
    _
  // Predicated region
  $region6: #{movielens_forward.5} parent=0 // pred_check
    _
  $region7: #{movielens_forward.5} parent=0 // pred_check_branch
    %10 = sbr.rel (0) target = $region9
  $region8: #{movielens_forward.5} parent=0 // pred_region
    _
  $region9: #{movielens_forward.5} parent=0 // pred_fallthru
    _
  %p12 = scmp.eq.s32.totalorder 0, 0
  // Predicated region
  $region10: #{movielens_forward.5} parent=0 // pred_check
    %p13 = pneg %p12
  $region11: #{movielens_forward.5} parent=0 // pred_check_branch
    %15 = sbr.rel (%p13) target = $region13
  $region12: #{movielens_forward.5} parent=0 // pred_region
    %16 = vst [vmem:[#allocation2] sm:$0xff] 0.0
  $region13: #{movielens_forward.5} parent=0 // pred_fallthru
    _
  %v17 = vld [vmem:[#allocation2] sm:$0xff]
  %v18 = vld [vmem:[%s0] sm:$0xf]
  %v19 = vld [vmem:[%s1] sm:$0xf]
  %v20 = vld [vmem:[%s1 + $0x4] sm:$0xf]
  %v21 = vld [vmem:[%s1 + $0x8] sm:$0xf]
  %v22 = vld [vmem:[%s1 + $0xc] sm:$0xf]
  %v23 = vld [vmem:[%s1 + $0x10] sm:$0xf]
  %v24 = vld [vmem:[%s1 + $0x14] sm:$0xf]
  %v25 = vld [vmem:[%s1 + $0x18] sm:$0xf]
  %v26 = vld [vmem:[%s1 + $0x1c] sm:$0xf]
  %v27 = vld [vmem:[%s1 + $0x20] sm:$0xf]
  %v28 = vld [vmem:[%s1 + $0x24] sm:$0xf]
  %v29 = vld [vmem:[%s1 + $0x28] sm:$0xf]
  %v30 = vld [vmem:[%s1 + $0x2c] sm:$0xf]
  %v31 = vld [vmem:[%s1 + $0x30] sm:$0xf]
  %v32 = vld [vmem:[%s1 + $0x34] sm:$0xf]
  %v33 = vld [vmem:[%s1 + $0x38] sm:$0xf]
  %v34 = vld [vmem:[%s1 + $0x3c] sm:$0xf]
  %v51 = vunpack.c.l.b16 %v19
  %v52 = vunpack.c.l.b16 %v20
  %v53 = vunpack.c.l.b16 %v21
  %v54 = vunpack.c.l.b16 %v22
  %v55 = vunpack.c.l.b16 %v23
  %v56 = vunpack.c.l.b16 %v24
  %v57 = vunpack.c.l.b16 %v25
  %v58 = vunpack.c.l.b16 %v26
  %v59 = vunpack.c.l.b16 %v27
  %v60 = vunpack.c.l.b16 %v28
  %v61 = vunpack.c.l.b16 %v29
  %v62 = vunpack.c.l.b16 %v30
  %v63 = vunpack.c.l.b16 %v31
  %v64 = vunpack.c.l.b16 %v32
  %v65 = vunpack.c.l.b16 %v33
  %v66 = vunpack.c.l.b16 %v34
  %v67 = vpack.c.b16 %v52, %v51
  %v68 = vpack.c.b16 %v54, %v53
  %v69 = vpack.c.b16 %v56, %v55
  %v70 = vpack.c.b16 %v58, %v57
  %v71 = vpack.c.b16 %v60, %v59
  %v72 = vpack.c.b16 %v62, %v61
  %v73 = vpack.c.b16 %v64, %v63
  %v74 = vpack.c.b16 %v66, %v65
  %83 = vmatprep.subr.bf16.mxu0 0
  %84 = vmatpush1.bf16.msra.mxu0 %v67
  %85 = vmatprep.subr.bf16.mxu0 0
  %86 = vmatpush1.bf16.msra.mxu0 %v68
  %87 = vmatprep.subr.bf16.mxu0 0
  %88 = vmatpush1.bf16.msra.mxu0 %v69
  %89 = vmatprep.subr.bf16.mxu0 0
  %90 = vmatpush1.bf16.msra.mxu0 %v70
  %91 = vmatprep.subr.bf16.mxu0 0
  %92 = vmatpush1.bf16.msra.mxu0 %v71
  %93 = vmatprep.subr.bf16.mxu0 0
  %94 = vmatpush1.bf16.msra.mxu0 %v72
  %95 = vmatprep.subr.bf16.mxu0 0
  %96 = vmatpush1.bf16.msra.mxu0 %v73
  %97 = vmatprep.subr.bf16.mxu0 0
  %98 = vmatpush1.bf16.msra.mxu0 %v74
  %99 = vmatprep.subr.bf16.mxu0 0
  %100 = vmatpush1.bf16.msra.mxu0 0
  %101 = vmatprep.subr.bf16.mxu0 0
  %102 = vmatpush1.bf16.msra.mxu0 0
  %103 = vmatprep.subr.bf16.mxu0 0
  %104 = vmatpush1.bf16.msra.mxu0 0
  %105 = vmatprep.subr.bf16.mxu0 0
  %106 = vmatpush1.bf16.msra.mxu0 0
  %107 = vmatprep.subr.bf16.mxu0 0
  %108 = vmatpush1.bf16.msra.mxu0 0
  %109 = vmatprep.subr.bf16.mxu0 0
  %110 = vmatpush1.bf16.msra.mxu0 0
  %111 = vmatprep.subr.bf16.mxu0 0
  %112 = vmatpush1.bf16.msra.mxu0 0
  %113 = vmatprep.subr.bf16.mxu0 0
  %114 = vmatpush1.bf16.msra.mxu0 0
  %115 = vmatprep.mubr.bf16.mxu0 0
  %116 = vmatmul.mubr.bf16.gmra.mrb[0].mxu0 %v18
  %v117 = vpop.f32.mrb[0].mxu0
  %v118 = vadd.f32 0.0, %v117
  %v119 = vpop.f32.mrb[0].mxu0
  %v120 = vpop.f32.mrb[0].mxu0
  %v121 = vpop.f32.mrb[0].mxu0
  %122 = vdwg.mxu0
  %v123 = vadd.f32 %v17, %v118
  %124 = vst [vmem:[#allocation2] sm:$0xff] %v123
  // Predicated region
  $region14: #{movielens_forward.5} parent=0 // pred_check
    %p125 = pneg %p12
  $region15: #{movielens_forward.5} parent=0 // pred_check_branch
    %127 = sbr.rel (%p125) target = $region17
  $region16: #{movielens_forward.5} parent=0 // pred_region
    %v128 = vld [vmem:[#allocation2] sm:$0xff]
    %129 = vst [vmem:[%s2] sm:$0xff] %v128
  $region17: #{movielens_forward.5} parent=0 // pred_fallthru
    _
  // Predicated region
  $region18: #{movielens_forward.5} parent=0 // pred_check
    _
  $region19: #{movielens_forward.5} parent=0 // pred_check_branch
    %131 = sbr.rel (0) target = $region21
  $region20: #{movielens_forward.5} parent=0 // pred_region
    _
  $region21: #{movielens_forward.5} parent=0 // pred_fallthru
    _
  // Predicated region
  $region22: #{movielens_forward.5} parent=0 // pred_check
    _
  $region23: #{movielens_forward.5} parent=0 // pred_check_branch
    %133 = sbr.rel (0) target = $region25
  $region24: #{movielens_forward.5} parent=0 // pred_region
    _
  $region25: #{movielens_forward.5} parent=0 // pred_fallthru
    _

// kernel: movielens_forward.4
$region0: #{movielens_forward.4}
  #allocation0 [shape = 'u32[]', space=smem, size = 0x4, offset = 0x4, fixed_abs, tag = 'smem constant byte address 0x4 - core index']
  #allocation1 [shape = 'u32[144,128]{1,0:T(1,128)}', space=vmem, size = 0x12000, scoped, tag = 'internal scratch']
  %s0 = inlined_call_operand.vmem [shape: f32[2,256], index: 0, kind: input, shape index: {}]
  %s1 = inlined_call_operand.vmem [shape: f32[2,16], index: 1, kind: input, shape index: {}]
  %s2 = inlined_call_operand.vmem [shape: bf16[256,64], index: 2, kind: input, shape index: {}]
  %s3 = inlined_call_operand.vmem [shape: bf16[16,64], index: 3, kind: input, shape index: {}]
  %s4 = inlined_call_operand.vmem [shape: f32[1,64], index: 4, kind: input, shape index: {}]
  %s5 = inlined_call_operand.vmem [shape: bf16[64,32], index: 5, kind: input, shape index: {}]
  %s6 = inlined_call_operand.vmem [shape: f32[1,32], index: 6, kind: input, shape index: {}]
  %s7 = inlined_call_operand.vmem [shape: f32[2,32], index: 7, kind: output, shape index: {}]
  %s8 = sld [smem:[#allocation0]]
  $region38: #{movielens_forward.4} parent=0
    _
  %s10 = ssub.s32 1, %s8
  %s11 = scalar_select 0, %s10, %s8
  // Predicated region
  $region2: #{movielens_forward.4} parent=0 // pred_check
    _
  $region3: #{movielens_forward.4} parent=0 // pred_check_branch
    %13 = sbr.rel (0) target = $region5
  $region4: #{movielens_forward.4} parent=0 // pred_region
    _
  $region5: #{movielens_forward.4} parent=0 // pred_fallthru
    _
  // Predicated region
  $region6: #{movielens_forward.4} parent=0 // pred_check
    _
  $region7: #{movielens_forward.4} parent=0 // pred_check_branch
    %15 = sbr.rel (0) target = $region9
  $region8: #{movielens_forward.4} parent=0 // pred_region
    _
  $region9: #{movielens_forward.4} parent=0 // pred_fallthru
    _
  // Predicated region
  $region10: #{movielens_forward.4} parent=0 // pred_check
    _
  $region11: #{movielens_forward.4} parent=0 // pred_check_branch
    %17 = sbr.rel (0) target = $region13
  $region12: #{movielens_forward.4} parent=0 // pred_region
    _
  $region13: #{movielens_forward.4} parent=0 // pred_fallthru
    _
  // Predicated region
  $region14: #{movielens_forward.4} parent=0 // pred_check
    _
  $region15: #{movielens_forward.4} parent=0 // pred_check_branch
    %19 = sbr.rel (0) target = $region17
  $region16: #{movielens_forward.4} parent=0 // pred_region
    _
  $region17: #{movielens_forward.4} parent=0 // pred_fallthru
    _
  // Predicated region
  $region18: #{movielens_forward.4} parent=0 // pred_check
    _
  $region19: #{movielens_forward.4} parent=0 // pred_check_branch
    %21 = sbr.rel (0) target = $region21
  $region20: #{movielens_forward.4} parent=0 // pred_region
    _
  $region21: #{movielens_forward.4} parent=0 // pred_fallthru
    _
  // Predicated region
  $region22: #{movielens_forward.4} parent=0 // pred_check
    _
  $region23: #{movielens_forward.4} parent=0 // pred_check_branch
    %23 = sbr.rel (0) target = $region25
  $region24: #{movielens_forward.4} parent=0 // pred_region
    _
  $region25: #{movielens_forward.4} parent=0 // pred_fallthru
    _
  // Predicated region
  $region26: #{movielens_forward.4} parent=0 // pred_check
    _
  $region27: #{movielens_forward.4} parent=0 // pred_check_branch
    %25 = sbr.rel (0) target = $region29
  $region28: #{movielens_forward.4} parent=0 // pred_region
    _
  $region29: #{movielens_forward.4} parent=0 // pred_fallthru
    _
  %v27 = vld [vmem:[%s0] sm:$0xf]
  %v30 = vunpack.c.l.s4 1983009808
  %v31 = vunpack.c.0.s8 %v30
  %v32 = vlaneseq
  %v33 = vshrl.u32 %v32, 7
  %v34 = vsub.s32 %v31, %v33
  %v35 = vrot.slane %v27, %v34
  %v36 = vcombine.high %v35, %v35
  %v39 = vpack.c.bf16 %v35, %v35
  %v40 = vpack.c.bf16 %v36, %v36
  %v41 = vld [vmem:[%s1] sm:$0x3]
  %v42 = vpack.c.bf16 %v41, %v41
  %v43 = vld [vmem:[%s2] sm:$0xf]
  %v44 = vld [vmem:[%s2 + $0x4] sm:$0xf]
  %v45 = vld [vmem:[%s2 + $0x8] sm:$0xf]
  %v46 = vld [vmem:[%s2 + $0xc] sm:$0xf]
  %v47 = vld [vmem:[%s2 + $0x10] sm:$0xf]
  %v48 = vld [vmem:[%s2 + $0x14] sm:$0xf]
  %v49 = vld [vmem:[%s2 + $0x18] sm:$0xf]
  %v50 = vld [vmem:[%s2 + $0x1c] sm:$0xf]
  %v51 = vld [vmem:[%s2 + $0x20] sm:$0xf]
  %v52 = vld [vmem:[%s2 + $0x24] sm:$0xf]
  %v53 = vld [vmem:[%s2 + $0x28] sm:$0xf]
  %v54 = vld [vmem:[%s2 + $0x2c] sm:$0xf]
  %v55 = vld [vmem:[%s2 + $0x30] sm:$0xf]
  %v56 = vld [vmem:[%s2 + $0x34] sm:$0xf]
  %v57 = vld [vmem:[%s2 + $0x38] sm:$0xf]
  %v58 = vld [vmem:[%s2 + $0x3c] sm:$0xf]
  %v59 = vld [vmem:[%s2 + $0x40] sm:$0xf]
  %v60 = vld [vmem:[%s2 + $0x44] sm:$0xf]
  %v61 = vld [vmem:[%s2 + $0x48] sm:$0xf]
  %v62 = vld [vmem:[%s2 + $0x4c] sm:$0xf]
  %v63 = vld [vmem:[%s2 + $0x50] sm:$0xf]
  %v64 = vld [vmem:[%s2 + $0x54] sm:$0xf]
  %v65 = vld [vmem:[%s2 + $0x58] sm:$0xf]
  %v66 = vld [vmem:[%s2 + $0x5c] sm:$0xf]
  %v67 = vld [vmem:[%s2 + $0x60] sm:$0xf]
  %v68 = vld [vmem:[%s2 + $0x64] sm:$0xf]
  %v69 = vld [vmem:[%s2 + $0x68] sm:$0xf]
  %v70 = vld [vmem:[%s2 + $0x6c] sm:$0xf]
  %v71 = vld [vmem:[%s2 + $0x70] sm:$0xf]
  %v72 = vld [vmem:[%s2 + $0x74] sm:$0xf]
  %v73 = vld [vmem:[%s2 + $0x78] sm:$0xf]
  %v74 = vld [vmem:[%s2 + $0x7c] sm:$0xf]
  %v75 = vld [vmem:[%s3] sm:$0xf]
  %v76 = vld [vmem:[%s3 + $0x4] sm:$0xf]
  %v79 = vunpack.c.l.b16 %v75
  %v80 = vunpack.c.l.b16 %v76
  %v81 = vpack.c.b16 %v80, %v79
  %vm83 = vcmask 130048
  %v85 = vsel %vm83, %v42, 0
  %87 = vmatprep.subr.bf16.mxu0 0
  %88 = vmatpush1.bf16.msra.mxu0 %v81
  %89 = vmatprep.subr.bf16.mxu0 0
  %90 = vmatpush1.bf16.msra.mxu0 0
  %91 = vmatprep.subr.bf16.mxu0 0
  %92 = vmatpush1.bf16.msra.mxu0 0
  %93 = vmatprep.subr.bf16.mxu0 0
  %94 = vmatpush1.bf16.msra.mxu0 0
  %95 = vmatprep.subr.bf16.mxu0 0
  %96 = vmatpush1.bf16.msra.mxu0 0
  %97 = vmatprep.subr.bf16.mxu0 0
  %98 = vmatpush1.bf16.msra.mxu0 0
  %99 = vmatprep.subr.bf16.mxu0 0
  %100 = vmatpush1.bf16.msra.mxu0 0
  %101 = vmatprep.subr.bf16.mxu0 0
  %102 = vmatpush1.bf16.msra.mxu0 0
  %103 = vmatprep.subr.bf16.mxu0 0
  %104 = vmatpush1.bf16.msra.mxu0 0
  %105 = vmatprep.subr.bf16.mxu0 0
  %106 = vmatpush1.bf16.msra.mxu0 0
  %107 = vmatprep.subr.bf16.mxu0 0
  %108 = vmatpush1.bf16.msra.mxu0 0
  %109 = vmatprep.subr.bf16.mxu0 0
  %110 = vmatpush1.bf16.msra.mxu0 0
  %111 = vmatprep.subr.bf16.mxu0 0
  %112 = vmatpush1.bf16.msra.mxu0 0
  %113 = vmatprep.subr.bf16.mxu0 0
  %114 = vmatpush1.bf16.msra.mxu0 0
  %115 = vmatprep.subr.bf16.mxu0 0
  %116 = vmatpush1.bf16.msra.mxu0 0
  %117 = vmatprep.subr.bf16.mxu0 0
  %118 = vmatpush1.bf16.msra.mxu0 0
  %119 = vmatprep.mubr.bf16.mxu0 0
  %120 = vmatmul.mubr.bf16.gmra.mrb[0].mxu0 %v85
  %v121 = vpop.f32.mrb[0].mxu0
  %v122 = vadd.f32 0.0, %v121
  %v123 = vpop.f32.mrb[0].mxu0
  %v124 = vpop.f32.mrb[0].mxu0
  %v125 = vpop.f32.mrb[0].mxu0
  %126 = vdwg.mxu0
  %v159 = vunpack.c.l.b16 %v43
  %v160 = vunpack.c.l.b16 %v44
  %v161 = vunpack.c.l.b16 %v45
  %v162 = vunpack.c.l.b16 %v46
  %v163 = vunpack.c.l.b16 %v47
  %v164 = vunpack.c.l.b16 %v48
  %v165 = vunpack.c.l.b16 %v49
  %v166 = vunpack.c.l.b16 %v50
  %v167 = vunpack.c.l.b16 %v51
  %v168 = vunpack.c.l.b16 %v52
  %v169 = vunpack.c.l.b16 %v53
  %v170 = vunpack.c.l.b16 %v54
  %v171 = vunpack.c.l.b16 %v55
  %v172 = vunpack.c.l.b16 %v56
  %v173 = vunpack.c.l.b16 %v57
  %v174 = vunpack.c.l.b16 %v58
  %v175 = vunpack.c.l.b16 %v59
  %v176 = vunpack.c.l.b16 %v60
  %v177 = vunpack.c.l.b16 %v61
  %v178 = vunpack.c.l.b16 %v62
  %v179 = vunpack.c.l.b16 %v63
  %v180 = vunpack.c.l.b16 %v64
  %v181 = vunpack.c.l.b16 %v65
  %v182 = vunpack.c.l.b16 %v66
  %v183 = vunpack.c.l.b16 %v67
  %v184 = vunpack.c.l.b16 %v68
  %v185 = vunpack.c.l.b16 %v69
  %v186 = vunpack.c.l.b16 %v70
  %v187 = vunpack.c.l.b16 %v71
  %v188 = vunpack.c.l.b16 %v72
  %v189 = vunpack.c.l.b16 %v73
  %v190 = vunpack.c.l.b16 %v74
  %v191 = vpack.c.b16 %v160, %v159
  %v192 = vpack.c.b16 %v162, %v161
  %v193 = vpack.c.b16 %v164, %v163
  %v194 = vpack.c.b16 %v166, %v165
  %v195 = vpack.c.b16 %v168, %v167
  %v196 = vpack.c.b16 %v170, %v169
  %v197 = vpack.c.b16 %v172, %v171
  %v198 = vpack.c.b16 %v174, %v173
  %v199 = vpack.c.b16 %v176, %v175
  %v200 = vpack.c.b16 %v178, %v177
  %v201 = vpack.c.b16 %v180, %v179
  %v202 = vpack.c.b16 %v182, %v181
  %v203 = vpack.c.b16 %v184, %v183
  %v204 = vpack.c.b16 %v186, %v185
  %v205 = vpack.c.b16 %v188, %v187
  %v206 = vpack.c.b16 %v190, %v189
  %223 = vmatprep.subr.bf16.mxu0 0
  %224 = vmatpush1.bf16.msra.mxu0 %v191
  %225 = vmatprep.subr.bf16.mxu0 0
  %226 = vmatpush1.bf16.msra.mxu0 %v192
  %227 = vmatprep.subr.bf16.mxu0 0
  %228 = vmatpush1.bf16.msra.mxu0 %v193
  %229 = vmatprep.subr.bf16.mxu0 0
  %230 = vmatpush1.bf16.msra.mxu0 %v194
  %231 = vmatprep.subr.bf16.mxu0 0
  %232 = vmatpush1.bf16.msra.mxu0 %v195
  %233 = vmatprep.subr.bf16.mxu0 0
  %234 = vmatpush1.bf16.msra.mxu0 %v196
  %235 = vmatprep.subr.bf16.mxu0 0
  %236 = vmatpush1.bf16.msra.mxu0 %v197
  %237 = vmatprep.subr.bf16.mxu0 0
  %238 = vmatpush1.bf16.msra.mxu0 %v198
  %239 = vmatprep.subr.bf16.mxu0 0
  %240 = vmatpush1.bf16.msra.mxu0 %v199
  %241 = vmatprep.subr.bf16.mxu0 0
  %242 = vmatpush1.bf16.msra.mxu0 %v200
  %243 = vmatprep.subr.bf16.mxu0 0
  %244 = vmatpush1.bf16.msra.mxu0 %v201
  %245 = vmatprep.subr.bf16.mxu0 0
  %246 = vmatpush1.bf16.msra.mxu0 %v202
  %247 = vmatprep.subr.bf16.mxu0 0
  %248 = vmatpush1.bf16.msra.mxu0 %v203
  %249 = vmatprep.subr.bf16.mxu0 0
  %250 = vmatpush1.bf16.msra.mxu0 %v204
  %251 = vmatprep.subr.bf16.mxu0 0
  %252 = vmatpush1.bf16.msra.mxu0 %v205
  %253 = vmatprep.subr.bf16.mxu0 0
  %254 = vmatpush1.bf16.msra.mxu0 %v206
  %255 = vmatprep.mubr.bf16.mxu0 %v40
  %256 = vmatmul.mubr.bf16.gmra.mrb[0].mxu0 %v39
  %v257 = vpop.f32.mrb[0].mxu0
  %v258 = vadd.f32 %v122, %v257
  %v259 = vpop.f32.mrb[0].mxu0
  %v260 = vpop.f32.mrb[0].mxu0
  %v261 = vpop.f32.mrb[0].mxu0
  %262 = vdwg.mxu0
  %v263 = vld [vmem:[%s4] sm:$0x1]
  %v265 = vlaneseq
  %v266 = vshrl.u32 %v265, 7
  %v267 = vsub.s32 0, %v266
  %v268 = vrot.slane %v263, %v267
  %v270 = vadd.f32 %v258, %v268
  %v271 = vmax.f32 %v270, 0.0
  %v272 = vpack.c.bf16 %v271, %v271
  %v273 = vld [vmem:[%s5] sm:$0xf]
  %v274 = vld [vmem:[%s5 + $0x4] sm:$0xf]
  %v275 = vld [vmem:[%s5 + $0x8] sm:$0xf]
  %v276 = vld [vmem:[%s5 + $0xc] sm:$0xf]
  %v277 = vld [vmem:[%s5 + $0x10] sm:$0xf]
  %v278 = vld [vmem:[%s5 + $0x14] sm:$0xf]
  %v279 = vld [vmem:[%s5 + $0x18] sm:$0xf]
  %v280 = vld [vmem:[%s5 + $0x1c] sm:$0xf]
  %v281 = vld [vmem:[%s6] sm:$0x1]
  %v283 = vlaneseq
  %v284 = vshrl.u32 %v283, 7
  %v285 = vsub.s32 0, %v284
  %v286 = vrot.slane %v281, %v285
  %v296 = vunpack.c.l.b16 %v273
  %v297 = vunpack.c.l.b16 %v274
  %v298 = vunpack.c.l.b16 %v275
  %v299 = vunpack.c.l.b16 %v276
  %v300 = vunpack.c.l.b16 %v277
  %v301 = vunpack.c.l.b16 %v278
  %v302 = vunpack.c.l.b16 %v279
  %v303 = vunpack.c.l.b16 %v280
  %v304 = vpack.c.b16 %v297, %v296
  %v305 = vpack.c.b16 %v299, %v298
  %v306 = vpack.c.b16 %v301, %v300
  %v307 = vpack.c.b16 %v303, %v302
  %vm312 = vcmask 523264
  %v314 = vsel %vm312, %v272, 0
  %316 = vmatprep.subr.bf16.mxu0 0
  %317 = vmatpush1.bf16.msra.mxu0 %v304
  %318 = vmatprep.subr.bf16.mxu0 0
  %319 = vmatpush1.bf16.msra.mxu0 %v305
  %320 = vmatprep.subr.bf16.mxu0 0
  %321 = vmatpush1.bf16.msra.mxu0 %v306
  %322 = vmatprep.subr.bf16.mxu0 0
  %323 = vmatpush1.bf16.msra.mxu0 %v307
  %324 = vmatprep.subr.bf16.mxu0 0
  %325 = vmatpush1.bf16.msra.mxu0 0
  %326 = vmatprep.subr.bf16.mxu0 0
  %327 = vmatpush1.bf16.msra.mxu0 0
  %328 = vmatprep.subr.bf16.mxu0 0
  %329 = vmatpush1.bf16.msra.mxu0 0
  %330 = vmatprep.subr.bf16.mxu0 0
  %331 = vmatpush1.bf16.msra.mxu0 0
  %332 = vmatprep.subr.bf16.mxu0 0
  %333 = vmatpush1.bf16.msra.mxu0 0
  %334 = vmatprep.subr.bf16.mxu0 0
  %335 = vmatpush1.bf16.msra.mxu0 0
  %336 = vmatprep.subr.bf16.mxu0 0
  %337 = vmatpush1.bf16.msra.mxu0 0
  %338 = vmatprep.subr.bf16.mxu0 0
  %339 = vmatpush1.bf16.msra.mxu0 0
  %340 = vmatprep.subr.bf16.mxu0 0
  %341 = vmatpush1.bf16.msra.mxu0 0
  %342 = vmatprep.subr.bf16.mxu0 0
  %343 = vmatpush1.bf16.msra.mxu0 0
  %344 = vmatprep.subr.bf16.mxu0 0
  %345 = vmatpush1.bf16.msra.mxu0 0
  %346 = vmatprep.subr.bf16.mxu0 0
  %347 = vmatpush1.bf16.msra.mxu0 0
  %348 = vmatprep.mubr.bf16.mxu0 0
  %349 = vmatmul.mubr.bf16.gmra.mrb[0].mxu0 %v314
  %v350 = vpop.f32.mrb[0].mxu0
  %v351 = vadd.f32 %v286, %v350
  %v352 = vpop.f32.mrb[0].mxu0
  %v353 = vpop.f32.mrb[0].mxu0
  %v354 = vpop.f32.mrb[0].mxu0
  %355 = vdwg.mxu0
  %v356 = vmax.f32 %v351, 0.0
  %vm357 = vcmask 254976
  %358 = vst.msk [vmem:[%s7] sm:$0x3] %vm357, %v356
  // Predicated region
  $region30: #{movielens_forward.4} parent=0 // pred_check
    _
  $region31: #{movielens_forward.4} parent=0 // pred_check_branch
    %360 = sbr.rel (0) target = $region33
  $region32: #{movielens_forward.4} parent=0 // pred_region
    _
  $region33: #{movielens_forward.4} parent=0 // pred_fallthru
    _
  // Predicated region
  $region34: #{movielens_forward.4} parent=0 // pred_check
    _
  $region35: #{movielens_forward.4} parent=0 // pred_check_branch
    %362 = sbr.rel (0) target = $region37
  $region36: #{movielens_forward.4} parent=0 // pred_region
    _
  $region37: #{movielens_forward.4} parent=0 // pred_fallthru
    _

// kernel: movielens_forward.3
$region0: #{movielens_forward.3}
  #allocation0 [shape = 'u32[]', space=smem, size = 0x4, offset = 0x4, fixed_abs, tag = 'smem constant byte address 0x4 - core index']
  #allocation1 [shape = 'u32[144,128]{1,0:T(1,128)}', space=vmem, size = 0x12000, scoped, tag = 'internal scratch']
  %s0 = inlined_call_operand.vmem [shape: f32[16,32], index: 0, kind: input, shape index: {}]
  %s1 = inlined_call_operand.vmem [shape: f32[1,32], index: 1, kind: input, shape index: {}]
  %s2 = inlined_call_operand.vmem [shape: f32[1,32], index: 2, kind: input, shape index: {}]
  %s3 = inlined_call_operand.vmem [shape: bf16[32,96], index: 3, kind: input, shape index: {}]
  %s4 = inlined_call_operand.vmem [shape: f32[1,96], index: 4, kind: input, shape index: {}]
  %s5 = inlined_call_operand.vmem [shape: bf16[32,32], index: 5, kind: input, shape index: {}]
  %s6 = inlined_call_operand.vmem [shape: f32[1,32], index: 6, kind: input, shape index: {}]
  %s7 = inlined_call_operand.vmem [shape: f32[1,32], index: 7, kind: input, shape index: {}]
  %s8 = inlined_call_operand.vmem [shape: f32[1,32], index: 8, kind: input, shape index: {}]
  %s9 = inlined_call_operand.vmem [shape: bf16[32,128], index: 9, kind: input, shape index: {}]
  %s10 = inlined_call_operand.vmem [shape: f32[1,128], index: 10, kind: input, shape index: {}]
  %s11 = inlined_call_operand.vmem [shape: bf16[128,32], index: 11, kind: input, shape index: {}]
  %s12 = inlined_call_operand.vmem [shape: f32[1,32], index: 12, kind: input, shape index: {}]
  %s13 = inlined_call_operand.vmem [shape: f32[1,32], index: 13, kind: input, shape index: {}]
  %s14 = inlined_call_operand.vmem [shape: f32[1,32], index: 14, kind: input, shape index: {}]
  %s15 = inlined_call_operand.vmem [shape: bf16[32,96], index: 15, kind: input, shape index: {}]
  %s16 = inlined_call_operand.vmem [shape: f32[1,96], index: 16, kind: input, shape index: {}]
  %s17 = inlined_call_operand.vmem [shape: bf16[32,32], index: 17, kind: input, shape index: {}]
  %s18 = inlined_call_operand.vmem [shape: f32[1,32], index: 18, kind: input, shape index: {}]
  %s19 = inlined_call_operand.vmem [shape: f32[1,32], index: 19, kind: input, shape index: {}]
  %s20 = inlined_call_operand.vmem [shape: f32[1,32], index: 20, kind: input, shape index: {}]
  %s21 = inlined_call_operand.vmem [shape: bf16[32,128], index: 21, kind: input, shape index: {}]
  %s22 = inlined_call_operand.vmem [shape: f32[1,128], index: 22, kind: input, shape index: {}]
  %s23 = inlined_call_operand.vmem [shape: bf16[128,32], index: 23, kind: input, shape index: {}]
  %s24 = inlined_call_operand.vmem [shape: f32[1,32], index: 24, kind: input, shape index: {}]
  %s25 = inlined_call_operand.vmem [shape: f32[1,32], index: 25, kind: input, shape index: {}]
  %s26 = inlined_call_operand.vmem [shape: f32[1,32], index: 26, kind: input, shape index: {}]
  %s27 = inlined_call_operand.vmem [shape: f32[16,32], index: 27, kind: output, shape index: {}]
  %s28 = sld [smem:[#allocation0]]
  $region118: #{movielens_forward.3} parent=0
    _
  %s30 = ssub.s32 1, %s28
  %s31 = scalar_select 0, %s30, %s28
  // Predicated region
  $region2: #{movielens_forward.3} parent=0 // pred_check
    _
  $region3: #{movielens_forward.3} parent=0 // pred_check_branch
    %33 = sbr.rel (0) target = $region5
  $region4: #{movielens_forward.3} parent=0 // pred_region
    _
  $region5: #{movielens_forward.3} parent=0 // pred_fallthru
    _
  // Predicated region
  $region6: #{movielens_forward.3} parent=0 // pred_check
    _
  $region7: #{movielens_forward.3} parent=0 // pred_check_branch
    %35 = sbr.rel (0) target = $region9
  $region8: #{movielens_forward.3} parent=0 // pred_region
    _
  $region9: #{movielens_forward.3} parent=0 // pred_fallthru
    _
  // Predicated region
  $region10: #{movielens_forward.3} parent=0 // pred_check
    _
  $region11: #{movielens_forward.3} parent=0 // pred_check_branch
    %37 = sbr.rel (0) target = $region13
  $region12: #{movielens_forward.3} parent=0 // pred_region
    _
  $region13: #{movielens_forward.3} parent=0 // pred_fallthru
    _
  // Predicated region
  $region14: #{movielens_forward.3} parent=0 // pred_check
    _
  $region15: #{movielens_forward.3} parent=0 // pred_check_branch
    %39 = sbr.rel (0) target = $region17
  $region16: #{movielens_forward.3} parent=0 // pred_region
    _
  $region17: #{movielens_forward.3} parent=0 // pred_fallthru
    _
  // Predicated region
  $region18: #{movielens_forward.3} parent=0 // pred_check
    _
  $region19: #{movielens_forward.3} parent=0 // pred_check_branch
    %41 = sbr.rel (0) target = $region21
  $region20: #{movielens_forward.3} parent=0 // pred_region
    _
  $region21: #{movielens_forward.3} parent=0 // pred_fallthru
    _
  // Predicated region
  $region22: #{movielens_forward.3} parent=0 // pred_check
    _
  $region23: #{movielens_forward.3} parent=0 // pred_check_branch
    %43 = sbr.rel (0) target = $region25
  $region24: #{movielens_forward.3} parent=0 // pred_region
    _
  $region25: #{movielens_forward.3} parent=0 // pred_fallthru
    _
  // Predicated region
  $region26: #{movielens_forward.3} parent=0 // pred_check
    _
  $region27: #{movielens_forward.3} parent=0 // pred_check_branch
    %45 = sbr.rel (0) target = $region29
  $region28: #{movielens_forward.3} parent=0 // pred_region
    _
  $region29: #{movielens_forward.3} parent=0 // pred_fallthru
    _
  // Predicated region
  $region30: #{movielens_forward.3} parent=0 // pred_check
    _
  $region31: #{movielens_forward.3} parent=0 // pred_check_branch
    %47 = sbr.rel (0) target = $region33
  $region32: #{movielens_forward.3} parent=0 // pred_region
    _
  $region33: #{movielens_forward.3} parent=0 // pred_fallthru
    _
  // Predicated region
  $region34: #{movielens_forward.3} parent=0 // pred_check
    _
  $region35: #{movielens_forward.3} parent=0 // pred_check_branch
    %49 = sbr.rel (0) target = $region37
  $region36: #{movielens_forward.3} parent=0 // pred_region
    _
  $region37: #{movielens_forward.3} parent=0 // pred_fallthru
    _
  // Predicated region
  $region38: #{movielens_forward.3} parent=0 // pred_check
    _
  $region39: #{movielens_forward.3} parent=0 // pred_check_branch
    %51 = sbr.rel (0) target = $region41
  $region40: #{movielens_forward.3} parent=0 // pred_region
    _
  $region41: #{movielens_forward.3} parent=0 // pred_fallthru
    _
  // Predicated region
  $region42: #{movielens_forward.3} parent=0 // pred_check
    _
  $region43: #{movielens_forward.3} parent=0 // pred_check_branch
    %53 = sbr.rel (0) target = $region45
  $region44: #{movielens_forward.3} parent=0 // pred_region
    _
  $region45: #{movielens_forward.3} parent=0 // pred_fallthru
    _
  // Predicated region
  $region46: #{movielens_forward.3} parent=0 // pred_check
    _
  $region47: #{movielens_forward.3} parent=0 // pred_check_branch
    %55 = sbr.rel (0) target = $region49
  $region48: #{movielens_forward.3} parent=0 // pred_region
    _
  $region49: #{movielens_forward.3} parent=0 // pred_fallthru
    _
  // Predicated region
  $region50: #{movielens_forward.3} parent=0 // pred_check
    _
  $region51: #{movielens_forward.3} parent=0 // pred_check_branch
    %57 = sbr.rel (0) target = $region53
  $region52: #{movielens_forward.3} parent=0 // pred_region
    _
  $region53: #{movielens_forward.3} parent=0 // pred_fallthru
    _
  // Predicated region
  $region54: #{movielens_forward.3} parent=0 // pred_check
    _
  $region55: #{movielens_forward.3} parent=0 // pred_check_branch
    %59 = sbr.rel (0) target = $region57
  $region56: #{movielens_forward.3} parent=0 // pred_region
    _
  $region57: #{movielens_forward.3} parent=0 // pred_fallthru
    _
  // Predicated region
  $region58: #{movielens_forward.3} parent=0 // pred_check
    _
  $region59: #{movielens_forward.3} parent=0 // pred_check_branch
    %61 = sbr.rel (0) target = $region61
  $region60: #{movielens_forward.3} parent=0 // pred_region
    _
  $region61: #{movielens_forward.3} parent=0 // pred_fallthru
    _
  // Predicated region
  $region62: #{movielens_forward.3} parent=0 // pred_check
    _
  $region63: #{movielens_forward.3} parent=0 // pred_check_branch
    %63 = sbr.rel (0) target = $region65
  $region64: #{movielens_forward.3} parent=0 // pred_region
    _
  $region65: #{movielens_forward.3} parent=0 // pred_fallthru
    _
  // Predicated region
  $region66: #{movielens_forward.3} parent=0 // pred_check
    _
  $region67: #{movielens_forward.3} parent=0 // pred_check_branch
    %65 = sbr.rel (0) target = $region69
  $region68: #{movielens_forward.3} parent=0 // pred_region
    _
  $region69: #{movielens_forward.3} parent=0 // pred_fallthru
    _
  // Predicated region
  $region70: #{movielens_forward.3} parent=0 // pred_check
    _
  $region71: #{movielens_forward.3} parent=0 // pred_check_branch
    %67 = sbr.rel (0) target = $region73
  $region72: #{movielens_forward.3} parent=0 // pred_region
    _
  $region73: #{movielens_forward.3} parent=0 // pred_fallthru
    _
  // Predicated region
  $region74: #{movielens_forward.3} parent=0 // pred_check
    _
  $region75: #{movielens_forward.3} parent=0 // pred_check_branch
    %69 = sbr.rel (0) target = $region77
  $region76: #{movielens_forward.3} parent=0 // pred_region
    _
  $region77: #{movielens_forward.3} parent=0 // pred_fallthru
    _
  // Predicated region
  $region78: #{movielens_forward.3} parent=0 // pred_check
    _
  $region79: #{movielens_forward.3} parent=0 // pred_check_branch
    %71 = sbr.rel (0) target = $region81
  $region80: #{movielens_forward.3} parent=0 // pred_region
    _
  $region81: #{movielens_forward.3} parent=0 // pred_fallthru
    _
  // Predicated region
  $region82: #{movielens_forward.3} parent=0 // pred_check
    _
  $region83: #{movielens_forward.3} parent=0 // pred_check_branch
    %73 = sbr.rel (0) target = $region85
  $region84: #{movielens_forward.3} parent=0 // pred_region
    _
  $region85: #{movielens_forward.3} parent=0 // pred_fallthru
    _
  // Predicated region
  $region86: #{movielens_forward.3} parent=0 // pred_check
    _
  $region87: #{movielens_forward.3} parent=0 // pred_check_branch
    %75 = sbr.rel (0) target = $region89
  $region88: #{movielens_forward.3} parent=0 // pred_region
    _
  $region89: #{movielens_forward.3} parent=0 // pred_fallthru
    _
  // Predicated region
  $region90: #{movielens_forward.3} parent=0 // pred_check
    _
  $region91: #{movielens_forward.3} parent=0 // pred_check_branch
    %77 = sbr.rel (0) target = $region93
  $region92: #{movielens_forward.3} parent=0 // pred_region
    _
  $region93: #{movielens_forward.3} parent=0 // pred_fallthru
    _
  // Predicated region
  $region94: #{movielens_forward.3} parent=0 // pred_check
    _
  $region95: #{movielens_forward.3} parent=0 // pred_check_branch
    %79 = sbr.rel (0) target = $region97
  $region96: #{movielens_forward.3} parent=0 // pred_region
    _
  $region97: #{movielens_forward.3} parent=0 // pred_fallthru
    _
  // Predicated region
  $region98: #{movielens_forward.3} parent=0 // pred_check
    _
  $region99: #{movielens_forward.3} parent=0 // pred_check_branch
    %81 = sbr.rel (0) target = $region101
  $region100: #{movielens_forward.3} parent=0 // pred_region
    _
  $region101: #{movielens_forward.3} parent=0 // pred_fallthru
    _
  // Predicated region
  $region102: #{movielens_forward.3} parent=0 // pred_check
    _
  $region103: #{movielens_forward.3} parent=0 // pred_check_branch
    %83 = sbr.rel (0) target = $region105
  $region104: #{movielens_forward.3} parent=0 // pred_region
    _
  $region105: #{movielens_forward.3} parent=0 // pred_fallthru
    _
  // Predicated region
  $region106: #{movielens_forward.3} parent=0 // pred_check
    _
  $region107: #{movielens_forward.3} parent=0 // pred_check_branch
    %85 = sbr.rel (0) target = $region109
  $region108: #{movielens_forward.3} parent=0 // pred_region
    _
  $region109: #{movielens_forward.3} parent=0 // pred_fallthru
    _
  %v87 = vld [vmem:[%s0] sm:$0xff]
  %v88 = vld [vmem:[%s0 + $0x8] sm:$0xff]
  %v89 = vlaneseq
  %v90 = vshrl.u32 %v89, 7
  %v91 = vlaneseq
  %v92 = vand.u32 %v91, 127
  %vm93 = vcmp.ge.s32.totalorder %v90, %v92
  %vm94 = vcmask 261120
  %v95 = vsel %vm94, %v87, 0.0
  %96 = vadd.xlane.f32.xlu0 %v95
  %v97 = vpop.xlane.xlu0 %96
  %v98 = vsel %vm94, %v88, 0.0
  %99 = vadd.xlane.f32.xlu0 %v98
  %v100 = vpop.xlane.xlu0 %99
  %v101 = vrcp.pop 32.0
  %v102 = vmul.f32 %v97, %v101
  %v103 = vmul.f32 %v100, %v101
  %v104 = vsub.f32 %v87, %v102
  %v105 = vsub.f32 %v88, %v103
  %v106 = vmul.f32 %v104, %v104
  %v107 = vmul.f32 %v105, %v105
  %v108 = vsel %vm94, %v106, 0.0
  %109 = vadd.xlane.f32.xlu0 %v108
  %v110 = vpop.xlane.xlu0 %109
  %v111 = vsel %vm94, %v107, 0.0
  %112 = vadd.xlane.f32.xlu0 %v111
  %v113 = vpop.xlane.xlu0 %112
  %v114 = vmul.f32 %v110, %v101
  %v115 = vmul.f32 %v113, %v101
  %v116 = vadd.f32 %v114, 1e-05
  %v117 = vadd.f32 %v115, 1e-05
  %v118 = vrsqrt.pop %v116
  %v119 = vrsqrt.pop %v117
  %v120 = vmul.f32 %v104, %v118
  %v121 = vmul.f32 %v105, %v119
  %v122 = vld [vmem:[%s1] sm:$0x1]
  %v124 = vlaneseq
  %v125 = vshrl.u32 %v124, 7
  %v126 = vsub.s32 0, %v125
  %v127 = vrot.slane %v122, %v126
  %v129 = vmul.f32 %v120, %v127
  %v130 = vmul.f32 %v121, %v127
  %v131 = vld [vmem:[%s2] sm:$0x1]
  %v133 = vlaneseq
  %v134 = vshrl.u32 %v133, 7
  %v135 = vsub.s32 0, %v134
  %v136 = vrot.slane %v131, %v135
  %v138 = vadd.f32 %v129, %v136
  %v139 = vadd.f32 %v130, %v136
  %v140 = vpack.c.bf16 %v139, %v138
  %v141 = vld [vmem:[%s3] sm:$0xf]
  %v142 = vld [vmem:[%s3 + $0x4] sm:$0xf]
  %v143 = vld [vmem:[%s3 + $0x8] sm:$0xf]
  %v144 = vld [vmem:[%s3 + $0xc] sm:$0xf]
  %v145 = vld [vmem:[%s4] sm:$0x1]
  %v147 = vlaneseq
  %v148 = vshrl.u32 %v147, 7
  %v149 = vsub.s32 0, %v148
  %v150 = vrot.slane %v145, %v149
  %v156 = vunpack.c.l.b16 %v141
  %v157 = vunpack.c.l.b16 %v142
  %v158 = vunpack.c.l.b16 %v143
  %v159 = vunpack.c.l.b16 %v144
  %v160 = vpack.c.b16 %v157, %v156
  %v161 = vpack.c.b16 %v159, %v158
  %v165 = vsel %vm94, %v140, 0
  %167 = vmatprep.subr.bf16.mxu0 0
  %168 = vmatpush1.bf16.msra.mxu0 %v160
  %169 = vmatprep.subr.bf16.mxu0 0
  %170 = vmatpush1.bf16.msra.mxu0 %v161
  %171 = vmatprep.subr.bf16.mxu0 0
  %172 = vmatpush1.bf16.msra.mxu0 0
  %173 = vmatprep.subr.bf16.mxu0 0
  %174 = vmatpush1.bf16.msra.mxu0 0
  %175 = vmatprep.subr.bf16.mxu0 0
  %176 = vmatpush1.bf16.msra.mxu0 0
  %177 = vmatprep.subr.bf16.mxu0 0
  %178 = vmatpush1.bf16.msra.mxu0 0
  %179 = vmatprep.subr.bf16.mxu0 0
  %180 = vmatpush1.bf16.msra.mxu0 0
  %181 = vmatprep.subr.bf16.mxu0 0
  %182 = vmatpush1.bf16.msra.mxu0 0
  %183 = vmatprep.subr.bf16.mxu0 0
  %184 = vmatpush1.bf16.msra.mxu0 0
  %185 = vmatprep.subr.bf16.mxu0 0
  %186 = vmatpush1.bf16.msra.mxu0 0
  %187 = vmatprep.subr.bf16.mxu0 0
  %188 = vmatpush1.bf16.msra.mxu0 0
  %189 = vmatprep.subr.bf16.mxu0 0
  %190 = vmatpush1.bf16.msra.mxu0 0
  %191 = vmatprep.subr.bf16.mxu0 0
  %192 = vmatpush1.bf16.msra.mxu0 0
  %193 = vmatprep.subr.bf16.mxu0 0
  %194 = vmatpush1.bf16.msra.mxu0 0
  %195 = vmatprep.subr.bf16.mxu0 0
  %196 = vmatpush1.bf16.msra.mxu0 0
  %197 = vmatprep.subr.bf16.mxu0 0
  %198 = vmatpush1.bf16.msra.mxu0 0
  %199 = vmatprep.mubr.bf16.mxu0 0
  %200 = vmatmul.mubr.bf16.gmra.mrb[0].mxu0 %v165
  %v201 = vpop.f32.mrb[0].mxu0
  %v202 = vadd.f32 %v150, %v201
  %v203 = vpop.f32.mrb[0].mxu0
  %v204 = vpop.f32.mrb[0].mxu0
  %v205 = vadd.f32 %v150, %v204
  %v206 = vpop.f32.mrb[0].mxu0
  %207 = vdwg.mxu0
  %v208 = vmul.f32 %v202, 0.25
  %v209 = vmul.f32 %v205, 0.25
  %v210 = vpack.c.bf16 %v209, %v208
  %v211 = vpack.c.bf16 %v205, %v202
  %213 = vrot.lane.b32.xlu0 %v211, 96
  %v214 = vpop.permute.xlu0 %213
  %vm215 = vcmask 130048
  %v217 = vsel %vm215, %v210, 0
  %v220 = vsel %vm215, %v214, 0
  %222 = vmatprep.subr.bf16.mxu0 0
  %223 = vmatpush1.bf16.xpose.msra.mxu0 %v220
  %224 = vmatprep.subr.bf16.mxu0 0
  %225 = vmatpush1.bf16.xpose.msra.mxu0 0
  %226 = vmatprep.subr.bf16.mxu0 0
  %227 = vmatpush1.bf16.xpose.msra.mxu0 0
  %228 = vmatprep.subr.bf16.mxu0 0
  %229 = vmatpush1.bf16.xpose.msra.mxu0 0
  %230 = vmatprep.subr.bf16.mxu0 0
  %231 = vmatpush1.bf16.xpose.msra.mxu0 0
  %232 = vmatprep.subr.bf16.mxu0 0
  %233 = vmatpush1.bf16.xpose.msra.mxu0 0
  %234 = vmatprep.subr.bf16.mxu0 0
  %235 = vmatpush1.bf16.xpose.msra.mxu0 0
  %236 = vmatprep.subr.bf16.mxu0 0
  %237 = vmatpush1.bf16.xpose.msra.mxu0 0
  %238 = vmatprep.subr.bf16.mxu0 0
  %239 = vmatpush1.bf16.xpose.msra.mxu0 0
  %240 = vmatprep.subr.bf16.mxu0 0
  %241 = vmatpush1.bf16.xpose.msra.mxu0 0
  %242 = vmatprep.subr.bf16.mxu0 0
  %243 = vmatpush1.bf16.xpose.msra.mxu0 0
  %244 = vmatprep.subr.bf16.mxu0 0
  %245 = vmatpush1.bf16.xpose.msra.mxu0 0
  %246 = vmatprep.subr.bf16.mxu0 0
  %247 = vmatpush1.bf16.xpose.msra.mxu0 0
  %248 = vmatprep.subr.bf16.mxu0 0
  %249 = vmatpush1.bf16.xpose.msra.mxu0 0
  %250 = vmatprep.subr.bf16.mxu0 0
  %251 = vmatpush1.bf16.xpose.msra.mxu0 0
  %252 = vmatprep.subr.bf16.mxu0 0
  %253 = vmatpush1.bf16.xpose.msra.mxu0 0
  %254 = vmatprep.mubr.bf16.mxu0 0
  %255 = vmatmul.mubr.bf16.gmra.mrb[0].mxu0 %v217
  %v256 = vpop.f32.mrb[0].mxu0
  %v257 = vadd.f32 0.0, %v256
  %v258 = vpop.f32.mrb[0].mxu0
  %v259 = vpop.f32.mrb[0].mxu0
  %v260 = vpop.f32.mrb[0].mxu0
  %261 = vdwg.mxu0
  %v262 = vsel %vm93, %v257, -3.4028235e+38
  %vm263 = vcmask 64512
  %v264 = vsel %vm263, %v262, -inf
  %265 = vmax.xlane.f32.xlu0 %v264
  %v266 = vpop.xlane.xlu0 %265
  %v267 = vsub.f32 %v262, %v266
  %v268 = vmul.f32 %v267, 1.442695
  %v269 = vpow.pop %v268
  %v270 = vsel %vm263, %v269, 0.0
  %271 = vadd.xlane.f32.xlu0 %v270
  %v272 = vpop.xlane.xlu0 %271
  %v273 = vrcp.pop %v272
  %v274 = vmul.f32 %v269, %v273
  %v275 = vpack.c.bf16 %v274, %v274
  %276 = vrot.lane.b32.xlu0 %v211, 64
  %v277 = vpop.permute.xlu0 %276
  %v279 = vsel %vm263, %v275, 0
  %vm281 = vcmask 1043456
  %v283 = vsel %vm281, %v277, 0
  %285 = vmatprep.subr.bf16.mxu0 0
  %286 = vmatpush1.bf16.msra.mxu0 %v283
  %287 = vmatprep.subr.bf16.mxu0 0
  %288 = vmatpush1.bf16.msra.mxu0 0
  %289 = vmatprep.subr.bf16.mxu0 0
  %290 = vmatpush1.bf16.msra.mxu0 0
  %291 = vmatprep.subr.bf16.mxu0 0
  %292 = vmatpush1.bf16.msra.mxu0 0
  %293 = vmatprep.subr.bf16.mxu0 0
  %294 = vmatpush1.bf16.msra.mxu0 0
  %295 = vmatprep.subr.bf16.mxu0 0
  %296 = vmatpush1.bf16.msra.mxu0 0
  %297 = vmatprep.subr.bf16.mxu0 0
  %298 = vmatpush1.bf16.msra.mxu0 0
  %299 = vmatprep.subr.bf16.mxu0 0
  %300 = vmatpush1.bf16.msra.mxu0 0
  %301 = vmatprep.subr.bf16.mxu0 0
  %302 = vmatpush1.bf16.msra.mxu0 0
  %303 = vmatprep.subr.bf16.mxu0 0
  %304 = vmatpush1.bf16.msra.mxu0 0
  %305 = vmatprep.subr.bf16.mxu0 0
  %306 = vmatpush1.bf16.msra.mxu0 0
  %307 = vmatprep.subr.bf16.mxu0 0
  %308 = vmatpush1.bf16.msra.mxu0 0
  %309 = vmatprep.subr.bf16.mxu0 0
  %310 = vmatpush1.bf16.msra.mxu0 0
  %311 = vmatprep.subr.bf16.mxu0 0
  %312 = vmatpush1.bf16.msra.mxu0 0
  %313 = vmatprep.subr.bf16.mxu0 0
  %314 = vmatpush1.bf16.msra.mxu0 0
  %315 = vmatprep.subr.bf16.mxu0 0
  %316 = vmatpush1.bf16.msra.mxu0 0
  %317 = vmatprep.mubr.bf16.mxu0 0
  %318 = vmatmul.mubr.bf16.gmra.mrb[0].mxu0 %v279
  %v319 = vpop.f32.mrb[0].mxu0
  %v320 = vadd.f32 0.0, %v319
  %v321 = vpop.f32.mrb[0].mxu0
  %v322 = vpop.f32.mrb[0].mxu0
  %v323 = vpop.f32.mrb[0].mxu0
  %324 = vdwg.mxu0
  %326 = vrot.lane.b32.xlu0 %v210, 112
  %v327 = vpop.permute.xlu0 %326
  %328 = vrot.lane.b32.xlu0 %v211, 80
  %v329 = vpop.permute.xlu0 %328
  %v331 = vsel %vm215, %v327, 0
  %v334 = vsel %vm215, %v329, 0
  %336 = vmatprep.subr.bf16.mxu0 0
  %337 = vmatpush1.bf16.xpose.msra.mxu0 %v334
  %338 = vmatprep.subr.bf16.mxu0 0
  %339 = vmatpush1.bf16.xpose.msra.mxu0 0
  %340 = vmatprep.subr.bf16.mxu0 0
  %341 = vmatpush1.bf16.xpose.msra.mxu0 0
  %342 = vmatprep.subr.bf16.mxu0 0
  %343 = vmatpush1.bf16.xpose.msra.mxu0 0
  %344 = vmatprep.subr.bf16.mxu0 0
  %345 = vmatpush1.bf16.xpose.msra.mxu0 0
  %346 = vmatprep.subr.bf16.mxu0 0
  %347 = vmatpush1.bf16.xpose.msra.mxu0 0
  %348 = vmatprep.subr.bf16.mxu0 0
  %349 = vmatpush1.bf16.xpose.msra.mxu0 0
  %350 = vmatprep.subr.bf16.mxu0 0
  %351 = vmatpush1.bf16.xpose.msra.mxu0 0
  %352 = vmatprep.subr.bf16.mxu0 0
  %353 = vmatpush1.bf16.xpose.msra.mxu0 0
  %354 = vmatprep.subr.bf16.mxu0 0
  %355 = vmatpush1.bf16.xpose.msra.mxu0 0
  %356 = vmatprep.subr.bf16.mxu0 0
  %357 = vmatpush1.bf16.xpose.msra.mxu0 0
  %358 = vmatprep.subr.bf16.mxu0 0
  %359 = vmatpush1.bf16.xpose.msra.mxu0 0
  %360 = vmatprep.subr.bf16.mxu0 0
  %361 = vmatpush1.bf16.xpose.msra.mxu0 0
  %362 = vmatprep.subr.bf16.mxu0 0
  %363 = vmatpush1.bf16.xpose.msra.mxu0 0
  %364 = vmatprep.subr.bf16.mxu0 0
  %365 = vmatpush1.bf16.xpose.msra.mxu0 0
  %366 = vmatprep.subr.bf16.mxu0 0
  %367 = vmatpush1.bf16.xpose.msra.mxu0 0
  %368 = vmatprep.mubr.bf16.mxu0 0
  %369 = vmatmul.mubr.bf16.gmra.mrb[0].mxu0 %v331
  %v370 = vpop.f32.mrb[0].mxu0
  %v371 = vadd.f32 0.0, %v370
  %v372 = vpop.f32.mrb[0].mxu0
  %v373 = vpop.f32.mrb[0].mxu0
  %v374 = vpop.f32.mrb[0].mxu0
  %375 = vdwg.mxu0
  %v376 = vsel %vm93, %v371, -3.4028235e+38
  %v377 = vsel %vm263, %v376, -inf
  %378 = vmax.xlane.f32.xlu0 %v377
  %v379 = vpop.xlane.xlu0 %378
  %v380 = vsub.f32 %v376, %v379
  %v381 = vmul.f32 %v380, 1.442695
  %v382 = vpow.pop %v381
  %v383 = vsel %vm263, %v382, 0.0
  %384 = vadd.xlane.f32.xlu0 %v383
  %v385 = vpop.xlane.xlu0 %384
  %v386 = vrcp.pop %v385
  %v387 = vmul.f32 %v382, %v386
  %v388 = vpack.c.bf16 %v387, %v387
  %389 = vrot.lane.b32.xlu0 %v211, 48
  %v390 = vpop.permute.xlu0 %389
  %v392 = vsel %vm263, %v388, 0
  %v395 = vsel %vm281, %v390, 0
  %397 = vmatprep.subr.bf16.mxu0 0
  %398 = vmatpush1.bf16.msra.mxu0 %v395
  %399 = vmatprep.subr.bf16.mxu0 0
  %400 = vmatpush1.bf16.msra.mxu0 0
  %401 = vmatprep.subr.bf16.mxu0 0
  %402 = vmatpush1.bf16.msra.mxu0 0
  %403 = vmatprep.subr.bf16.mxu0 0
  %404 = vmatpush1.bf16.msra.mxu0 0
  %405 = vmatprep.subr.bf16.mxu0 0
  %406 = vmatpush1.bf16.msra.mxu0 0
  %407 = vmatprep.subr.bf16.mxu0 0
  %408 = vmatpush1.bf16.msra.mxu0 0
  %409 = vmatprep.subr.bf16.mxu0 0
  %410 = vmatpush1.bf16.msra.mxu0 0
  %411 = vmatprep.subr.bf16.mxu0 0
  %412 = vmatpush1.bf16.msra.mxu0 0
  %413 = vmatprep.subr.bf16.mxu0 0
  %414 = vmatpush1.bf16.msra.mxu0 0
  %415 = vmatprep.subr.bf16.mxu0 0
  %416 = vmatpush1.bf16.msra.mxu0 0
  %417 = vmatprep.subr.bf16.mxu0 0
  %418 = vmatpush1.bf16.msra.mxu0 0
  %419 = vmatprep.subr.bf16.mxu0 0
  %420 = vmatpush1.bf16.msra.mxu0 0
  %421 = vmatprep.subr.bf16.mxu0 0
  %422 = vmatpush1.bf16.msra.mxu0 0
  %423 = vmatprep.subr.bf16.mxu0 0
  %424 = vmatpush1.bf16.msra.mxu0 0
  %425 = vmatprep.subr.bf16.mxu0 0
  %426 = vmatpush1.bf16.msra.mxu0 0
  %427 = vmatprep.subr.bf16.mxu0 0
  %428 = vmatpush1.bf16.msra.mxu0 0
  %429 = vmatprep.mubr.bf16.mxu0 0
  %430 = vmatmul.mubr.bf16.gmra.mrb[0].mxu0 %v392
  %v431 = vpop.f32.mrb[0].mxu0
  %v432 = vadd.f32 0.0, %v431
  %v433 = vpop.f32.mrb[0].mxu0
  %v434 = vpop.f32.mrb[0].mxu0
  %v435 = vpop.f32.mrb[0].mxu0
  %436 = vdwg.mxu0
  %438 = vrot.lane.b32.xlu0 %v432, 16
  %v439 = vpop.permute.xlu0 %438
  %v441 = vsel %vm215, %v320, %v439
  %v442 = vrot.slane %v210, 4
  %v443 = vrot.slane %v211, 4
  %444 = vrot.lane.b32.xlu0 %v443, 96
  %v445 = vpop.permute.xlu0 %444
  %v447 = vsel %vm215, %v442, 0
  %v450 = vsel %vm215, %v445, 0
  %452 = vmatprep.subr.bf16.mxu0 0
  %453 = vmatpush1.bf16.xpose.msra.mxu0 %v450
  %454 = vmatprep.subr.bf16.mxu0 0
  %455 = vmatpush1.bf16.xpose.msra.mxu0 0
  %456 = vmatprep.subr.bf16.mxu0 0
  %457 = vmatpush1.bf16.xpose.msra.mxu0 0
  %458 = vmatprep.subr.bf16.mxu0 0
  %459 = vmatpush1.bf16.xpose.msra.mxu0 0
  %460 = vmatprep.subr.bf16.mxu0 0
  %461 = vmatpush1.bf16.xpose.msra.mxu0 0
  %462 = vmatprep.subr.bf16.mxu0 0
  %463 = vmatpush1.bf16.xpose.msra.mxu0 0
  %464 = vmatprep.subr.bf16.mxu0 0
  %465 = vmatpush1.bf16.xpose.msra.mxu0 0
  %466 = vmatprep.subr.bf16.mxu0 0
  %467 = vmatpush1.bf16.xpose.msra.mxu0 0
  %468 = vmatprep.subr.bf16.mxu0 0
  %469 = vmatpush1.bf16.xpose.msra.mxu0 0
  %470 = vmatprep.subr.bf16.mxu0 0
  %471 = vmatpush1.bf16.xpose.msra.mxu0 0
  %472 = vmatprep.subr.bf16.mxu0 0
  %473 = vmatpush1.bf16.xpose.msra.mxu0 0
  %474 = vmatprep.subr.bf16.mxu0 0
  %475 = vmatpush1.bf16.xpose.msra.mxu0 0
  %476 = vmatprep.subr.bf16.mxu0 0
  %477 = vmatpush1.bf16.xpose.msra.mxu0 0
  %478 = vmatprep.subr.bf16.mxu0 0
  %479 = vmatpush1.bf16.xpose.msra.mxu0 0
  %480 = vmatprep.subr.bf16.mxu0 0
  %481 = vmatpush1.bf16.xpose.msra.mxu0 0
  %482 = vmatprep.subr.bf16.mxu0 0
  %483 = vmatpush1.bf16.xpose.msra.mxu0 0
  %484 = vmatprep.mubr.bf16.mxu0 0
  %485 = vmatmul.mubr.bf16.gmra.mrb[0].mxu0 %v447
  %v486 = vpop.f32.mrb[0].mxu0
  %v487 = vadd.f32 0.0, %v486
  %v488 = vpop.f32.mrb[0].mxu0
  %v489 = vpop.f32.mrb[0].mxu0
  %v490 = vpop.f32.mrb[0].mxu0
  %491 = vdwg.mxu0
  %v492 = vsel %vm93, %v487, -3.4028235e+38
  %v493 = vsel %vm263, %v492, -inf
  %494 = vmax.xlane.f32.xlu0 %v493
  %v495 = vpop.xlane.xlu0 %494
  %v496 = vsub.f32 %v492, %v495
  %v497 = vmul.f32 %v496, 1.442695
  %v498 = vpow.pop %v497
  %v499 = vsel %vm263, %v498, 0.0
  %500 = vadd.xlane.f32.xlu0 %v499
  %v501 = vpop.xlane.xlu0 %500
  %v502 = vrcp.pop %v501
  %v503 = vmul.f32 %v498, %v502
  %v504 = vpack.c.bf16 %v503, %v503
  %505 = vrot.lane.b32.xlu0 %v443, 64
  %v506 = vpop.permute.xlu0 %505
  %v508 = vsel %vm263, %v504, 0
  %v511 = vsel %vm281, %v506, 0
  %513 = vmatprep.subr.bf16.mxu0 0
  %514 = vmatpush1.bf16.msra.mxu0 %v511
  %515 = vmatprep.subr.bf16.mxu0 0
  %516 = vmatpush1.bf16.msra.mxu0 0
  %517 = vmatprep.subr.bf16.mxu0 0
  %518 = vmatpush1.bf16.msra.mxu0 0
  %519 = vmatprep.subr.bf16.mxu0 0
  %520 = vmatpush1.bf16.msra.mxu0 0
  %521 = vmatprep.subr.bf16.mxu0 0
  %522 = vmatpush1.bf16.msra.mxu0 0
  %523 = vmatprep.subr.bf16.mxu0 0
  %524 = vmatpush1.bf16.msra.mxu0 0
  %525 = vmatprep.subr.bf16.mxu0 0
  %526 = vmatpush1.bf16.msra.mxu0 0
  %527 = vmatprep.subr.bf16.mxu0 0
  %528 = vmatpush1.bf16.msra.mxu0 0
  %529 = vmatprep.subr.bf16.mxu0 0
  %530 = vmatpush1.bf16.msra.mxu0 0
  %531 = vmatprep.subr.bf16.mxu0 0
  %532 = vmatpush1.bf16.msra.mxu0 0
  %533 = vmatprep.subr.bf16.mxu0 0
  %534 = vmatpush1.bf16.msra.mxu0 0
  %535 = vmatprep.subr.bf16.mxu0 0
  %536 = vmatpush1.bf16.msra.mxu0 0
  %537 = vmatprep.subr.bf16.mxu0 0
  %538 = vmatpush1.bf16.msra.mxu0 0
  %539 = vmatprep.subr.bf16.mxu0 0
  %540 = vmatpush1.bf16.msra.mxu0 0
  %541 = vmatprep.subr.bf16.mxu0 0
  %542 = vmatpush1.bf16.msra.mxu0 0
  %543 = vmatprep.subr.bf16.mxu0 0
  %544 = vmatpush1.bf16.msra.mxu0 0
  %545 = vmatprep.mubr.bf16.mxu0 0
  %546 = vmatmul.mubr.bf16.gmra.mrb[0].mxu0 %v508
  %v547 = vpop.f32.mrb[0].mxu0
  %v548 = vadd.f32 0.0, %v547
  %v549 = vpop.f32.mrb[0].mxu0
  %v550 = vpop.f32.mrb[0].mxu0
  %v551 = vpop.f32.mrb[0].mxu0
  %552 = vdwg.mxu0
  %553 = vrot.lane.b32.xlu0 %v442, 112
  %v554 = vpop.permute.xlu0 %553
  %555 = vrot.lane.b32.xlu0 %v443, 80
  %v556 = vpop.permute.xlu0 %555
  %v558 = vsel %vm215, %v554, 0
  %v561 = vsel %vm215, %v556, 0
  %563 = vmatprep.subr.bf16.mxu0 0
  %564 = vmatpush1.bf16.xpose.msra.mxu0 %v561
  %565 = vmatprep.subr.bf16.mxu0 0
  %566 = vmatpush1.bf16.xpose.msra.mxu0 0
  %567 = vmatprep.subr.bf16.mxu0 0
  %568 = vmatpush1.bf16.xpose.msra.mxu0 0
  %569 = vmatprep.subr.bf16.mxu0 0
  %570 = vmatpush1.bf16.xpose.msra.mxu0 0
  %571 = vmatprep.subr.bf16.mxu0 0
  %572 = vmatpush1.bf16.xpose.msra.mxu0 0
  %573 = vmatprep.subr.bf16.mxu0 0
  %574 = vmatpush1.bf16.xpose.msra.mxu0 0
  %575 = vmatprep.subr.bf16.mxu0 0
  %576 = vmatpush1.bf16.xpose.msra.mxu0 0
  %577 = vmatprep.subr.bf16.mxu0 0
  %578 = vmatpush1.bf16.xpose.msra.mxu0 0
  %579 = vmatprep.subr.bf16.mxu0 0
  %580 = vmatpush1.bf16.xpose.msra.mxu0 0
  %581 = vmatprep.subr.bf16.mxu0 0
  %582 = vmatpush1.bf16.xpose.msra.mxu0 0
  %583 = vmatprep.subr.bf16.mxu0 0
  %584 = vmatpush1.bf16.xpose.msra.mxu0 0
  %585 = vmatprep.subr.bf16.mxu0 0
  %586 = vmatpush1.bf16.xpose.msra.mxu0 0
  %587 = vmatprep.subr.bf16.mxu0 0
  %588 = vmatpush1.bf16.xpose.msra.mxu0 0
  %589 = vmatprep.subr.bf16.mxu0 0
  %590 = vmatpush1.bf16.xpose.msra.mxu0 0
  %591 = vmatprep.subr.bf16.mxu0 0
  %592 = vmatpush1.bf16.xpose.msra.mxu0 0
  %593 = vmatprep.subr.bf16.mxu0 0
  %594 = vmatpush1.bf16.xpose.msra.mxu0 0
  %595 = vmatprep.mubr.bf16.mxu0 0
  %596 = vmatmul.mubr.bf16.gmra.mrb[0].mxu0 %v558
  %v597 = vpop.f32.mrb[0].mxu0
  %v598 = vadd.f32 0.0, %v597
  %v599 = vpop.f32.mrb[0].mxu0
  %v600 = vpop.f32.mrb[0].mxu0
  %v601 = vpop.f32.mrb[0].mxu0
  %602 = vdwg.mxu0
  %v603 = vsel %vm93, %v598, -3.4028235e+38
  %v604 = vsel %vm263, %v603, -inf
  %605 = vmax.xlane.f32.xlu0 %v604
  %v606 = vpop.xlane.xlu0 %605
  %v607 = vsub.f32 %v603, %v606
  %v608 = vmul.f32 %v607, 1.442695
  %v609 = vpow.pop %v608
  %v610 = vsel %vm263, %v609, 0.0
  %611 = vadd.xlane.f32.xlu0 %v610
  %v612 = vpop.xlane.xlu0 %611
  %v613 = vrcp.pop %v612
  %v614 = vmul.f32 %v609, %v613
  %v615 = vpack.c.bf16 %v614, %v614
  %616 = vrot.lane.b32.xlu0 %v443, 48
  %v617 = vpop.permute.xlu0 %616
  %v619 = vsel %vm263, %v615, 0
  %v622 = vsel %vm281, %v617, 0
  %624 = vmatprep.subr.bf16.mxu0 0
  %625 = vmatpush1.bf16.msra.mxu0 %v622
  %626 = vmatprep.subr.bf16.mxu0 0
  %627 = vmatpush1.bf16.msra.mxu0 0
  %628 = vmatprep.subr.bf16.mxu0 0
  %629 = vmatpush1.bf16.msra.mxu0 0
  %630 = vmatprep.subr.bf16.mxu0 0
  %631 = vmatpush1.bf16.msra.mxu0 0
  %632 = vmatprep.subr.bf16.mxu0 0
  %633 = vmatpush1.bf16.msra.mxu0 0
  %634 = vmatprep.subr.bf16.mxu0 0
  %635 = vmatpush1.bf16.msra.mxu0 0
  %636 = vmatprep.subr.bf16.mxu0 0
  %637 = vmatpush1.bf16.msra.mxu0 0
  %638 = vmatprep.subr.bf16.mxu0 0
  %639 = vmatpush1.bf16.msra.mxu0 0
  %640 = vmatprep.subr.bf16.mxu0 0
  %641 = vmatpush1.bf16.msra.mxu0 0
  %642 = vmatprep.subr.bf16.mxu0 0
  %643 = vmatpush1.bf16.msra.mxu0 0
  %644 = vmatprep.subr.bf16.mxu0 0
  %645 = vmatpush1.bf16.msra.mxu0 0
  %646 = vmatprep.subr.bf16.mxu0 0
  %647 = vmatpush1.bf16.msra.mxu0 0
  %648 = vmatprep.subr.bf16.mxu0 0
  %649 = vmatpush1.bf16.msra.mxu0 0
  %650 = vmatprep.subr.bf16.mxu0 0
  %651 = vmatpush1.bf16.msra.mxu0 0
  %652 = vmatprep.subr.bf16.mxu0 0
  %653 = vmatpush1.bf16.msra.mxu0 0
  %654 = vmatprep.subr.bf16.mxu0 0
  %655 = vmatpush1.bf16.msra.mxu0 0
  %656 = vmatprep.mubr.bf16.mxu0 0
  %657 = vmatmul.mubr.bf16.gmra.mrb[0].mxu0 %v619
  %v658 = vpop.f32.mrb[0].mxu0
  %v659 = vadd.f32 0.0, %v658
  %v660 = vpop.f32.mrb[0].mxu0
  %v661 = vpop.f32.mrb[0].mxu0
  %v662 = vpop.f32.mrb[0].mxu0
  %663 = vdwg.mxu0
  %665 = vrot.lane.b32.xlu0 %v659, 16
  %v666 = vpop.permute.xlu0 %665
  %v668 = vsel %vm215, %v548, %v666
  %v669 = vpack.c.bf16 %v668, %v441
  %v670 = vld [vmem:[%s5] sm:$0xf]
  %v671 = vld [vmem:[%s5 + $0x4] sm:$0xf]
  %v672 = vld [vmem:[%s5 + $0x8] sm:$0xf]
  %v673 = vld [vmem:[%s5 + $0xc] sm:$0xf]
  %v674 = vld [vmem:[%s6] sm:$0x1]
  %v676 = vlaneseq
  %v677 = vshrl.u32 %v676, 7
  %v678 = vsub.s32 0, %v677
  %v679 = vrot.slane %v674, %v678
  %v685 = vunpack.c.l.b16 %v670
  %v686 = vunpack.c.l.b16 %v671
  %v687 = vunpack.c.l.b16 %v672
  %v688 = vunpack.c.l.b16 %v673
  %v689 = vpack.c.b16 %v686, %v685
  %v690 = vpack.c.b16 %v688, %v687
  %v694 = vsel %vm94, %v669, 0
  %696 = vmatprep.subr.bf16.mxu0 0
  %697 = vmatpush1.bf16.msra.mxu0 %v689
  %698 = vmatprep.subr.bf16.mxu0 0
  %699 = vmatpush1.bf16.msra.mxu0 %v690
  %700 = vmatprep.subr.bf16.mxu0 0
  %701 = vmatpush1.bf16.msra.mxu0 0
  %702 = vmatprep.subr.bf16.mxu0 0
  %703 = vmatpush1.bf16.msra.mxu0 0
  %704 = vmatprep.subr.bf16.mxu0 0
  %705 = vmatpush1.bf16.msra.mxu0 0
  %706 = vmatprep.subr.bf16.mxu0 0
  %707 = vmatpush1.bf16.msra.mxu0 0
  %708 = vmatprep.subr.bf16.mxu0 0
  %709 = vmatpush1.bf16.msra.mxu0 0
  %710 = vmatprep.subr.bf16.mxu0 0
  %711 = vmatpush1.bf16.msra.mxu0 0
  %712 = vmatprep.subr.bf16.mxu0 0
  %713 = vmatpush1.bf16.msra.mxu0 0
  %714 = vmatprep.subr.bf16.mxu0 0
  %715 = vmatpush1.bf16.msra.mxu0 0
  %716 = vmatprep.subr.bf16.mxu0 0
  %717 = vmatpush1.bf16.msra.mxu0 0
  %718 = vmatprep.subr.bf16.mxu0 0
  %719 = vmatpush1.bf16.msra.mxu0 0
  %720 = vmatprep.subr.bf16.mxu0 0
  %721 = vmatpush1.bf16.msra.mxu0 0
  %722 = vmatprep.subr.bf16.mxu0 0
  %723 = vmatpush1.bf16.msra.mxu0 0
  %724 = vmatprep.subr.bf16.mxu0 0
  %725 = vmatpush1.bf16.msra.mxu0 0
  %726 = vmatprep.subr.bf16.mxu0 0
  %727 = vmatpush1.bf16.msra.mxu0 0
  %728 = vmatprep.mubr.bf16.mxu0 0
  %729 = vmatmul.mubr.bf16.gmra.mrb[0].mxu0 %v694
  %v730 = vpop.f32.mrb[0].mxu0
  %v731 = vadd.f32 %v679, %v730
  %v732 = vpop.f32.mrb[0].mxu0
  %v733 = vpop.f32.mrb[0].mxu0
  %v734 = vadd.f32 %v679, %v733
  %v735 = vpop.f32.mrb[0].mxu0
  %736 = vdwg.mxu0
  %v737 = vadd.f32 %v87, %v731
  %v738 = vadd.f32 %v88, %v734
  %v739 = vsel %vm94, %v737, 0.0
  %740 = vadd.xlane.f32.xlu0 %v739
  %v741 = vpop.xlane.xlu0 %740
  %v742 = vsel %vm94, %v738, 0.0
  %743 = vadd.xlane.f32.xlu0 %v742
  %v744 = vpop.xlane.xlu0 %743
  %v745 = vmul.f32 %v741, %v101
  %v746 = vmul.f32 %v744, %v101
  %v747 = vsub.f32 %v737, %v745
  %v748 = vsub.f32 %v738, %v746
  %v749 = vmul.f32 %v747, %v747
  %v750 = vmul.f32 %v748, %v748
  %v751 = vsel %vm94, %v749, 0.0
  %752 = vadd.xlane.f32.xlu0 %v751
  %v753 = vpop.xlane.xlu0 %752
  %v754 = vsel %vm94, %v750, 0.0
  %755 = vadd.xlane.f32.xlu0 %v754
  %v756 = vpop.xlane.xlu0 %755
  %v757 = vmul.f32 %v753, %v101
  %v758 = vmul.f32 %v756, %v101
  %v759 = vadd.f32 %v757, 1e-05
  %v760 = vadd.f32 %v758, 1e-05
  %v761 = vrsqrt.pop %v759
  %v762 = vrsqrt.pop %v760
  %v763 = vmul.f32 %v747, %v761
  %v764 = vmul.f32 %v748, %v762
  %v765 = vld [vmem:[%s7] sm:$0x1]
  %v767 = vlaneseq
  %v768 = vshrl.u32 %v767, 7
  %v769 = vsub.s32 0, %v768
  %v770 = vrot.slane %v765, %v769
  %v772 = vmul.f32 %v763, %v770
  %v773 = vmul.f32 %v764, %v770
  %v774 = vld [vmem:[%s8] sm:$0x1]
  %v776 = vlaneseq
  %v777 = vshrl.u32 %v776, 7
  %v778 = vsub.s32 0, %v777
  %v779 = vrot.slane %v774, %v778
  %v781 = vadd.f32 %v772, %v779
  %v782 = vadd.f32 %v773, %v779
  %v783 = vpack.c.bf16 %v782, %v781
  %v784 = vld [vmem:[%s9] sm:$0xf]
  %v785 = vld [vmem:[%s9 + $0x4] sm:$0xf]
  %v786 = vld [vmem:[%s9 + $0x8] sm:$0xf]
  %v787 = vld [vmem:[%s9 + $0xc] sm:$0xf]
  %v788 = vld [vmem:[%s10] sm:$0x1]
  %v790 = vlaneseq
  %v791 = vshrl.u32 %v790, 7
  %v792 = vsub.s32 0, %v791
  %v793 = vrot.slane %v788, %v792
  %v799 = vunpack.c.l.b16 %v784
  %v800 = vunpack.c.l.b16 %v785
  %v801 = vunpack.c.l.b16 %v786
  %v802 = vunpack.c.l.b16 %v787
  %v803 = vpack.c.b16 %v800, %v799
  %v804 = vpack.c.b16 %v802, %v801
  %v808 = vsel %vm94, %v783, 0
  %810 = vmatprep.subr.bf16.mxu0 0
  %811 = vmatpush1.bf16.msra.mxu0 %v803
  %812 = vmatprep.subr.bf16.mxu0 0
  %813 = vmatpush1.bf16.msra.mxu0 %v804
  %814 = vmatprep.subr.bf16.mxu0 0
  %815 = vmatpush1.bf16.msra.mxu0 0
  %816 = vmatprep.subr.bf16.mxu0 0
  %817 = vmatpush1.bf16.msra.mxu0 0
  %818 = vmatprep.subr.bf16.mxu0 0
  %819 = vmatpush1.bf16.msra.mxu0 0
  %820 = vmatprep.subr.bf16.mxu0 0
  %821 = vmatpush1.bf16.msra.mxu0 0
  %822 = vmatprep.subr.bf16.mxu0 0
  %823 = vmatpush1.bf16.msra.mxu0 0
  %824 = vmatprep.subr.bf16.mxu0 0
  %825 = vmatpush1.bf16.msra.mxu0 0
  %826 = vmatprep.subr.bf16.mxu0 0
  %827 = vmatpush1.bf16.msra.mxu0 0
  %828 = vmatprep.subr.bf16.mxu0 0
  %829 = vmatpush1.bf16.msra.mxu0 0
  %830 = vmatprep.subr.bf16.mxu0 0
  %831 = vmatpush1.bf16.msra.mxu0 0
  %832 = vmatprep.subr.bf16.mxu0 0
  %833 = vmatpush1.bf16.msra.mxu0 0
  %834 = vmatprep.subr.bf16.mxu0 0
  %835 = vmatpush1.bf16.msra.mxu0 0
  %836 = vmatprep.subr.bf16.mxu0 0
  %837 = vmatpush1.bf16.msra.mxu0 0
  %838 = vmatprep.subr.bf16.mxu0 0
  %839 = vmatpush1.bf16.msra.mxu0 0
  %840 = vmatprep.subr.bf16.mxu0 0
  %841 = vmatpush1.bf16.msra.mxu0 0
  %842 = vmatprep.mubr.bf16.mxu0 0
  %843 = vmatmul.mubr.bf16.gmra.mrb[0].mxu0 %v808
  %v844 = vpop.f32.mrb[0].mxu0
  %v845 = vadd.f32 %v793, %v844
  %v846 = vpop.f32.mrb[0].mxu0
  %v847 = vpop.f32.mrb[0].mxu0
  %v848 = vadd.f32 %v793, %v847
  %v849 = vpop.f32.mrb[0].mxu0
  %850 = vdwg.mxu0
  %v851 = vmul.f32 %v845, %v845
  %v852 = vmul.f32 %v848, %v848
  %v853 = vmul.f32 %v845, %v851
  %v854 = vmul.f32 %v848, %v852
  %v855 = vmul.f32 %v853, 0.044715
  %v856 = vmul.f32 %v854, 0.044715
  %v857 = vadd.f32 %v845, %v855
  %v858 = vadd.f32 %v848, %v856
  %v859 = vmul.f32 %v857, 0.7978846
  %v860 = vmul.f32 %v858, 0.7978846
  %v861 = vtanh.pop %v859
  %v862 = vtanh.pop %v860
  %v863 = vadd.f32 %v861, 1.0
  %v864 = vadd.f32 %v862, 1.0
  %v865 = vmul.f32 %v863, 0.5
  %v866 = vmul.f32 %v864, 0.5
  %v867 = vmul.f32 %v845, %v865
  %v868 = vmul.f32 %v848, %v866
  %v869 = vpack.c.bf16 %v868, %v867
  %v870 = vld [vmem:[%s11] sm:$0xf]
  %v871 = vld [vmem:[%s11 + $0x4] sm:$0xf]
  %v872 = vld [vmem:[%s11 + $0x8] sm:$0xf]
  %v873 = vld [vmem:[%s11 + $0xc] sm:$0xf]
  %v874 = vld [vmem:[%s11 + $0x10] sm:$0xf]
  %v875 = vld [vmem:[%s11 + $0x14] sm:$0xf]
  %v876 = vld [vmem:[%s11 + $0x18] sm:$0xf]
  %v877 = vld [vmem:[%s11 + $0x1c] sm:$0xf]
  %v878 = vld [vmem:[%s11 + $0x20] sm:$0xf]
  %v879 = vld [vmem:[%s11 + $0x24] sm:$0xf]
  %v880 = vld [vmem:[%s11 + $0x28] sm:$0xf]
  %v881 = vld [vmem:[%s11 + $0x2c] sm:$0xf]
  %v882 = vld [vmem:[%s11 + $0x30] sm:$0xf]
  %v883 = vld [vmem:[%s11 + $0x34] sm:$0xf]
  %v884 = vld [vmem:[%s11 + $0x38] sm:$0xf]
  %v885 = vld [vmem:[%s11 + $0x3c] sm:$0xf]
  %v886 = vld [vmem:[%s12] sm:$0x1]
  %v888 = vlaneseq
  %v889 = vshrl.u32 %v888, 7
  %v890 = vsub.s32 0, %v889
  %v891 = vrot.slane %v886, %v890
  %v909 = vunpack.c.l.b16 %v870
  %v910 = vunpack.c.l.b16 %v871
  %v911 = vunpack.c.l.b16 %v872
  %v912 = vunpack.c.l.b16 %v873
  %v913 = vunpack.c.l.b16 %v874
  %v914 = vunpack.c.l.b16 %v875
  %v915 = vunpack.c.l.b16 %v876
  %v916 = vunpack.c.l.b16 %v877
  %v917 = vunpack.c.l.b16 %v878
  %v918 = vunpack.c.l.b16 %v879
  %v919 = vunpack.c.l.b16 %v880
  %v920 = vunpack.c.l.b16 %v881
  %v921 = vunpack.c.l.b16 %v882
  %v922 = vunpack.c.l.b16 %v883
  %v923 = vunpack.c.l.b16 %v884
  %v924 = vunpack.c.l.b16 %v885
  %v925 = vpack.c.b16 %v910, %v909
  %v926 = vpack.c.b16 %v912, %v911
  %v927 = vpack.c.b16 %v914, %v913
  %v928 = vpack.c.b16 %v916, %v915
  %v929 = vpack.c.b16 %v918, %v917
  %v930 = vpack.c.b16 %v920, %v919
  %v931 = vpack.c.b16 %v922, %v921
  %v932 = vpack.c.b16 %v924, %v923
  %941 = vmatprep.subr.bf16.mxu0 0
  %942 = vmatpush1.bf16.msra.mxu0 %v925
  %943 = vmatprep.subr.bf16.mxu0 0
  %944 = vmatpush1.bf16.msra.mxu0 %v926
  %945 = vmatprep.subr.bf16.mxu0 0
  %946 = vmatpush1.bf16.msra.mxu0 %v927
  %947 = vmatprep.subr.bf16.mxu0 0
  %948 = vmatpush1.bf16.msra.mxu0 %v928
  %949 = vmatprep.subr.bf16.mxu0 0
  %950 = vmatpush1.bf16.msra.mxu0 %v929
  %951 = vmatprep.subr.bf16.mxu0 0
  %952 = vmatpush1.bf16.msra.mxu0 %v930
  %953 = vmatprep.subr.bf16.mxu0 0
  %954 = vmatpush1.bf16.msra.mxu0 %v931
  %955 = vmatprep.subr.bf16.mxu0 0
  %956 = vmatpush1.bf16.msra.mxu0 %v932
  %957 = vmatprep.subr.bf16.mxu0 0
  %958 = vmatpush1.bf16.msra.mxu0 0
  %959 = vmatprep.subr.bf16.mxu0 0
  %960 = vmatpush1.bf16.msra.mxu0 0
  %961 = vmatprep.subr.bf16.mxu0 0
  %962 = vmatpush1.bf16.msra.mxu0 0
  %963 = vmatprep.subr.bf16.mxu0 0
  %964 = vmatpush1.bf16.msra.mxu0 0
  %965 = vmatprep.subr.bf16.mxu0 0
  %966 = vmatpush1.bf16.msra.mxu0 0
  %967 = vmatprep.subr.bf16.mxu0 0
  %968 = vmatpush1.bf16.msra.mxu0 0
  %969 = vmatprep.subr.bf16.mxu0 0
  %970 = vmatpush1.bf16.msra.mxu0 0
  %971 = vmatprep.subr.bf16.mxu0 0
  %972 = vmatpush1.bf16.msra.mxu0 0
  %973 = vmatprep.mubr.bf16.mxu0 0
  %974 = vmatmul.mubr.bf16.gmra.mrb[0].mxu0 %v869
  %v975 = vpop.f32.mrb[0].mxu0
  %v976 = vadd.f32 %v891, %v975
  %v977 = vpop.f32.mrb[0].mxu0
  %v978 = vpop.f32.mrb[0].mxu0
  %v979 = vadd.f32 %v891, %v978
  %v980 = vpop.f32.mrb[0].mxu0
  %981 = vdwg.mxu0
  %v982 = vadd.f32 %v737, %v976
  %v983 = vadd.f32 %v738, %v979
  %v984 = vsel %vm94, %v982, 0.0
  %985 = vadd.xlane.f32.xlu0 %v984
  %v986 = vpop.xlane.xlu0 %985
  %v987 = vsel %vm94, %v983, 0.0
  %988 = vadd.xlane.f32.xlu0 %v987
  %v989 = vpop.xlane.xlu0 %988
  %v990 = vmul.f32 %v986, %v101
  %v991 = vmul.f32 %v989, %v101
  %v992 = vsub.f32 %v982, %v990
  %v993 = vsub.f32 %v983, %v991
  %v994 = vmul.f32 %v992, %v992
  %v995 = vmul.f32 %v993, %v993
  %v996 = vsel %vm94, %v994, 0.0
  %997 = vadd.xlane.f32.xlu0 %v996
  %v998 = vpop.xlane.xlu0 %997
  %v999 = vsel %vm94, %v995, 0.0
  %1000 = vadd.xlane.f32.xlu0 %v999
  %v1001 = vpop.xlane.xlu0 %1000
  %v1002 = vmul.f32 %v998, %v101
  %v1003 = vmul.f32 %v1001, %v101
  %v1004 = vadd.f32 %v1002, 1e-05
  %v1005 = vadd.f32 %v1003, 1e-05
  %v1006 = vrsqrt.pop %v1004
  %v1007 = vrsqrt.pop %v1005
  %v1008 = vmul.f32 %v992, %v1006
  %v1009 = vmul.f32 %v993, %v1007
  %v1010 = vld [vmem:[%s13] sm:$0x1]
  %v1012 = vlaneseq
  %v1013 = vshrl.u32 %v1012, 7
  %v1014 = vsub.s32 0, %v1013
  %v1015 = vrot.slane %v1010, %v1014
  %v1017 = vmul.f32 %v1008, %v1015
  %v1018 = vmul.f32 %v1009, %v1015
  %v1019 = vld [vmem:[%s14] sm:$0x1]
  %v1021 = vlaneseq
  %v1022 = vshrl.u32 %v1021, 7
  %v1023 = vsub.s32 0, %v1022
  %v1024 = vrot.slane %v1019, %v1023
  %v1026 = vadd.f32 %v1017, %v1024
  %v1027 = vadd.f32 %v1018, %v1024
  %v1028 = vpack.c.bf16 %v1027, %v1026
  %v1029 = vld [vmem:[%s15] sm:$0xf]
  %v1030 = vld [vmem:[%s15 + $0x4] sm:$0xf]
  %v1031 = vld [vmem:[%s15 + $0x8] sm:$0xf]
  %v1032 = vld [vmem:[%s15 + $0xc] sm:$0xf]
  %v1033 = vld [vmem:[%s16] sm:$0x1]
  %v1035 = vlaneseq
  %v1036 = vshrl.u32 %v1035, 7
  %v1037 = vsub.s32 0, %v1036
  %v1038 = vrot.slane %v1033, %v1037
  %v1044 = vunpack.c.l.b16 %v1029
  %v1045 = vunpack.c.l.b16 %v1030
  %v1046 = vunpack.c.l.b16 %v1031
  %v1047 = vunpack.c.l.b16 %v1032
  %v1048 = vpack.c.b16 %v1045, %v1044
  %v1049 = vpack.c.b16 %v1047, %v1046
  %v1053 = vsel %vm94, %v1028, 0
  %1055 = vmatprep.subr.bf16.mxu0 0
  %1056 = vmatpush1.bf16.msra.mxu0 %v1048
  %1057 = vmatprep.subr.bf16.mxu0 0
  %1058 = vmatpush1.bf16.msra.mxu0 %v1049
  %1059 = vmatprep.subr.bf16.mxu0 0
  %1060 = vmatpush1.bf16.msra.mxu0 0
  %1061 = vmatprep.subr.bf16.mxu0 0
  %1062 = vmatpush1.bf16.msra.mxu0 0
  %1063 = vmatprep.subr.bf16.mxu0 0
  %1064 = vmatpush1.bf16.msra.mxu0 0
  %1065 = vmatprep.subr.bf16.mxu0 0
  %1066 = vmatpush1.bf16.msra.mxu0 0
  %1067 = vmatprep.subr.bf16.mxu0 0
  %1068 = vmatpush1.bf16.msra.mxu0 0
  %1069 = vmatprep.subr.bf16.mxu0 0
  %1070 = vmatpush1.bf16.msra.mxu0 0
  %1071 = vmatprep.subr.bf16.mxu0 0
  %1072 = vmatpush1.bf16.msra.mxu0 0
  %1073 = vmatprep.subr.bf16.mxu0 0
  %1074 = vmatpush1.bf16.msra.mxu0 0
  %1075 = vmatprep.subr.bf16.mxu0 0
  %1076 = vmatpush1.bf16.msra.mxu0 0
  %1077 = vmatprep.subr.bf16.mxu0 0
  %1078 = vmatpush1.bf16.msra.mxu0 0
  %1079 = vmatprep.subr.bf16.mxu0 0
  %1080 = vmatpush1.bf16.msra.mxu0 0
  %1081 = vmatprep.subr.bf16.mxu0 0
  %1082 = vmatpush1.bf16.msra.mxu0 0
  %1083 = vmatprep.subr.bf16.mxu0 0
  %1084 = vmatpush1.bf16.msra.mxu0 0
  %1085 = vmatprep.subr.bf16.mxu0 0
  %1086 = vmatpush1.bf16.msra.mxu0 0
  %1087 = vmatprep.mubr.bf16.mxu0 0
  %1088 = vmatmul.mubr.bf16.gmra.mrb[0].mxu0 %v1053
  %v1089 = vpop.f32.mrb[0].mxu0
  %v1090 = vadd.f32 %v1038, %v1089
  %v1091 = vpop.f32.mrb[0].mxu0
  %v1092 = vpop.f32.mrb[0].mxu0
  %v1093 = vadd.f32 %v1038, %v1092
  %v1094 = vpop.f32.mrb[0].mxu0
  %1095 = vdwg.mxu0
  %v1096 = vmul.f32 %v1090, 0.25
  %v1097 = vmul.f32 %v1093, 0.25
  %v1098 = vpack.c.bf16 %v1097, %v1096
  %v1099 = vpack.c.bf16 %v1093, %v1090
  %1101 = vrot.lane.b32.xlu0 %v1099, 96
  %v1102 = vpop.permute.xlu0 %1101
  %v1104 = vsel %vm215, %v1098, 0
  %v1107 = vsel %vm215, %v1102, 0
  %1109 = vmatprep.subr.bf16.mxu0 0
  %1110 = vmatpush1.bf16.xpose.msra.mxu0 %v1107
  %1111 = vmatprep.subr.bf16.mxu0 0
  %1112 = vmatpush1.bf16.xpose.msra.mxu0 0
  %1113 = vmatprep.subr.bf16.mxu0 0
  %1114 = vmatpush1.bf16.xpose.msra.mxu0 0
  %1115 = vmatprep.subr.bf16.mxu0 0
  %1116 = vmatpush1.bf16.xpose.msra.mxu0 0
  %1117 = vmatprep.subr.bf16.mxu0 0
  %1118 = vmatpush1.bf16.xpose.msra.mxu0 0
  %1119 = vmatprep.subr.bf16.mxu0 0
  %1120 = vmatpush1.bf16.xpose.msra.mxu0 0
  %1121 = vmatprep.subr.bf16.mxu0 0
  %1122 = vmatpush1.bf16.xpose.msra.mxu0 0
  %1123 = vmatprep.subr.bf16.mxu0 0
  %1124 = vmatpush1.bf16.xpose.msra.mxu0 0
  %1125 = vmatprep.subr.bf16.mxu0 0
  %1126 = vmatpush1.bf16.xpose.msra.mxu0 0
  %1127 = vmatprep.subr.bf16.mxu0 0
  %1128 = vmatpush1.bf16.xpose.msra.mxu0 0
  %1129 = vmatprep.subr.bf16.mxu0 0
  %1130 = vmatpush1.bf16.xpose.msra.mxu0 0
  %1131 = vmatprep.subr.bf16.mxu0 0
  %1132 = vmatpush1.bf16.xpose.msra.mxu0 0
  %1133 = vmatprep.subr.bf16.mxu0 0
  %1134 = vmatpush1.bf16.xpose.msra.mxu0 0
  %1135 = vmatprep.subr.bf16.mxu0 0
  %1136 = vmatpush1.bf16.xpose.msra.mxu0 0
  %1137 = vmatprep.subr.bf16.mxu0 0
  %1138 = vmatpush1.bf16.xpose.msra.mxu0 0
  %1139 = vmatprep.subr.bf16.mxu0 0
  %1140 = vmatpush1.bf16.xpose.msra.mxu0 0
  %1141 = vmatprep.mubr.bf16.mxu0 0
  %1142 = vmatmul.mubr.bf16.gmra.mrb[0].mxu0 %v1104
  %v1143 = vpop.f32.mrb[0].mxu0
  %v1144 = vadd.f32 0.0, %v1143
  %v1145 = vpop.f32.mrb[0].mxu0
  %v1146 = vpop.f32.mrb[0].mxu0
  %v1147 = vpop.f32.mrb[0].mxu0
  %1148 = vdwg.mxu0
  %v1149 = vsel %vm93, %v1144, -3.4028235e+38
  %v1150 = vsel %vm263, %v1149, -inf
  %1151 = vmax.xlane.f32.xlu0 %v1150
  %v1152 = vpop.xlane.xlu0 %1151
  %v1153 = vsub.f32 %v1149, %v1152
  %v1154 = vmul.f32 %v1153, 1.442695
  %v1155 = vpow.pop %v1154
  %v1156 = vsel %vm263, %v1155, 0.0
  %1157 = vadd.xlane.f32.xlu0 %v1156
  %v1158 = vpop.xlane.xlu0 %1157
  %v1159 = vrcp.pop %v1158
  %v1160 = vmul.f32 %v1155, %v1159
  %v1161 = vpack.c.bf16 %v1160, %v1160
  %1162 = vrot.lane.b32.xlu0 %v1099, 64
  %v1163 = vpop.permute.xlu0 %1162
  %v1165 = vsel %vm263, %v1161, 0
  %v1168 = vsel %vm281, %v1163, 0
  %1170 = vmatprep.subr.bf16.mxu0 0
  %1171 = vmatpush1.bf16.msra.mxu0 %v1168
  %1172 = vmatprep.subr.bf16.mxu0 0
  %1173 = vmatpush1.bf16.msra.mxu0 0
  %1174 = vmatprep.subr.bf16.mxu0 0
  %1175 = vmatpush1.bf16.msra.mxu0 0
  %1176 = vmatprep.subr.bf16.mxu0 0
  %1177 = vmatpush1.bf16.msra.mxu0 0
  %1178 = vmatprep.subr.bf16.mxu0 0
  %1179 = vmatpush1.bf16.msra.mxu0 0
  %1180 = vmatprep.subr.bf16.mxu0 0
  %1181 = vmatpush1.bf16.msra.mxu0 0
  %1182 = vmatprep.subr.bf16.mxu0 0
  %1183 = vmatpush1.bf16.msra.mxu0 0
  %1184 = vmatprep.subr.bf16.mxu0 0
  %1185 = vmatpush1.bf16.msra.mxu0 0
  %1186 = vmatprep.subr.bf16.mxu0 0
  %1187 = vmatpush1.bf16.msra.mxu0 0
  %1188 = vmatprep.subr.bf16.mxu0 0
  %1189 = vmatpush1.bf16.msra.mxu0 0
  %1190 = vmatprep.subr.bf16.mxu0 0
  %1191 = vmatpush1.bf16.msra.mxu0 0
  %1192 = vmatprep.subr.bf16.mxu0 0
  %1193 = vmatpush1.bf16.msra.mxu0 0
  %1194 = vmatprep.subr.bf16.mxu0 0
  %1195 = vmatpush1.bf16.msra.mxu0 0
  %1196 = vmatprep.subr.bf16.mxu0 0
  %1197 = vmatpush1.bf16.msra.mxu0 0
  %1198 = vmatprep.subr.bf16.mxu0 0
  %1199 = vmatpush1.bf16.msra.mxu0 0
  %1200 = vmatprep.subr.bf16.mxu0 0
  %1201 = vmatpush1.bf16.msra.mxu0 0
  %1202 = vmatprep.mubr.bf16.mxu0 0
  %1203 = vmatmul.mubr.bf16.gmra.mrb[0].mxu0 %v1165
  %v1204 = vpop.f32.mrb[0].mxu0
  %v1205 = vadd.f32 0.0, %v1204
  %v1206 = vpop.f32.mrb[0].mxu0
  %v1207 = vpop.f32.mrb[0].mxu0
  %v1208 = vpop.f32.mrb[0].mxu0
  %1209 = vdwg.mxu0
  %1211 = vrot.lane.b32.xlu0 %v1098, 112
  %v1212 = vpop.permute.xlu0 %1211
  %1213 = vrot.lane.b32.xlu0 %v1099, 80
  %v1214 = vpop.permute.xlu0 %1213
  %v1216 = vsel %vm215, %v1212, 0
  %v1219 = vsel %vm215, %v1214, 0
  %1221 = vmatprep.subr.bf16.mxu0 0
  %1222 = vmatpush1.bf16.xpose.msra.mxu0 %v1219
  %1223 = vmatprep.subr.bf16.mxu0 0
  %1224 = vmatpush1.bf16.xpose.msra.mxu0 0
  %1225 = vmatprep.subr.bf16.mxu0 0
  %1226 = vmatpush1.bf16.xpose.msra.mxu0 0
  %1227 = vmatprep.subr.bf16.mxu0 0
  %1228 = vmatpush1.bf16.xpose.msra.mxu0 0
  %1229 = vmatprep.subr.bf16.mxu0 0
  %1230 = vmatpush1.bf16.xpose.msra.mxu0 0
  %1231 = vmatprep.subr.bf16.mxu0 0
  %1232 = vmatpush1.bf16.xpose.msra.mxu0 0
  %1233 = vmatprep.subr.bf16.mxu0 0
  %1234 = vmatpush1.bf16.xpose.msra.mxu0 0
  %1235 = vmatprep.subr.bf16.mxu0 0
  %1236 = vmatpush1.bf16.xpose.msra.mxu0 0
  %1237 = vmatprep.subr.bf16.mxu0 0
  %1238 = vmatpush1.bf16.xpose.msra.mxu0 0
  %1239 = vmatprep.subr.bf16.mxu0 0
  %1240 = vmatpush1.bf16.xpose.msra.mxu0 0
  %1241 = vmatprep.subr.bf16.mxu0 0
  %1242 = vmatpush1.bf16.xpose.msra.mxu0 0
  %1243 = vmatprep.subr.bf16.mxu0 0
  %1244 = vmatpush1.bf16.xpose.msra.mxu0 0
  %1245 = vmatprep.subr.bf16.mxu0 0
  %1246 = vmatpush1.bf16.xpose.msra.mxu0 0
  %1247 = vmatprep.subr.bf16.mxu0 0
  %1248 = vmatpush1.bf16.xpose.msra.mxu0 0
  %1249 = vmatprep.subr.bf16.mxu0 0
  %1250 = vmatpush1.bf16.xpose.msra.mxu0 0
  %1251 = vmatprep.subr.bf16.mxu0 0
  %1252 = vmatpush1.bf16.xpose.msra.mxu0 0
  %1253 = vmatprep.mubr.bf16.mxu0 0
  %1254 = vmatmul.mubr.bf16.gmra.mrb[0].mxu0 %v1216
  %v1255 = vpop.f32.mrb[0].mxu0
  %v1256 = vadd.f32 0.0, %v1255
  %v1257 = vpop.f32.mrb[0].mxu0
  %v1258 = vpop.f32.mrb[0].mxu0
  %v1259 = vpop.f32.mrb[0].mxu0
  %1260 = vdwg.mxu0
  %v1261 = vsel %vm93, %v1256, -3.4028235e+38
  %v1262 = vsel %vm263, %v1261, -inf
  %1263 = vmax.xlane.f32.xlu0 %v1262
  %v1264 = vpop.xlane.xlu0 %1263
  %v1265 = vsub.f32 %v1261, %v1264
  %v1266 = vmul.f32 %v1265, 1.442695
  %v1267 = vpow.pop %v1266
  %v1268 = vsel %vm263, %v1267, 0.0
  %1269 = vadd.xlane.f32.xlu0 %v1268
  %v1270 = vpop.xlane.xlu0 %1269
  %v1271 = vrcp.pop %v1270
  %v1272 = vmul.f32 %v1267, %v1271
  %v1273 = vpack.c.bf16 %v1272, %v1272
  %1274 = vrot.lane.b32.xlu0 %v1099, 48
  %v1275 = vpop.permute.xlu0 %1274
  %v1277 = vsel %vm263, %v1273, 0
  %v1280 = vsel %vm281, %v1275, 0
  %1282 = vmatprep.subr.bf16.mxu0 0
  %1283 = vmatpush1.bf16.msra.mxu0 %v1280
  %1284 = vmatprep.subr.bf16.mxu0 0
  %1285 = vmatpush1.bf16.msra.mxu0 0
  %1286 = vmatprep.subr.bf16.mxu0 0
  %1287 = vmatpush1.bf16.msra.mxu0 0
  %1288 = vmatprep.subr.bf16.mxu0 0
  %1289 = vmatpush1.bf16.msra.mxu0 0
  %1290 = vmatprep.subr.bf16.mxu0 0
  %1291 = vmatpush1.bf16.msra.mxu0 0
  %1292 = vmatprep.subr.bf16.mxu0 0
  %1293 = vmatpush1.bf16.msra.mxu0 0
  %1294 = vmatprep.subr.bf16.mxu0 0
  %1295 = vmatpush1.bf16.msra.mxu0 0
  %1296 = vmatprep.subr.bf16.mxu0 0
  %1297 = vmatpush1.bf16.msra.mxu0 0
  %1298 = vmatprep.subr.bf16.mxu0 0
  %1299 = vmatpush1.bf16.msra.mxu0 0
  %1300 = vmatprep.subr.bf16.mxu0 0
  %1301 = vmatpush1.bf16.msra.mxu0 0
  %1302 = vmatprep.subr.bf16.mxu0 0
  %1303 = vmatpush1.bf16.msra.mxu0 0
  %1304 = vmatprep.subr.bf16.mxu0 0
  %1305 = vmatpush1.bf16.msra.mxu0 0
  %1306 = vmatprep.subr.bf16.mxu0 0
  %1307 = vmatpush1.bf16.msra.mxu0 0
  %1308 = vmatprep.subr.bf16.mxu0 0
  %1309 = vmatpush1.bf16.msra.mxu0 0
  %1310 = vmatprep.subr.bf16.mxu0 0
  %1311 = vmatpush1.bf16.msra.mxu0 0
  %1312 = vmatprep.subr.bf16.mxu0 0
  %1313 = vmatpush1.bf16.msra.mxu0 0
  %1314 = vmatprep.mubr.bf16.mxu0 0
  %1315 = vmatmul.mubr.bf16.gmra.mrb[0].mxu0 %v1277
  %v1316 = vpop.f32.mrb[0].mxu0
  %v1317 = vadd.f32 0.0, %v1316
  %v1318 = vpop.f32.mrb[0].mxu0
  %v1319 = vpop.f32.mrb[0].mxu0
  %v1320 = vpop.f32.mrb[0].mxu0
  %1321 = vdwg.mxu0
  %1323 = vrot.lane.b32.xlu0 %v1317, 16
  %v1324 = vpop.permute.xlu0 %1323
  %v1326 = vsel %vm215, %v1205, %v1324
  %v1327 = vrot.slane %v1098, 4
  %v1328 = vrot.slane %v1099, 4
  %1329 = vrot.lane.b32.xlu0 %v1328, 96
  %v1330 = vpop.permute.xlu0 %1329
  %v1332 = vsel %vm215, %v1327, 0
  %v1335 = vsel %vm215, %v1330, 0
  %1337 = vmatprep.subr.bf16.mxu0 0
  %1338 = vmatpush1.bf16.xpose.msra.mxu0 %v1335
  %1339 = vmatprep.subr.bf16.mxu0 0
  %1340 = vmatpush1.bf16.xpose.msra.mxu0 0
  %1341 = vmatprep.subr.bf16.mxu0 0
  %1342 = vmatpush1.bf16.xpose.msra.mxu0 0
  %1343 = vmatprep.subr.bf16.mxu0 0
  %1344 = vmatpush1.bf16.xpose.msra.mxu0 0
  %1345 = vmatprep.subr.bf16.mxu0 0
  %1346 = vmatpush1.bf16.xpose.msra.mxu0 0
  %1347 = vmatprep.subr.bf16.mxu0 0
  %1348 = vmatpush1.bf16.xpose.msra.mxu0 0
  %1349 = vmatprep.subr.bf16.mxu0 0
  %1350 = vmatpush1.bf16.xpose.msra.mxu0 0
  %1351 = vmatprep.subr.bf16.mxu0 0
  %1352 = vmatpush1.bf16.xpose.msra.mxu0 0
  %1353 = vmatprep.subr.bf16.mxu0 0
  %1354 = vmatpush1.bf16.xpose.msra.mxu0 0
  %1355 = vmatprep.subr.bf16.mxu0 0
  %1356 = vmatpush1.bf16.xpose.msra.mxu0 0
  %1357 = vmatprep.subr.bf16.mxu0 0
  %1358 = vmatpush1.bf16.xpose.msra.mxu0 0
  %1359 = vmatprep.subr.bf16.mxu0 0
  %1360 = vmatpush1.bf16.xpose.msra.mxu0 0
  %1361 = vmatprep.subr.bf16.mxu0 0
  %1362 = vmatpush1.bf16.xpose.msra.mxu0 0
  %1363 = vmatprep.subr.bf16.mxu0 0
  %1364 = vmatpush1.bf16.xpose.msra.mxu0 0
  %1365 = vmatprep.subr.bf16.mxu0 0
  %1366 = vmatpush1.bf16.xpose.msra.mxu0 0
  %1367 = vmatprep.subr.bf16.mxu0 0
  %1368 = vmatpush1.bf16.xpose.msra.mxu0 0
  %1369 = vmatprep.mubr.bf16.mxu0 0
  %1370 = vmatmul.mubr.bf16.gmra.mrb[0].mxu0 %v1332
  %v1371 = vpop.f32.mrb[0].mxu0
  %v1372 = vadd.f32 0.0, %v1371
  %v1373 = vpop.f32.mrb[0].mxu0
  %v1374 = vpop.f32.mrb[0].mxu0
  %v1375 = vpop.f32.mrb[0].mxu0
  %1376 = vdwg.mxu0
  %v1377 = vsel %vm93, %v1372, -3.4028235e+38
  %v1378 = vsel %vm263, %v1377, -inf
  %1379 = vmax.xlane.f32.xlu0 %v1378
  %v1380 = vpop.xlane.xlu0 %1379
  %v1381 = vsub.f32 %v1377, %v1380
  %v1382 = vmul.f32 %v1381, 1.442695
  %v1383 = vpow.pop %v1382
  %v1384 = vsel %vm263, %v1383, 0.0
  %1385 = vadd.xlane.f32.xlu0 %v1384
  %v1386 = vpop.xlane.xlu0 %1385
  %v1387 = vrcp.pop %v1386
  %v1388 = vmul.f32 %v1383, %v1387
  %v1389 = vpack.c.bf16 %v1388, %v1388
  %1390 = vrot.lane.b32.xlu0 %v1328, 64
  %v1391 = vpop.permute.xlu0 %1390
  %v1393 = vsel %vm263, %v1389, 0
  %v1396 = vsel %vm281, %v1391, 0
  %1398 = vmatprep.subr.bf16.mxu0 0
  %1399 = vmatpush1.bf16.msra.mxu0 %v1396
  %1400 = vmatprep.subr.bf16.mxu0 0
  %1401 = vmatpush1.bf16.msra.mxu0 0
  %1402 = vmatprep.subr.bf16.mxu0 0
  %1403 = vmatpush1.bf16.msra.mxu0 0
  %1404 = vmatprep.subr.bf16.mxu0 0
  %1405 = vmatpush1.bf16.msra.mxu0 0
  %1406 = vmatprep.subr.bf16.mxu0 0
  %1407 = vmatpush1.bf16.msra.mxu0 0
  %1408 = vmatprep.subr.bf16.mxu0 0
  %1409 = vmatpush1.bf16.msra.mxu0 0
  %1410 = vmatprep.subr.bf16.mxu0 0
  %1411 = vmatpush1.bf16.msra.mxu0 0
  %1412 = vmatprep.subr.bf16.mxu0 0
  %1413 = vmatpush1.bf16.msra.mxu0 0
  %1414 = vmatprep.subr.bf16.mxu0 0
  %1415 = vmatpush1.bf16.msra.mxu0 0
  %1416 = vmatprep.subr.bf16.mxu0 0
  %1417 = vmatpush1.bf16.msra.mxu0 0
  %1418 = vmatprep.subr.bf16.mxu0 0
  %1419 = vmatpush1.bf16.msra.mxu0 0
  %1420 = vmatprep.subr.bf16.mxu0 0
  %1421 = vmatpush1.bf16.msra.mxu0 0
  %1422 = vmatprep.subr.bf16.mxu0 0
  %1423 = vmatpush1.bf16.msra.mxu0 0
  %1424 = vmatprep.subr.bf16.mxu0 0
  %1425 = vmatpush1.bf16.msra.mxu0 0
  %1426 = vmatprep.subr.bf16.mxu0 0
  %1427 = vmatpush1.bf16.msra.mxu0 0
  %1428 = vmatprep.subr.bf16.mxu0 0
  %1429 = vmatpush1.bf16.msra.mxu0 0
  %1430 = vmatprep.mubr.bf16.mxu0 0
  %1431 = vmatmul.mubr.bf16.gmra.mrb[0].mxu0 %v1393
  %v1432 = vpop.f32.mrb[0].mxu0
  %v1433 = vadd.f32 0.0, %v1432
  %v1434 = vpop.f32.mrb[0].mxu0
  %v1435 = vpop.f32.mrb[0].mxu0
  %v1436 = vpop.f32.mrb[0].mxu0
  %1437 = vdwg.mxu0
  %1438 = vrot.lane.b32.xlu0 %v1327, 112
  %v1439 = vpop.permute.xlu0 %1438
  %1440 = vrot.lane.b32.xlu0 %v1328, 80
  %v1441 = vpop.permute.xlu0 %1440
  %v1443 = vsel %vm215, %v1439, 0
  %v1446 = vsel %vm215, %v1441, 0
  %1448 = vmatprep.subr.bf16.mxu0 0
  %1449 = vmatpush1.bf16.xpose.msra.mxu0 %v1446
  %1450 = vmatprep.subr.bf16.mxu0 0
  %1451 = vmatpush1.bf16.xpose.msra.mxu0 0
  %1452 = vmatprep.subr.bf16.mxu0 0
  %1453 = vmatpush1.bf16.xpose.msra.mxu0 0
  %1454 = vmatprep.subr.bf16.mxu0 0
  %1455 = vmatpush1.bf16.xpose.msra.mxu0 0
  %1456 = vmatprep.subr.bf16.mxu0 0
  %1457 = vmatpush1.bf16.xpose.msra.mxu0 0
  %1458 = vmatprep.subr.bf16.mxu0 0
  %1459 = vmatpush1.bf16.xpose.msra.mxu0 0
  %1460 = vmatprep.subr.bf16.mxu0 0
  %1461 = vmatpush1.bf16.xpose.msra.mxu0 0
  %1462 = vmatprep.subr.bf16.mxu0 0
  %1463 = vmatpush1.bf16.xpose.msra.mxu0 0
  %1464 = vmatprep.subr.bf16.mxu0 0
  %1465 = vmatpush1.bf16.xpose.msra.mxu0 0
  %1466 = vmatprep.subr.bf16.mxu0 0
  %1467 = vmatpush1.bf16.xpose.msra.mxu0 0
  %1468 = vmatprep.subr.bf16.mxu0 0
  %1469 = vmatpush1.bf16.xpose.msra.mxu0 0
  %1470 = vmatprep.subr.bf16.mxu0 0
  %1471 = vmatpush1.bf16.xpose.msra.mxu0 0
  %1472 = vmatprep.subr.bf16.mxu0 0
  %1473 = vmatpush1.bf16.xpose.msra.mxu0 0
  %1474 = vmatprep.subr.bf16.mxu0 0
  %1475 = vmatpush1.bf16.xpose.msra.mxu0 0
  %1476 = vmatprep.subr.bf16.mxu0 0
  %1477 = vmatpush1.bf16.xpose.msra.mxu0 0
  %1478 = vmatprep.subr.bf16.mxu0 0
  %1479 = vmatpush1.bf16.xpose.msra.mxu0 0
  %1480 = vmatprep.mubr.bf16.mxu0 0
  %1481 = vmatmul.mubr.bf16.gmra.mrb[0].mxu0 %v1443
  %v1482 = vpop.f32.mrb[0].mxu0
  %v1483 = vadd.f32 0.0, %v1482
  %v1484 = vpop.f32.mrb[0].mxu0
  %v1485 = vpop.f32.mrb[0].mxu0
  %v1486 = vpop.f32.mrb[0].mxu0
  %1487 = vdwg.mxu0
  %v1488 = vsel %vm93, %v1483, -3.4028235e+38
  %v1489 = vsel %vm263, %v1488, -inf
  %1490 = vmax.xlane.f32.xlu0 %v1489
  %v1491 = vpop.xlane.xlu0 %1490
  %v1492 = vsub.f32 %v1488, %v1491
  %v1493 = vmul.f32 %v1492, 1.442695
  %v1494 = vpow.pop %v1493
  %v1495 = vsel %vm263, %v1494, 0.0
  %1496 = vadd.xlane.f32.xlu0 %v1495
  %v1497 = vpop.xlane.xlu0 %1496
  %v1498 = vrcp.pop %v1497
  %v1499 = vmul.f32 %v1494, %v1498
  %v1500 = vpack.c.bf16 %v1499, %v1499
  %1501 = vrot.lane.b32.xlu0 %v1328, 48
  %v1502 = vpop.permute.xlu0 %1501
  %v1504 = vsel %vm263, %v1500, 0
  %v1507 = vsel %vm281, %v1502, 0
  %1509 = vmatprep.subr.bf16.mxu0 0
  %1510 = vmatpush1.bf16.msra.mxu0 %v1507
  %1511 = vmatprep.subr.bf16.mxu0 0
  %1512 = vmatpush1.bf16.msra.mxu0 0
  %1513 = vmatprep.subr.bf16.mxu0 0
  %1514 = vmatpush1.bf16.msra.mxu0 0
  %1515 = vmatprep.subr.bf16.mxu0 0
  %1516 = vmatpush1.bf16.msra.mxu0 0
  %1517 = vmatprep.subr.bf16.mxu0 0
  %1518 = vmatpush1.bf16.msra.mxu0 0
  %1519 = vmatprep.subr.bf16.mxu0 0
  %1520 = vmatpush1.bf16.msra.mxu0 0
  %1521 = vmatprep.subr.bf16.mxu0 0
  %1522 = vmatpush1.bf16.msra.mxu0 0
  %1523 = vmatprep.subr.bf16.mxu0 0
  %1524 = vmatpush1.bf16.msra.mxu0 0
  %1525 = vmatprep.subr.bf16.mxu0 0
  %1526 = vmatpush1.bf16.msra.mxu0 0
  %1527 = vmatprep.subr.bf16.mxu0 0
  %1528 = vmatpush1.bf16.msra.mxu0 0
  %1529 = vmatprep.subr.bf16.mxu0 0
  %1530 = vmatpush1.bf16.msra.mxu0 0
  %1531 = vmatprep.subr.bf16.mxu0 0
  %1532 = vmatpush1.bf16.msra.mxu0 0
  %1533 = vmatprep.subr.bf16.mxu0 0
  %1534 = vmatpush1.bf16.msra.mxu0 0
  %1535 = vmatprep.subr.bf16.mxu0 0
  %1536 = vmatpush1.bf16.msra.mxu0 0
  %1537 = vmatprep.subr.bf16.mxu0 0
  %1538 = vmatpush1.bf16.msra.mxu0 0
  %1539 = vmatprep.subr.bf16.mxu0 0
  %1540 = vmatpush1.bf16.msra.mxu0 0
  %1541 = vmatprep.mubr.bf16.mxu0 0
  %1542 = vmatmul.mubr.bf16.gmra.mrb[0].mxu0 %v1504
  %v1543 = vpop.f32.mrb[0].mxu0
  %v1544 = vadd.f32 0.0, %v1543
  %v1545 = vpop.f32.mrb[0].mxu0
  %v1546 = vpop.f32.mrb[0].mxu0
  %v1547 = vpop.f32.mrb[0].mxu0
  %1548 = vdwg.mxu0
  %1550 = vrot.lane.b32.xlu0 %v1544, 16
  %v1551 = vpop.permute.xlu0 %1550
  %v1553 = vsel %vm215, %v1433, %v1551
  %v1554 = vpack.c.bf16 %v1553, %v1326
  %v1555 = vld [vmem:[%s17] sm:$0xf]
  %v1556 = vld [vmem:[%s17 + $0x4] sm:$0xf]
  %v1557 = vld [vmem:[%s17 + $0x8] sm:$0xf]
  %v1558 = vld [vmem:[%s17 + $0xc] sm:$0xf]
  %v1559 = vld [vmem:[%s18] sm:$0x1]
  %v1561 = vlaneseq
  %v1562 = vshrl.u32 %v1561, 7
  %v1563 = vsub.s32 0, %v1562
  %v1564 = vrot.slane %v1559, %v1563
  %v1570 = vunpack.c.l.b16 %v1555
  %v1571 = vunpack.c.l.b16 %v1556
  %v1572 = vunpack.c.l.b16 %v1557
  %v1573 = vunpack.c.l.b16 %v1558
  %v1574 = vpack.c.b16 %v1571, %v1570
  %v1575 = vpack.c.b16 %v1573, %v1572
  %v1579 = vsel %vm94, %v1554, 0
  %1581 = vmatprep.subr.bf16.mxu0 0
  %1582 = vmatpush1.bf16.msra.mxu0 %v1574
  %1583 = vmatprep.subr.bf16.mxu0 0
  %1584 = vmatpush1.bf16.msra.mxu0 %v1575
  %1585 = vmatprep.subr.bf16.mxu0 0
  %1586 = vmatpush1.bf16.msra.mxu0 0
  %1587 = vmatprep.subr.bf16.mxu0 0
  %1588 = vmatpush1.bf16.msra.mxu0 0
  %1589 = vmatprep.subr.bf16.mxu0 0
  %1590 = vmatpush1.bf16.msra.mxu0 0
  %1591 = vmatprep.subr.bf16.mxu0 0
  %1592 = vmatpush1.bf16.msra.mxu0 0
  %1593 = vmatprep.subr.bf16.mxu0 0
  %1594 = vmatpush1.bf16.msra.mxu0 0
  %1595 = vmatprep.subr.bf16.mxu0 0
  %1596 = vmatpush1.bf16.msra.mxu0 0
  %1597 = vmatprep.subr.bf16.mxu0 0
  %1598 = vmatpush1.bf16.msra.mxu0 0
  %1599 = vmatprep.subr.bf16.mxu0 0
  %1600 = vmatpush1.bf16.msra.mxu0 0
  %1601 = vmatprep.subr.bf16.mxu0 0
  %1602 = vmatpush1.bf16.msra.mxu0 0
  %1603 = vmatprep.subr.bf16.mxu0 0
  %1604 = vmatpush1.bf16.msra.mxu0 0
  %1605 = vmatprep.subr.bf16.mxu0 0
  %1606 = vmatpush1.bf16.msra.mxu0 0
  %1607 = vmatprep.subr.bf16.mxu0 0
  %1608 = vmatpush1.bf16.msra.mxu0 0
  %1609 = vmatprep.subr.bf16.mxu0 0
  %1610 = vmatpush1.bf16.msra.mxu0 0
  %1611 = vmatprep.subr.bf16.mxu0 0
  %1612 = vmatpush1.bf16.msra.mxu0 0
  %1613 = vmatprep.mubr.bf16.mxu0 0
  %1614 = vmatmul.mubr.bf16.gmra.mrb[0].mxu0 %v1579
  %v1615 = vpop.f32.mrb[0].mxu0
  %v1616 = vadd.f32 %v1564, %v1615
  %v1617 = vpop.f32.mrb[0].mxu0
  %v1618 = vpop.f32.mrb[0].mxu0
  %v1619 = vadd.f32 %v1564, %v1618
  %v1620 = vpop.f32.mrb[0].mxu0
  %1621 = vdwg.mxu0
  %v1622 = vadd.f32 %v982, %v1616
  %v1623 = vadd.f32 %v983, %v1619
  %v1624 = vsel %vm94, %v1622, 0.0
  %1625 = vadd.xlane.f32.xlu0 %v1624
  %v1626 = vpop.xlane.xlu0 %1625
  %v1627 = vsel %vm94, %v1623, 0.0
  %1628 = vadd.xlane.f32.xlu0 %v1627
  %v1629 = vpop.xlane.xlu0 %1628
  %v1630 = vmul.f32 %v1626, %v101
  %v1631 = vmul.f32 %v1629, %v101
  %v1632 = vsub.f32 %v1622, %v1630
  %v1633 = vsub.f32 %v1623, %v1631
  %v1634 = vmul.f32 %v1632, %v1632
  %v1635 = vmul.f32 %v1633, %v1633
  %v1636 = vsel %vm94, %v1634, 0.0
  %1637 = vadd.xlane.f32.xlu0 %v1636
  %v1638 = vpop.xlane.xlu0 %1637
  %v1639 = vsel %vm94, %v1635, 0.0
  %1640 = vadd.xlane.f32.xlu0 %v1639
  %v1641 = vpop.xlane.xlu0 %1640
  %v1642 = vmul.f32 %v1638, %v101
  %v1643 = vmul.f32 %v1641, %v101
  %v1644 = vadd.f32 %v1642, 1e-05
  %v1645 = vadd.f32 %v1643, 1e-05
  %v1646 = vrsqrt.pop %v1644
  %v1647 = vrsqrt.pop %v1645
  %v1648 = vmul.f32 %v1632, %v1646
  %v1649 = vmul.f32 %v1633, %v1647
  %v1650 = vld [vmem:[%s19] sm:$0x1]
  %v1652 = vlaneseq
  %v1653 = vshrl.u32 %v1652, 7
  %v1654 = vsub.s32 0, %v1653
  %v1655 = vrot.slane %v1650, %v1654
  %v1657 = vmul.f32 %v1648, %v1655
  %v1658 = vmul.f32 %v1649, %v1655
  %v1659 = vld [vmem:[%s20] sm:$0x1]
  %v1661 = vlaneseq
  %v1662 = vshrl.u32 %v1661, 7
  %v1663 = vsub.s32 0, %v1662
  %v1664 = vrot.slane %v1659, %v1663
  %v1666 = vadd.f32 %v1657, %v1664
  %v1667 = vadd.f32 %v1658, %v1664
  %v1668 = vpack.c.bf16 %v1667, %v1666
  %v1669 = vld [vmem:[%s21] sm:$0xf]
  %v1670 = vld [vmem:[%s21 + $0x4] sm:$0xf]
  %v1671 = vld [vmem:[%s21 + $0x8] sm:$0xf]
  %v1672 = vld [vmem:[%s21 + $0xc] sm:$0xf]
  %v1673 = vld [vmem:[%s22] sm:$0x1]
  %v1675 = vlaneseq
  %v1676 = vshrl.u32 %v1675, 7
  %v1677 = vsub.s32 0, %v1676
  %v1678 = vrot.slane %v1673, %v1677
  %v1684 = vunpack.c.l.b16 %v1669
  %v1685 = vunpack.c.l.b16 %v1670
  %v1686 = vunpack.c.l.b16 %v1671
  %v1687 = vunpack.c.l.b16 %v1672
  %v1688 = vpack.c.b16 %v1685, %v1684
  %v1689 = vpack.c.b16 %v1687, %v1686
  %v1693 = vsel %vm94, %v1668, 0
  %1695 = vmatprep.subr.bf16.mxu0 0
  %1696 = vmatpush1.bf16.msra.mxu0 %v1688
  %1697 = vmatprep.subr.bf16.mxu0 0
  %1698 = vmatpush1.bf16.msra.mxu0 %v1689
  %1699 = vmatprep.subr.bf16.mxu0 0
  %1700 = vmatpush1.bf16.msra.mxu0 0
  %1701 = vmatprep.subr.bf16.mxu0 0
  %1702 = vmatpush1.bf16.msra.mxu0 0
  %1703 = vmatprep.subr.bf16.mxu0 0
  %1704 = vmatpush1.bf16.msra.mxu0 0
  %1705 = vmatprep.subr.bf16.mxu0 0
  %1706 = vmatpush1.bf16.msra.mxu0 0
  %1707 = vmatprep.subr.bf16.mxu0 0
  %1708 = vmatpush1.bf16.msra.mxu0 0
  %1709 = vmatprep.subr.bf16.mxu0 0
  %1710 = vmatpush1.bf16.msra.mxu0 0
  %1711 = vmatprep.subr.bf16.mxu0 0
  %1712 = vmatpush1.bf16.msra.mxu0 0
  %1713 = vmatprep.subr.bf16.mxu0 0
  %1714 = vmatpush1.bf16.msra.mxu0 0
  %1715 = vmatprep.subr.bf16.mxu0 0
  %1716 = vmatpush1.bf16.msra.mxu0 0
  %1717 = vmatprep.subr.bf16.mxu0 0
  %1718 = vmatpush1.bf16.msra.mxu0 0
  %1719 = vmatprep.subr.bf16.mxu0 0
  %1720 = vmatpush1.bf16.msra.mxu0 0
  %1721 = vmatprep.subr.bf16.mxu0 0
  %1722 = vmatpush1.bf16.msra.mxu0 0
  %1723 = vmatprep.subr.bf16.mxu0 0
  %1724 = vmatpush1.bf16.msra.mxu0 0
  %1725 = vmatprep.subr.bf16.mxu0 0
  %1726 = vmatpush1.bf16.msra.mxu0 0
  %1727 = vmatprep.mubr.bf16.mxu0 0
  %1728 = vmatmul.mubr.bf16.gmra.mrb[0].mxu0 %v1693
  %v1729 = vpop.f32.mrb[0].mxu0
  %v1730 = vadd.f32 %v1678, %v1729
  %v1731 = vpop.f32.mrb[0].mxu0
  %v1732 = vpop.f32.mrb[0].mxu0
  %v1733 = vadd.f32 %v1678, %v1732
  %v1734 = vpop.f32.mrb[0].mxu0
  %1735 = vdwg.mxu0
  %v1736 = vmul.f32 %v1730, %v1730
  %v1737 = vmul.f32 %v1733, %v1733
  %v1738 = vmul.f32 %v1730, %v1736
  %v1739 = vmul.f32 %v1733, %v1737
  %v1740 = vmul.f32 %v1738, 0.044715
  %v1741 = vmul.f32 %v1739, 0.044715
  %v1742 = vadd.f32 %v1730, %v1740
  %v1743 = vadd.f32 %v1733, %v1741
  %v1744 = vmul.f32 %v1742, 0.7978846
  %v1745 = vmul.f32 %v1743, 0.7978846
  %v1746 = vtanh.pop %v1744
  %v1747 = vtanh.pop %v1745
  %v1748 = vadd.f32 %v1746, 1.0
  %v1749 = vadd.f32 %v1747, 1.0
  %v1750 = vmul.f32 %v1748, 0.5
  %v1751 = vmul.f32 %v1749, 0.5
  %v1752 = vmul.f32 %v1730, %v1750
  %v1753 = vmul.f32 %v1733, %v1751
  %v1754 = vpack.c.bf16 %v1753, %v1752
  %v1755 = vld [vmem:[%s23] sm:$0xf]
  %v1756 = vld [vmem:[%s23 + $0x4] sm:$0xf]
  %v1757 = vld [vmem:[%s23 + $0x8] sm:$0xf]
  %v1758 = vld [vmem:[%s23 + $0xc] sm:$0xf]
  %v1759 = vld [vmem:[%s23 + $0x10] sm:$0xf]
  %v1760 = vld [vmem:[%s23 + $0x14] sm:$0xf]
  %v1761 = vld [vmem:[%s23 + $0x18] sm:$0xf]
  %v1762 = vld [vmem:[%s23 + $0x1c] sm:$0xf]
  %v1763 = vld [vmem:[%s23 + $0x20] sm:$0xf]
  %v1764 = vld [vmem:[%s23 + $0x24] sm:$0xf]
  %v1765 = vld [vmem:[%s23 + $0x28] sm:$0xf]
  %v1766 = vld [vmem:[%s23 + $0x2c] sm:$0xf]
  %v1767 = vld [vmem:[%s23 + $0x30] sm:$0xf]
  %v1768 = vld [vmem:[%s23 + $0x34] sm:$0xf]
  %v1769 = vld [vmem:[%s23 + $0x38] sm:$0xf]
  %v1770 = vld [vmem:[%s23 + $0x3c] sm:$0xf]
  %v1771 = vld [vmem:[%s24] sm:$0x1]
  %v1773 = vlaneseq
  %v1774 = vshrl.u32 %v1773, 7
  %v1775 = vsub.s32 0, %v1774
  %v1776 = vrot.slane %v1771, %v1775
  %v1794 = vunpack.c.l.b16 %v1755
  %v1795 = vunpack.c.l.b16 %v1756
  %v1796 = vunpack.c.l.b16 %v1757
  %v1797 = vunpack.c.l.b16 %v1758
  %v1798 = vunpack.c.l.b16 %v1759
  %v1799 = vunpack.c.l.b16 %v1760
  %v1800 = vunpack.c.l.b16 %v1761
  %v1801 = vunpack.c.l.b16 %v1762
  %v1802 = vunpack.c.l.b16 %v1763
  %v1803 = vunpack.c.l.b16 %v1764
  %v1804 = vunpack.c.l.b16 %v1765
  %v1805 = vunpack.c.l.b16 %v1766
  %v1806 = vunpack.c.l.b16 %v1767
  %v1807 = vunpack.c.l.b16 %v1768
  %v1808 = vunpack.c.l.b16 %v1769
  %v1809 = vunpack.c.l.b16 %v1770
  %v1810 = vpack.c.b16 %v1795, %v1794
  %v1811 = vpack.c.b16 %v1797, %v1796
  %v1812 = vpack.c.b16 %v1799, %v1798
  %v1813 = vpack.c.b16 %v1801, %v1800
  %v1814 = vpack.c.b16 %v1803, %v1802
  %v1815 = vpack.c.b16 %v1805, %v1804
  %v1816 = vpack.c.b16 %v1807, %v1806
  %v1817 = vpack.c.b16 %v1809, %v1808
  %1826 = vmatprep.subr.bf16.mxu0 0
  %1827 = vmatpush1.bf16.msra.mxu0 %v1810
  %1828 = vmatprep.subr.bf16.mxu0 0
  %1829 = vmatpush1.bf16.msra.mxu0 %v1811
  %1830 = vmatprep.subr.bf16.mxu0 0
  %1831 = vmatpush1.bf16.msra.mxu0 %v1812
  %1832 = vmatprep.subr.bf16.mxu0 0
  %1833 = vmatpush1.bf16.msra.mxu0 %v1813
  %1834 = vmatprep.subr.bf16.mxu0 0
  %1835 = vmatpush1.bf16.msra.mxu0 %v1814
  %1836 = vmatprep.subr.bf16.mxu0 0
  %1837 = vmatpush1.bf16.msra.mxu0 %v1815
  %1838 = vmatprep.subr.bf16.mxu0 0
  %1839 = vmatpush1.bf16.msra.mxu0 %v1816
  %1840 = vmatprep.subr.bf16.mxu0 0
  %1841 = vmatpush1.bf16.msra.mxu0 %v1817
  %1842 = vmatprep.subr.bf16.mxu0 0
  %1843 = vmatpush1.bf16.msra.mxu0 0
  %1844 = vmatprep.subr.bf16.mxu0 0
  %1845 = vmatpush1.bf16.msra.mxu0 0
  %1846 = vmatprep.subr.bf16.mxu0 0
  %1847 = vmatpush1.bf16.msra.mxu0 0
  %1848 = vmatprep.subr.bf16.mxu0 0
  %1849 = vmatpush1.bf16.msra.mxu0 0
  %1850 = vmatprep.subr.bf16.mxu0 0
  %1851 = vmatpush1.bf16.msra.mxu0 0
  %1852 = vmatprep.subr.bf16.mxu0 0
  %1853 = vmatpush1.bf16.msra.mxu0 0
  %1854 = vmatprep.subr.bf16.mxu0 0
  %1855 = vmatpush1.bf16.msra.mxu0 0
  %1856 = vmatprep.subr.bf16.mxu0 0
  %1857 = vmatpush1.bf16.msra.mxu0 0
  %1858 = vmatprep.mubr.bf16.mxu0 0
  %1859 = vmatmul.mubr.bf16.gmra.mrb[0].mxu0 %v1754
  %v1860 = vpop.f32.mrb[0].mxu0
  %v1861 = vadd.f32 %v1776, %v1860
  %v1862 = vpop.f32.mrb[0].mxu0
  %v1863 = vpop.f32.mrb[0].mxu0
  %v1864 = vadd.f32 %v1776, %v1863
  %v1865 = vpop.f32.mrb[0].mxu0
  %1866 = vdwg.mxu0
  %v1867 = vadd.f32 %v1622, %v1861
  %v1868 = vadd.f32 %v1623, %v1864
  %v1869 = vsel %vm94, %v1867, 0.0
  %1870 = vadd.xlane.f32.xlu0 %v1869
  %v1871 = vpop.xlane.xlu0 %1870
  %v1872 = vsel %vm94, %v1868, 0.0
  %1873 = vadd.xlane.f32.xlu0 %v1872
  %v1874 = vpop.xlane.xlu0 %1873
  %v1875 = vmul.f32 %v1871, %v101
  %v1876 = vmul.f32 %v1874, %v101
  %v1877 = vsub.f32 %v1867, %v1875
  %v1878 = vsub.f32 %v1868, %v1876
  %v1879 = vmul.f32 %v1877, %v1877
  %v1880 = vmul.f32 %v1878, %v1878
  %v1881 = vsel %vm94, %v1879, 0.0
  %1882 = vadd.xlane.f32.xlu0 %v1881
  %v1883 = vpop.xlane.xlu0 %1882
  %v1884 = vsel %vm94, %v1880, 0.0
  %1885 = vadd.xlane.f32.xlu0 %v1884
  %v1886 = vpop.xlane.xlu0 %1885
  %v1887 = vmul.f32 %v1883, %v101
  %v1888 = vmul.f32 %v1886, %v101
  %v1889 = vadd.f32 %v1887, 1e-05
  %v1890 = vadd.f32 %v1888, 1e-05
  %v1891 = vrsqrt.pop %v1889
  %v1892 = vrsqrt.pop %v1890
  %v1893 = vmul.f32 %v1877, %v1891
  %v1894 = vmul.f32 %v1878, %v1892
  %v1895 = vld [vmem:[%s25] sm:$0x1]
  %v1897 = vlaneseq
  %v1898 = vshrl.u32 %v1897, 7
  %v1899 = vsub.s32 0, %v1898
  %v1900 = vrot.slane %v1895, %v1899
  %v1902 = vmul.f32 %v1893, %v1900
  %v1903 = vmul.f32 %v1894, %v1900
  %v1904 = vld [vmem:[%s26] sm:$0x1]
  %v1906 = vlaneseq
  %v1907 = vshrl.u32 %v1906, 7
  %v1908 = vsub.s32 0, %v1907
  %v1909 = vrot.slane %v1904, %v1908
  %v1911 = vadd.f32 %v1902, %v1909
  %v1912 = vadd.f32 %v1903, %v1909
  %1913 = vst.msk [vmem:[%s27] sm:$0xff] %vm94, %v1911
  %1914 = vst.msk [vmem:[%s27 + $0x8] sm:$0xff] %vm94, %v1912
  // Predicated region
  $region110: #{movielens_forward.3} parent=0 // pred_check
    _
  $region111: #{movielens_forward.3} parent=0 // pred_check_branch
    %1916 = sbr.rel (0) target = $region113
  $region112: #{movielens_forward.3} parent=0 // pred_region
    _
  $region113: #{movielens_forward.3} parent=0 // pred_fallthru
    _
  // Predicated region
  $region114: #{movielens_forward.3} parent=0 // pred_check
    _
  $region115: #{movielens_forward.3} parent=0 // pred_check_branch
    %1918 = sbr.rel (0) target = $region117
  $region116: #{movielens_forward.3} parent=0 // pred_region
    _
  $region117: #{movielens_forward.3} parent=0 // pred_fallthru
    _

</llo_original>
